<compile_context>
chip_gen: v5e
topology: v5e:2x2
jax: 0.10.0
libtpu: 0.0.40
codegen_flags: <defaults>
</compile_context>

<pallas_src>
import functools

import numpy as np

import jax
import jax.numpy as jnp
from jax.experimental import pallas as pl
from jax.experimental.pallas import tpu as pltpu

MEM_DIM = 32
FEA_DIM = 16
SHRINK_THRES = 0.0025
USE_COSINE = False
BT_MAX = 8  # batch-tile cap (selection matrices scale with Bt^2; 8 => <1 MiB)


# ---------------------------------------------------------------------------
# Trace-time (numpy) construction of the conv selection / tap matrices.
#
# A 3x3 pad-1 conv (stride s in {1,2}) applied to a (optionally 2x nearest
# upsampled, u in {1,2}) input A[b, r, c, ci] stored row-major as
#   X[b*Hin + r, c*Cin + ci]
# is exactly
#   out[(b,i), (j,co)] = sum_di  (T_di @ X @ S_di)[(b,i), (j,co)]
# with
#   T_di[(b,i),(b,rho)] = [0 <= s*i+di-1 < u*Hin] * [rho == (s*i+di-1)//u]
#   S_di[(g,ci),(j,co)] = sum_dj [0 <= s*j+dj-1 < u*Win] * [g == (s*j+dj-1)//u]
#                               * w[di,dj,ci,co]
# i.e. zero-padding, stride and nearest-upsampling are all folded into the
# constant matrices, and the output layout directly matches the next layer's
# expected input layout (no repacking between layers).
# ---------------------------------------------------------------------------
def _conv_ts(w, b, hin, win, stride, up, bt):
    w = np.asarray(w, np.float32)   # (3, 3, Cin, Cout)
    b = np.asarray(b, np.float32)   # (Cout,)
    cin, cout = w.shape[2], w.shape[3]
    oh = (up * hin - 1) // stride + 1
    ow = (up * win - 1) // stride + 1

    t_stack = np.zeros((3, bt * oh, bt * hin), np.float32)
    s_stack = np.zeros((3, win * cin, ow * cout), np.float32)
    for di in range(3):
        t = np.zeros((oh, hin), np.float32)
        for i in range(oh):
            p = stride * i + di - 1
            if 0 <= p < up * hin:
                t[i, p // up] = 1.0
        t_stack[di] = np.kron(np.eye(bt, dtype=np.float32), t)
        for j in range(ow):
            for dj in range(3):
                q = stride * j + dj - 1
                if 0 <= q < up * win:
                    g = q // up
                    s_stack[di, g * cin:(g + 1) * cin,
                            j * cout:(j + 1) * cout] += w[di, dj]
    bias = np.tile(b, ow)[None, :]   # (1, ow*Cout), column index = j*Cout + co
    return t_stack, s_stack, bias


# ---------------------------------------------------------------------------
# Parameters (deterministic synthetic init) + one-time preparation
# ---------------------------------------------------------------------------
def init_params(key):
    ks = jax.random.split(key, 8)

    def wn(k, shape, scale):
        return jax.random.normal(k, shape, jnp.float32) * scale

    return {
        "enc_conv1_w": wn(ks[0], (3, 3, 1, 16), 0.20),
        "enc_conv1_b": jnp.zeros((16,), jnp.float32),
        "enc_conv2_w": wn(ks[1], (3, 3, 16, 32), 0.08),
        "enc_conv2_b": jnp.zeros((32,), jnp.float32),
        # fc weights defined directly in the kernel's (row i, col j*32+ci) layout
        "enc_fc_w": wn(ks[2], (7, 7 * 32, FEA_DIM), 0.02),
        "enc_fc_b": jnp.zeros((FEA_DIM,), jnp.float32),
        "mem": wn(ks[3], (MEM_DIM, FEA_DIM), 0.25),
        "dec_fc_w": wn(ks[4], (FEA_DIM, 7, 7 * 32), 0.25),
        "dec_fc_b": jnp.zeros((7, 7 * 32), jnp.float32),
        "dec_conv1_w": wn(ks[5], (3, 3, 32, 16), 0.06),
        "dec_conv1_b": jnp.zeros((16,), jnp.float32),
        "dec_conv2_w": wn(ks[6], (3, 3, 16, 1), 0.08),
        "dec_conv2_b": jnp.zeros((1,), jnp.float32),
    }


def prepare_params(params, bt):
    """Eager, one-time weight preprocessing (numpy) for a given batch tile."""
    p = {k: np.asarray(v) for k, v in params.items()}

    t1, s1, b1 = _conv_ts(p["enc_conv1_w"], p["enc_conv1_b"], 28, 28, 2, 1, bt)
    t2, s2, b2 = _conv_ts(p["enc_conv2_w"], p["enc_conv2_b"], 14, 14, 2, 1, bt)
    # decoder convs: 2x nearest upsample folded in (up=2, stride=1)
    t3, s3, b3 = _conv_ts(p["dec_conv1_w"], p["dec_conv1_b"], 7, 7, 1, 2, bt)
    t4, s4, b4 = _conv_ts(p["dec_conv2_w"], p["dec_conv2_b"], 14, 14, 1, 2, bt)

    # flatten / unflatten selection matrices around the fc stage
    eye = np.eye(bt, dtype=np.float32)
    sel = np.zeros((7, bt, bt * 7), np.float32)
    for i in range(7):
        onehot = np.zeros((1, 7), np.float32)
        onehot[0, i] = 1.0
        sel[i] = np.kron(eye, onehot)
    expd = np.transpose(sel, (0, 2, 1)).copy()          # (7, bt*7, bt)

    mem = p["mem"].astype(np.float32)                    # (32, 16)
    memt = np.ascontiguousarray(mem.T)                   # (16, 32)
    if USE_COSINE:
        memt = memt / np.maximum(
            np.linalg.norm(memt, axis=0, keepdims=True), 1e-12)

    # algebraic fusion of the memory read-out with dec_fc:
    #   relu((att @ mem) @ Wd + bd) == relu(att @ (mem @ Wd) + bd)
    wdec_eff = np.einsum("mf,fic->imc", mem,
                         p["dec_fc_w"].astype(np.float32))   # (7, 32, 224)
    bdec = p["dec_fc_b"].astype(np.float32)[:, None, :]      # (7, 1, 224)

    out = dict(
        t1=t1, s1=s1, b1=b1,
        t2=t2, s2=s2, b2=b2,
        sel=sel, wenc=p["enc_fc_w"].astype(np.float32),
        benc=p["enc_fc_b"].astype(np.float32)[None, :],
        memt=memt, wdec=wdec_eff, bdec=bdec, expd=expd,
        t3=t3, s3=s3, b3=b3,
        t4=t4, s4=s4, b4=b4,
    )
    return {k: jnp.asarray(v) for k, v in out.items()}


# ---------------------------------------------------------------------------
# The fused forward kernel (one grid step = one batch tile of Bt images)
# ---------------------------------------------------------------------------
def _fused_kernel(x_ref,
                  t1_ref, s1_ref, b1_ref,
                  t2_ref, s2_ref, b2_ref,
                  sel_ref, wenc_ref, benc_ref,
                  memt_ref, wdec_ref, bdec_ref, expd_ref,
                  t3_ref, s3_ref, b3_ref,
                  t4_ref, s4_ref, b4_ref,
                  recon_ref, att_ref, pre_ref,
                  x_stage,
                  *, bt, use_cosine, shrink_thres):
    f32 = jnp.float32

    # stage the input tile as (Bt*28, 28): rows = (image, row), cols = width
    for b in range(bt):
        x_stage[pl.ds(b * 28, 28), :] = x_ref[b]
    x1 = x_stage[...]

    def conv(x, t_ref, s_ref, bias_ref, act):
        acc = jnp.zeros((t_ref.shape[1], s_ref.shape[2]), f32)
        for di in range(3):
            z = jnp.dot(t_ref[di], x, preferred_element_type=f32)
            acc = acc + jnp.dot(z, s_ref[di], preferred_element_type=f32)
        acc = acc + bias_ref[...]
        if act == "relu":
            return jnp.maximum(acc, 0.0)
        return jax.nn.sigmoid(acc)

    # ---- encoder convs: 3x3 s2 p1, 1->16 and 16->32, ReLU
    h1 = conv(x1, t1_ref, s1_ref, b1_ref, "relu")        # (Bt*14, 14*16)
    h2 = conv(h1, t2_ref, s2_ref, b2_ref, "relu")        # (Bt*7,  7*32)

    # ---- enc_fc (flatten done via selection matmuls, no reshape/transpose)
    f = jnp.zeros((bt, FEA_DIM), f32) + benc_ref[...]
    for i in range(7):
        zi = jnp.dot(sel_ref[i], h2, preferred_element_type=f32)      # (Bt, 224)
        f = f + jnp.dot(zi, wenc_ref[i], preferred_element_type=f32)  # (Bt, 16)

    # ---- latent-space memory module
    if use_cosine:
        f_q = f * jax.lax.rsqrt(
            jnp.maximum(jnp.sum(f * f, axis=1, keepdims=True), 1e-24))
    else:
        f_q = f
    sim = jnp.dot(f_q, memt_ref[...], preferred_element_type=f32)     # (Bt, 32)

    s = sim - jnp.max(sim, axis=1, keepdims=True)
    e = jnp.exp(s)
    att = e / jnp.sum(e, axis=1, keepdims=True)          # exact divide
    if shrink_thres > 0:
        # hard_shrink_relu(x, l) = relu(x - l) * x / (|x - l| + eps), then L1 renorm
        shifted = att - shrink_thres
        att = jnp.maximum(shifted, 0.0) * att / (jnp.abs(shifted) + 1e-12)
        att = att / jnp.maximum(jnp.sum(att, axis=1, keepdims=True), 1e-12)

    # ---- memory read-out fused with dec_fc (ReLU), unflattened via selection
    d_sp = jnp.zeros((bt * 7, 7 * 32), f32)
    for i in range(7):
        dblk = jnp.dot(att, wdec_ref[i], preferred_element_type=f32) + bdec_ref[i]
        dblk = jnp.maximum(dblk, 0.0)                                   # (Bt, 224)
        d_sp = d_sp + jnp.dot(expd_ref[i], dblk, preferred_element_type=f32)

    # ---- decoder convs (2x nearest upsample folded into T/S): 32->16 ReLU, 16->1 sigmoid
    g1 = conv(d_sp, t3_ref, s3_ref, b3_ref, "relu")      # (Bt*14, 14*16)
    y = conv(g1, t4_ref, s4_ref, b4_ref, "sigmoid")      # (Bt*28, 28)

    for b in range(bt):
        recon_ref[b] = y[b * 28:(b + 1) * 28, :]
        att_ref[b] = att[b:b + 1, :]
        pre_ref[b] = sim[b:b + 1, :]


def _full_spec(arr):
    nd = arr.ndim
    return pl.BlockSpec(arr.shape, lambda i, _nd=nd: (0,) * _nd)


_WEIGHT_ORDER = ("t1", "s1", "b1", "t2", "s2", "b2",
                 "sel", "wenc", "benc",
                 "memt", "wdec", "bdec", "expd",
                 "t3", "s3", "b3", "t4", "s4", "b4")


def _forward_padded(prepped, x3, bt):
    # x3: (Bp, 28, 28), Bp % bt == 0
    bp = x3.shape[0]
    grid = (bp // bt,)
    weights = [prepped[k] for k in _WEIGHT_ORDER]

    in_specs = [pl.BlockSpec((bt, 28, 28), lambda i: (i, 0, 0))]
    in_specs += [_full_spec(w) for w in weights]
    out_specs = (
        pl.BlockSpec((bt, 28, 28), lambda i: (i, 0, 0)),
        pl.BlockSpec((bt, 1, MEM_DIM), lambda i: (i, 0, 0)),
        pl.BlockSpec((bt, 1, MEM_DIM), lambda i: (i, 0, 0)),
    )
    out_shape = (
        jax.ShapeDtypeStruct((bp, 28, 28), jnp.float32),
        jax.ShapeDtypeStruct((bp, 1, MEM_DIM), jnp.float32),
        jax.ShapeDtypeStruct((bp, 1, MEM_DIM), jnp.float32),
    )
    weight_bytes = int(sum(int(w.size) for w in weights)) * 4
    cost = pl.CostEstimate(
        flops=int(bp) * 10_000_000,
        transcendentals=int(bp) * 1024,
        bytes_accessed=weight_bytes + int(bp) * 28 * 28 * 4 * 2,
    )
    kernel = functools.partial(_fused_kernel, bt=bt, use_cosine=USE_COSINE,
                               shrink_thres=SHRINK_THRES)
    return pl.pallas_call(
        kernel,
        out_shape=out_shape,
        grid=grid,
        in_specs=in_specs,
        out_specs=out_specs,
        scratch_shapes=[pltpu.VMEM((bt * 28, 28), jnp.float32)],
        compiler_params=pltpu.CompilerParams(dimension_semantics=("parallel",)),
        cost_estimate=cost,
    )(x3, *weights)


def latent_space_memae_forward(prepped, x_nchw, bt):
    # x_nchw: (B, 1, 28, 28) float32, PyTorch layout
    b = x_nchw.shape[0]
    x = x_nchw.astype(jnp.float32).reshape(b, 28, 28)
    bp = ((b + bt - 1) // bt) * bt
    if bp != b:
        x = jnp.pad(x, ((0, bp - b), (0, 0), (0, 0)))
    recon, att, pre = _forward_padded(prepped, x, bt)
    recon = recon[:b].reshape(b, 1, 28, 28)
    att = att[:b, 0, :]
    pre = pre[:b, 0, :]
    return recon, att, pre


if __name__ == "__main__":
    key = jax.random.PRNGKey(0)
    pkey, xkey = jax.random.split(key)
    params = init_params(pkey)

    # MNIST-like input, small batch (PyTorch NCHW)
    x = jax.random.uniform(xkey, (2, 1, 28, 28), jnp.float32)
    B = x.shape[0]

    # batch tile: keep >= 2 grid steps whenever B >= 2 (both v7x TensorCores)
    bt = max(1, min(BT_MAX, B // 2))
    prepped = prepare_params(params, bt)

    fwd = jax.jit(functools.partial(latent_space_memae_forward, prepped, bt=bt))
    recon, att, pre_softmax_att = fwd(x)
    jax.block_until_ready((recon, att, pre_softmax_att))

    assert recon.shape == (2, 1, 28, 28), recon.shape
    assert att.shape == (2, MEM_DIM), att.shape
    assert pre_softmax_att.shape == (2, MEM_DIM), pre_softmax_att.shape
    assert bool(jnp.all(jnp.isfinite(recon)))
    assert bool(jnp.all(att >= 0.0))

    print("KERNEL_OK")
</pallas_src>

<mosaic_0001>
module attributes {stable_mosaic.version = 11 : i64} {
  func.func @_fused_kernel(%arg0: i32, %arg1: memref<1x28x28xf32, #tpu.memory_space<vmem>>, %arg2: memref<3x14x28xf32, #tpu.memory_space<vmem>>, %arg3: memref<3x28x224xf32, #tpu.memory_space<vmem>>, %arg4: memref<1x224xf32, #tpu.memory_space<vmem>>, %arg5: memref<3x7x14xf32, #tpu.memory_space<vmem>>, %arg6: memref<3x224x224xf32, #tpu.memory_space<vmem>>, %arg7: memref<1x224xf32, #tpu.memory_space<vmem>>, %arg8: memref<7x1x7xf32, #tpu.memory_space<vmem>>, %arg9: memref<7x224x16xf32, #tpu.memory_space<vmem>>, %arg10: memref<1x16xf32, #tpu.memory_space<vmem>>, %arg11: memref<16x32xf32, #tpu.memory_space<vmem>>, %arg12: memref<7x32x224xf32, #tpu.memory_space<vmem>>, %arg13: memref<7x1x224xf32, #tpu.memory_space<vmem>>, %arg14: memref<7x7x1xf32, #tpu.memory_space<vmem>>, %arg15: memref<3x14x7xf32, #tpu.memory_space<vmem>>, %arg16: memref<3x224x224xf32, #tpu.memory_space<vmem>>, %arg17: memref<1x224xf32, #tpu.memory_space<vmem>>, %arg18: memref<3x28x14xf32, #tpu.memory_space<vmem>>, %arg19: memref<3x224x28xf32, #tpu.memory_space<vmem>>, %arg20: memref<1x28xf32, #tpu.memory_space<vmem>>, %arg21: memref<1x28x28xf32, #tpu.memory_space<vmem>>, %arg22: memref<1x1x32xf32, #tpu.memory_space<vmem>>, %arg23: memref<1x1x32xf32, #tpu.memory_space<vmem>>, %arg24: memref<28x28xf32, #tpu.memory_space<vmem>>) attributes {dimension_semantics = [#tpu.dimension_semantics<parallel>], iteration_bounds = array<i64: 2>, scalar_prefetch = 0 : i64, scratch_operands = 1 : i64, tpu.core_type = #tpu.core_type<tc>, window_params = [{transform_indices = @transform_0, window_bounds = array<i64: 1, 28, 28>}, {pipeline_mode = #tpu.pipeline_mode<synchronous>, transform_indices = @transform_1, window_bounds = array<i64: 3, 14, 28>}, {pipeline_mode = #tpu.pipeline_mode<synchronous>, transform_indices = @transform_2, window_bounds = array<i64: 3, 28, 224>}, {pipeline_mode = #tpu.pipeline_mode<synchronous>, transform_indices = @transform_3, window_bounds = array<i64: 1, 224>}, {pipeline_mode = #tpu.pipeline_mode<synchronous>, transform_indices = @transform_4, window_bounds = array<i64: 3, 7, 14>}, {pipeline_mode = #tpu.pipeline_mode<synchronous>, transform_indices = @transform_5, window_bounds = array<i64: 3, 224, 224>}, {pipeline_mode = #tpu.pipeline_mode<synchronous>, transform_indices = @transform_6, window_bounds = array<i64: 1, 224>}, {pipeline_mode = #tpu.pipeline_mode<synchronous>, transform_indices = @transform_7, window_bounds = array<i64: 7, 1, 7>}, {pipeline_mode = #tpu.pipeline_mode<synchronous>, transform_indices = @transform_8, window_bounds = array<i64: 7, 224, 16>}, {pipeline_mode = #tpu.pipeline_mode<synchronous>, transform_indices = @transform_9, window_bounds = array<i64: 1, 16>}, {pipeline_mode = #tpu.pipeline_mode<synchronous>, transform_indices = @transform_10, window_bounds = array<i64: 16, 32>}, {pipeline_mode = #tpu.pipeline_mode<synchronous>, transform_indices = @transform_11, window_bounds = array<i64: 7, 32, 224>}, {pipeline_mode = #tpu.pipeline_mode<synchronous>, transform_indices = @transform_12, window_bounds = array<i64: 7, 1, 224>}, {pipeline_mode = #tpu.pipeline_mode<synchronous>, transform_indices = @transform_13, window_bounds = array<i64: 7, 7, 1>}, {pipeline_mode = #tpu.pipeline_mode<synchronous>, transform_indices = @transform_14, window_bounds = array<i64: 3, 14, 7>}, {pipeline_mode = #tpu.pipeline_mode<synchronous>, transform_indices = @transform_15, window_bounds = array<i64: 3, 224, 224>}, {pipeline_mode = #tpu.pipeline_mode<synchronous>, transform_indices = @transform_16, window_bounds = array<i64: 1, 224>}, {pipeline_mode = #tpu.pipeline_mode<synchronous>, transform_indices = @transform_17, window_bounds = array<i64: 3, 28, 14>}, {pipeline_mode = #tpu.pipeline_mode<synchronous>, transform_indices = @transform_18, window_bounds = array<i64: 3, 224, 28>}, {pipeline_mode = #tpu.pipeline_mode<synchronous>, transform_indices = @transform_19, window_bounds = array<i64: 1, 28>}, {transform_indices = @transform_20, window_bounds = array<i64: 1, 28, 28>}, {transform_indices = @transform_21, window_bounds = array<i64: 1, 1, 32>}, {transform_indices = @transform_22, window_bounds = array<i64: 1, 1, 32>}]} {
    %c0 = arith.constant 0 : index
    %c0_0 = arith.constant 0 : index
    %c0_1 = arith.constant 0 : index
    %0 = vector.load %arg1[%c0, %c0_0, %c0_1] : memref<1x28x28xf32, #tpu.memory_space<vmem>>, vector<1x28x28xf32>
    %1 = vector.shape_cast %0 : vector<1x28x28xf32> to vector<28x28xf32>
    %c0_2 = arith.constant 0 : index
    %c0_3 = arith.constant 0 : index
    %2 = vector.load %arg24[%c0_2, %c0_3] : memref<28x28xf32, #tpu.memory_space<vmem>>, vector<28x28xf32>
    tpu.vector_store %arg24[%c0_2, %c0_3], %1 {strides = array<i32>} : memref<28x28xf32, #tpu.memory_space<vmem>>, vector<28x28xf32>,
    %c0_4 = arith.constant 0 : index
    %c0_5 = arith.constant 0 : index
    %3 = vector.load %arg24[%c0_4, %c0_5] : memref<28x28xf32, #tpu.memory_space<vmem>>, vector<28x28xf32>
    %cst = arith.constant 0.000000e+00 : f32
    %4 = vector.broadcast %cst : f32 to vector<14x224xf32>
    %c0_6 = arith.constant 0 : index
    %c0_7 = arith.constant 0 : index
    %c0_8 = arith.constant 0 : index
    %5 = vector.load %arg2[%c0_6, %c0_7, %c0_8] : memref<3x14x28xf32, #tpu.memory_space<vmem>>, vector<1x14x28xf32>
    %6 = vector.shape_cast %5 : vector<1x14x28xf32> to vector<14x28xf32>
    %cst_9 = arith.constant dense<0.000000e+00> : vector<14x28xf32>
    %7 = tpu.matmul %6, %3, %cst_9 {dimension_numbers = #tpu.dot_dimension_numbers<[1], [0], [0], [1], [0, 0, 1, 1], [], []>} : vector<14x28xf32>, vector<28x28xf32>, vector<14x28xf32> -> vector<14x28xf32>
    %c0_10 = arith.constant 0 : index
    %c0_11 = arith.constant 0 : index
    %c0_12 = arith.constant 0 : index
    %8 = vector.load %arg3[%c0_10, %c0_11, %c0_12] : memref<3x28x224xf32, #tpu.memory_space<vmem>>, vector<1x28x224xf32>
    %9 = vector.shape_cast %8 : vector<1x28x224xf32> to vector<28x224xf32>
    %cst_13 = arith.constant dense<0.000000e+00> : vector<14x224xf32>
    %10 = tpu.matmul %7, %9, %cst_13 {dimension_numbers = #tpu.dot_dimension_numbers<[1], [0], [0], [1], [0, 0, 1, 1], [], []>} : vector<14x28xf32>, vector<28x224xf32>, vector<14x224xf32> -> vector<14x224xf32>
    %11 = arith.addf %4, %10 : vector<14x224xf32>
    %c1 = arith.constant 1 : index
    %c0_14 = arith.constant 0 : index
    %c0_15 = arith.constant 0 : index
    %12 = vector.load %arg2[%c1, %c0_14, %c0_15] : memref<3x14x28xf32, #tpu.memory_space<vmem>>, vector<1x14x28xf32>
    %13 = vector.shape_cast %12 : vector<1x14x28xf32> to vector<14x28xf32>
    %cst_16 = arith.constant dense<0.000000e+00> : vector<14x28xf32>
    %14 = tpu.matmul %13, %3, %cst_16 {dimension_numbers = #tpu.dot_dimension_numbers<[1], [0], [0], [1], [0, 0, 1, 1], [], []>} : vector<14x28xf32>, vector<28x28xf32>, vector<14x28xf32> -> vector<14x28xf32>
    %c1_17 = arith.constant 1 : index
    %c0_18 = arith.constant 0 : index
    %c0_19 = arith.constant 0 : index
    %15 = vector.load %arg3[%c1_17, %c0_18, %c0_19] : memref<3x28x224xf32, #tpu.memory_space<vmem>>, vector<1x28x224xf32>
    %16 = vector.shape_cast %15 : vector<1x28x224xf32> to vector<28x224xf32>
    %cst_20 = arith.constant dense<0.000000e+00> : vector<14x224xf32>
    %17 = tpu.matmul %14, %16, %cst_20 {dimension_numbers = #tpu.dot_dimension_numbers<[1], [0], [0], [1], [0, 0, 1, 1], [], []>} : vector<14x28xf32>, vector<28x224xf32>, vector<14x224xf32> -> vector<14x224xf32>
    %18 = arith.addf %11, %17 : vector<14x224xf32>
    %c2 = arith.constant 2 : index
    %c0_21 = arith.constant 0 : index
    %c0_22 = arith.constant 0 : index
    %19 = vector.load %arg2[%c2, %c0_21, %c0_22] : memref<3x14x28xf32, #tpu.memory_space<vmem>>, vector<1x14x28xf32>
    %20 = vector.shape_cast %19 : vector<1x14x28xf32> to vector<14x28xf32>
    %cst_23 = arith.constant dense<0.000000e+00> : vector<14x28xf32>
    %21 = tpu.matmul %20, %3, %cst_23 {dimension_numbers = #tpu.dot_dimension_numbers<[1], [0], [0], [1], [0, 0, 1, 1], [], []>} : vector<14x28xf32>, vector<28x28xf32>, vector<14x28xf32> -> vector<14x28xf32>
    %c2_24 = arith.constant 2 : index
    %c0_25 = arith.constant 0 : index
    %c0_26 = arith.constant 0 : index
    %22 = vector.load %arg3[%c2_24, %c0_25, %c0_26] : memref<3x28x224xf32, #tpu.memory_space<vmem>>, vector<1x28x224xf32>
    %23 = vector.shape_cast %22 : vector<1x28x224xf32> to vector<28x224xf32>
    %cst_27 = arith.constant dense<0.000000e+00> : vector<14x224xf32>
    %24 = tpu.matmul %21, %23, %cst_27 {dimension_numbers = #tpu.dot_dimension_numbers<[1], [0], [0], [1], [0, 0, 1, 1], [], []>} : vector<14x28xf32>, vector<28x224xf32>, vector<14x224xf32> -> vector<14x224xf32>
    %25 = arith.addf %18, %24 : vector<14x224xf32>
    %c0_28 = arith.constant 0 : index
    %c0_29 = arith.constant 0 : index
    %26 = vector.load %arg4[%c0_28, %c0_29] : memref<1x224xf32, #tpu.memory_space<vmem>>, vector<1x224xf32>
    %27 = vector.broadcast %26 : vector<1x224xf32> to vector<14x224xf32>
    %28 = arith.addf %25, %27 : vector<14x224xf32>
    %cst_30 = arith.constant 0.000000e+00 : f32
    %29 = vector.broadcast %cst_30 : f32 to vector<14x224xf32>
    %30 = arith.maximumf %28, %29 : vector<14x224xf32>
    %cst_31 = arith.constant 0.000000e+00 : f32
    %31 = vector.broadcast %cst_31 : f32 to vector<7x224xf32>
    %c0_32 = arith.constant 0 : index
    %c0_33 = arith.constant 0 : index
    %c0_34 = arith.constant 0 : index
    %32 = vector.load %arg5[%c0_32, %c0_33, %c0_34] : memref<3x7x14xf32, #tpu.memory_space<vmem>>, vector<1x7x14xf32>
    %33 = vector.shape_cast %32 : vector<1x7x14xf32> to vector<7x14xf32>
    %cst_35 = arith.constant dense<0.000000e+00> : vector<7x224xf32>
    %34 = tpu.matmul %33, %30, %cst_35 {dimension_numbers = #tpu.dot_dimension_numbers<[1], [0], [0], [1], [0, 0, 1, 1], [], []>} : vector<7x14xf32>, vector<14x224xf32>, vector<7x224xf32> -> vector<7x224xf32>
    %c0_36 = arith.constant 0 : index
    %c0_37 = arith.constant 0 : index
    %c0_38 = arith.constant 0 : index
    %35 = vector.load %arg6[%c0_36, %c0_37, %c0_38] : memref<3x224x224xf32, #tpu.memory_space<vmem>>, vector<1x224x224xf32>
    %36 = vector.shape_cast %35 : vector<1x224x224xf32> to vector<224x224xf32>
    %cst_39 = arith.constant dense<0.000000e+00> : vector<7x224xf32>
    %37 = tpu.matmul %34, %36, %cst_39 {dimension_numbers = #tpu.dot_dimension_numbers<[1], [0], [0], [1], [0, 0, 1, 1], [], []>} : vector<7x224xf32>, vector<224x224xf32>, vector<7x224xf32> -> vector<7x224xf32>
    %38 = arith.addf %31, %37 : vector<7x224xf32>
    %c1_40 = arith.constant 1 : index
    %c0_41 = arith.constant 0 : index
    %c0_42 = arith.constant 0 : index
    %39 = vector.load %arg5[%c1_40, %c0_41, %c0_42] : memref<3x7x14xf32, #tpu.memory_space<vmem>>, vector<1x7x14xf32>
    %40 = vector.shape_cast %39 : vector<1x7x14xf32> to vector<7x14xf32>
    %cst_43 = arith.constant dense<0.000000e+00> : vector<7x224xf32>
    %41 = tpu.matmul %40, %30, %cst_43 {dimension_numbers = #tpu.dot_dimension_numbers<[1], [0], [0], [1], [0, 0, 1, 1], [], []>} : vector<7x14xf32>, vector<14x224xf32>, vector<7x224xf32> -> vector<7x224xf32>
    %c1_44 = arith.constant 1 : index
    %c0_45 = arith.constant 0 : index
    %c0_46 = arith.constant 0 : index
    %42 = vector.load %arg6[%c1_44, %c0_45, %c0_46] : memref<3x224x224xf32, #tpu.memory_space<vmem>>, vector<1x224x224xf32>
    %43 = vector.shape_cast %42 : vector<1x224x224xf32> to vector<224x224xf32>
    %cst_47 = arith.constant dense<0.000000e+00> : vector<7x224xf32>
    %44 = tpu.matmul %41, %43, %cst_47 {dimension_numbers = #tpu.dot_dimension_numbers<[1], [0], [0], [1], [0, 0, 1, 1], [], []>} : vector<7x224xf32>, vector<224x224xf32>, vector<7x224xf32> -> vector<7x224xf32>
    %45 = arith.addf %38, %44 : vector<7x224xf32>
    %c2_48 = arith.constant 2 : index
    %c0_49 = arith.constant 0 : index
    %c0_50 = arith.constant 0 : index
    %46 = vector.load %arg5[%c2_48, %c0_49, %c0_50] : memref<3x7x14xf32, #tpu.memory_space<vmem>>, vector<1x7x14xf32>
    %47 = vector.shape_cast %46 : vector<1x7x14xf32> to vector<7x14xf32>
    %cst_51 = arith.constant dense<0.000000e+00> : vector<7x224xf32>
    %48 = tpu.matmul %47, %30, %cst_51 {dimension_numbers = #tpu.dot_dimension_numbers<[1], [0], [0], [1], [0, 0, 1, 1], [], []>} : vector<7x14xf32>, vector<14x224xf32>, vector<7x224xf32> -> vector<7x224xf32>
    %c2_52 = arith.constant 2 : index
    %c0_53 = arith.constant 0 : index
    %c0_54 = arith.constant 0 : index
    %49 = vector.load %arg6[%c2_52, %c0_53, %c0_54] : memref<3x224x224xf32, #tpu.memory_space<vmem>>, vector<1x224x224xf32>
    %50 = vector.shape_cast %49 : vector<1x224x224xf32> to vector<224x224xf32>
    %cst_55 = arith.constant dense<0.000000e+00> : vector<7x224xf32>
    %51 = tpu.matmul %48, %50, %cst_55 {dimension_numbers = #tpu.dot_dimension_numbers<[1], [0], [0], [1], [0, 0, 1, 1], [], []>} : vector<7x224xf32>, vector<224x224xf32>, vector<7x224xf32> -> vector<7x224xf32>
    %52 = arith.addf %45, %51 : vector<7x224xf32>
    %c0_56 = arith.constant 0 : index
    %c0_57 = arith.constant 0 : index
    %53 = vector.load %arg7[%c0_56, %c0_57] : memref<1x224xf32, #tpu.memory_space<vmem>>, vector<1x224xf32>
    %54 = vector.broadcast %53 : vector<1x224xf32> to vector<7x224xf32>
    %55 = arith.addf %52, %54 : vector<7x224xf32>
    %cst_58 = arith.constant 0.000000e+00 : f32
    %56 = vector.broadcast %cst_58 : f32 to vector<7x224xf32>
    %57 = arith.maximumf %55, %56 : vector<7x224xf32>
    %cst_59 = arith.constant 0.000000e+00 : f32
    %58 = vector.broadcast %cst_59 : f32 to vector<1x16xf32>
    %c0_60 = arith.constant 0 : index
    %c0_61 = arith.constant 0 : index
    %59 = vector.load %arg10[%c0_60, %c0_61] : memref<1x16xf32, #tpu.memory_space<vmem>>, vector<1x16xf32>
    %60 = arith.addf %58, %59 : vector<1x16xf32>
    %c0_62 = arith.constant 0 : index
    %c0_63 = arith.constant 0 : index
    %c0_64 = arith.constant 0 : index
    %61 = vector.load %arg8[%c0_62, %c0_63, %c0_64] : memref<7x1x7xf32, #tpu.memory_space<vmem>>, vector<1x1x7xf32>
    %62 = vector.shape_cast %61 : vector<1x1x7xf32> to vector<1x7xf32>
    %cst_65 = arith.constant dense<0.000000e+00> : vector<1x224xf32>
    %63 = tpu.matmul %62, %57, %cst_65 {dimension_numbers = #tpu.dot_dimension_numbers<[1], [0], [0], [1], [0, 0, 1, 1], [], []>} : vector<1x7xf32>, vector<7x224xf32>, vector<1x224xf32> -> vector<1x224xf32>
    %c0_66 = arith.constant 0 : index
    %c0_67 = arith.constant 0 : index
    %c0_68 = arith.constant 0 : index
    %64 = vector.load %arg9[%c0_66, %c0_67, %c0_68] : memref<7x224x16xf32, #tpu.memory_space<vmem>>, vector<1x224x16xf32>
    %65 = vector.shape_cast %64 : vector<1x224x16xf32> to vector<224x16xf32>
    %cst_69 = arith.constant dense<0.000000e+00> : vector<1x16xf32>
    %66 = tpu.matmul %63, %65, %cst_69 {dimension_numbers = #tpu.dot_dimension_numbers<[1], [0], [0], [1], [0, 0, 1, 1], [], []>} : vector<1x224xf32>, vector<224x16xf32>, vector<1x16xf32> -> vector<1x16xf32>
    %67 = arith.addf %60, %66 : vector<1x16xf32>
    %c1_70 = arith.constant 1 : index
    %c0_71 = arith.constant 0 : index
    %c0_72 = arith.constant 0 : index
    %68 = vector.load %arg8[%c1_70, %c0_71, %c0_72] : memref<7x1x7xf32, #tpu.memory_space<vmem>>, vector<1x1x7xf32>
    %69 = vector.shape_cast %68 : vector<1x1x7xf32> to vector<1x7xf32>
    %cst_73 = arith.constant dense<0.000000e+00> : vector<1x224xf32>
    %70 = tpu.matmul %69, %57, %cst_73 {dimension_numbers = #tpu.dot_dimension_numbers<[1], [0], [0], [1], [0, 0, 1, 1], [], []>} : vector<1x7xf32>, vector<7x224xf32>, vector<1x224xf32> -> vector<1x224xf32>
    %c1_74 = arith.constant 1 : index
    %c0_75 = arith.constant 0 : index
    %c0_76 = arith.constant 0 : index
    %71 = vector.load %arg9[%c1_74, %c0_75, %c0_76] : memref<7x224x16xf32, #tpu.memory_space<vmem>>, vector<1x224x16xf32>
    %72 = vector.shape_cast %71 : vector<1x224x16xf32> to vector<224x16xf32>
    %cst_77 = arith.constant dense<0.000000e+00> : vector<1x16xf32>
    %73 = tpu.matmul %70, %72, %cst_77 {dimension_numbers = #tpu.dot_dimension_numbers<[1], [0], [0], [1], [0, 0, 1, 1], [], []>} : vector<1x224xf32>, vector<224x16xf32>, vector<1x16xf32> -> vector<1x16xf32>
    %74 = arith.addf %67, %73 : vector<1x16xf32>
    %c2_78 = arith.constant 2 : index
    %c0_79 = arith.constant 0 : index
    %c0_80 = arith.constant 0 : index
    %75 = vector.load %arg8[%c2_78, %c0_79, %c0_80] : memref<7x1x7xf32, #tpu.memory_space<vmem>>, vector<1x1x7xf32>
    %76 = vector.shape_cast %75 : vector<1x1x7xf32> to vector<1x7xf32>
    %cst_81 = arith.constant dense<0.000000e+00> : vector<1x224xf32>
    %77 = tpu.matmul %76, %57, %cst_81 {dimension_numbers = #tpu.dot_dimension_numbers<[1], [0], [0], [1], [0, 0, 1, 1], [], []>} : vector<1x7xf32>, vector<7x224xf32>, vector<1x224xf32> -> vector<1x224xf32>
    %c2_82 = arith.constant 2 : index
    %c0_83 = arith.constant 0 : index
    %c0_84 = arith.constant 0 : index
    %78 = vector.load %arg9[%c2_82, %c0_83, %c0_84] : memref<7x224x16xf32, #tpu.memory_space<vmem>>, vector<1x224x16xf32>
    %79 = vector.shape_cast %78 : vector<1x224x16xf32> to vector<224x16xf32>
    %cst_85 = arith.constant dense<0.000000e+00> : vector<1x16xf32>
    %80 = tpu.matmul %77, %79, %cst_85 {dimension_numbers = #tpu.dot_dimension_numbers<[1], [0], [0], [1], [0, 0, 1, 1], [], []>} : vector<1x224xf32>, vector<224x16xf32>, vector<1x16xf32> -> vector<1x16xf32>
    %81 = arith.addf %74, %80 : vector<1x16xf32>
    %c3 = arith.constant 3 : index
    %c0_86 = arith.constant 0 : index
    %c0_87 = arith.constant 0 : index
    %82 = vector.load %arg8[%c3, %c0_86, %c0_87] : memref<7x1x7xf32, #tpu.memory_space<vmem>>, vector<1x1x7xf32>
    %83 = vector.shape_cast %82 : vector<1x1x7xf32> to vector<1x7xf32>
    %cst_88 = arith.constant dense<0.000000e+00> : vector<1x224xf32>
    %84 = tpu.matmul %83, %57, %cst_88 {dimension_numbers = #tpu.dot_dimension_numbers<[1], [0], [0], [1], [0, 0, 1, 1], [], []>} : vector<1x7xf32>, vector<7x224xf32>, vector<1x224xf32> -> vector<1x224xf32>
    %c3_89 = arith.constant 3 : index
    %c0_90 = arith.constant 0 : index
    %c0_91 = arith.constant 0 : index
    %85 = vector.load %arg9[%c3_89, %c0_90, %c0_91] : memref<7x224x16xf32, #tpu.memory_space<vmem>>, vector<1x224x16xf32>
    %86 = vector.shape_cast %85 : vector<1x224x16xf32> to vector<224x16xf32>
    %cst_92 = arith.constant dense<0.000000e+00> : vector<1x16xf32>
    %87 = tpu.matmul %84, %86, %cst_92 {dimension_numbers = #tpu.dot_dimension_numbers<[1], [0], [0], [1], [0, 0, 1, 1], [], []>} : vector<1x224xf32>, vector<224x16xf32>, vector<1x16xf32> -> vector<1x16xf32>
    %88 = arith.addf %81, %87 : vector<1x16xf32>
    %c4 = arith.constant 4 : index
    %c0_93 = arith.constant 0 : index
    %c0_94 = arith.constant 0 : index
    %89 = vector.load %arg8[%c4, %c0_93, %c0_94] : memref<7x1x7xf32, #tpu.memory_space<vmem>>, vector<1x1x7xf32>
    %90 = vector.shape_cast %89 : vector<1x1x7xf32> to vector<1x7xf32>
    %cst_95 = arith.constant dense<0.000000e+00> : vector<1x224xf32>
    %91 = tpu.matmul %90, %57, %cst_95 {dimension_numbers = #tpu.dot_dimension_numbers<[1], [0], [0], [1], [0, 0, 1, 1], [], []>} : vector<1x7xf32>, vector<7x224xf32>, vector<1x224xf32> -> vector<1x224xf32>
    %c4_96 = arith.constant 4 : index
    %c0_97 = arith.constant 0 : index
    %c0_98 = arith.constant 0 : index
    %92 = vector.load %arg9[%c4_96, %c0_97, %c0_98] : memref<7x224x16xf32, #tpu.memory_space<vmem>>, vector<1x224x16xf32>
    %93 = vector.shape_cast %92 : vector<1x224x16xf32> to vector<224x16xf32>
    %cst_99 = arith.constant dense<0.000000e+00> : vector<1x16xf32>
    %94 = tpu.matmul %91, %93, %cst_99 {dimension_numbers = #tpu.dot_dimension_numbers<[1], [0], [0], [1], [0, 0, 1, 1], [], []>} : vector<1x224xf32>, vector<224x16xf32>, vector<1x16xf32> -> vector<1x16xf32>
    %95 = arith.addf %88, %94 : vector<1x16xf32>
    %c5 = arith.constant 5 : index
    %c0_100 = arith.constant 0 : index
    %c0_101 = arith.constant 0 : index
    %96 = vector.load %arg8[%c5, %c0_100, %c0_101] : memref<7x1x7xf32, #tpu.memory_space<vmem>>, vector<1x1x7xf32>
    %97 = vector.shape_cast %96 : vector<1x1x7xf32> to vector<1x7xf32>
    %cst_102 = arith.constant dense<0.000000e+00> : vector<1x224xf32>
    %98 = tpu.matmul %97, %57, %cst_102 {dimension_numbers = #tpu.dot_dimension_numbers<[1], [0], [0], [1], [0, 0, 1, 1], [], []>} : vector<1x7xf32>, vector<7x224xf32>, vector<1x224xf32> -> vector<1x224xf32>
    %c5_103 = arith.constant 5 : index
    %c0_104 = arith.constant 0 : index
    %c0_105 = arith.constant 0 : index
    %99 = vector.load %arg9[%c5_103, %c0_104, %c0_105] : memref<7x224x16xf32, #tpu.memory_space<vmem>>, vector<1x224x16xf32>
    %100 = vector.shape_cast %99 : vector<1x224x16xf32> to vector<224x16xf32>
    %cst_106 = arith.constant dense<0.000000e+00> : vector<1x16xf32>
    %101 = tpu.matmul %98, %100, %cst_106 {dimension_numbers = #tpu.dot_dimension_numbers<[1], [0], [0], [1], [0, 0, 1, 1], [], []>} : vector<1x224xf32>, vector<224x16xf32>, vector<1x16xf32> -> vector<1x16xf32>
    %102 = arith.addf %95, %101 : vector<1x16xf32>
    %c6 = arith.constant 6 : index
    %c0_107 = arith.constant 0 : index
    %c0_108 = arith.constant 0 : index
    %103 = vector.load %arg8[%c6, %c0_107, %c0_108] : memref<7x1x7xf32, #tpu.memory_space<vmem>>, vector<1x1x7xf32>
    %104 = vector.shape_cast %103 : vector<1x1x7xf32> to vector<1x7xf32>
    %cst_109 = arith.constant dense<0.000000e+00> : vector<1x224xf32>
    %105 = tpu.matmul %104, %57, %cst_109 {dimension_numbers = #tpu.dot_dimension_numbers<[1], [0], [0], [1], [0, 0, 1, 1], [], []>} : vector<1x7xf32>, vector<7x224xf32>, vector<1x224xf32> -> vector<1x224xf32>
    %c6_110 = arith.constant 6 : index
    %c0_111 = arith.constant 0 : index
    %c0_112 = arith.constant 0 : index
    %106 = vector.load %arg9[%c6_110, %c0_111, %c0_112] : memref<7x224x16xf32, #tpu.memory_space<vmem>>, vector<1x224x16xf32>
    %107 = vector.shape_cast %106 : vector<1x224x16xf32> to vector<224x16xf32>
    %cst_113 = arith.constant dense<0.000000e+00> : vector<1x16xf32>
    %108 = tpu.matmul %105, %107, %cst_113 {dimension_numbers = #tpu.dot_dimension_numbers<[1], [0], [0], [1], [0, 0, 1, 1], [], []>} : vector<1x224xf32>, vector<224x16xf32>, vector<1x16xf32> -> vector<1x16xf32>
    %109 = arith.addf %102, %108 : vector<1x16xf32>
    %c0_114 = arith.constant 0 : index
    %c0_115 = arith.constant 0 : index
    %110 = vector.load %arg11[%c0_114, %c0_115] : memref<16x32xf32, #tpu.memory_space<vmem>>, vector<16x32xf32>
    %cst_116 = arith.constant dense<0.000000e+00> : vector<1x32xf32>
    %111 = tpu.matmul %109, %110, %cst_116 {dimension_numbers = #tpu.dot_dimension_numbers<[1], [0], [0], [1], [0, 0, 1, 1], [], []>} : vector<1x16xf32>, vector<16x32xf32>, vector<1x32xf32> -> vector<1x32xf32>
    %cst_117 = arith.constant dense<0xFF800000> : vector<1xf32>
    %112 = vector.multi_reduction <maximumf>, %111, %cst_117 [1] : vector<1x32xf32> to vector<1xf32>
    %113 = vector.shape_cast %112 : vector<1xf32> to vector<1x1xf32>
    %114 = vector.broadcast %113 : vector<1x1xf32> to vector<1x32xf32>
    %115 = arith.subf %111, %114 : vector<1x32xf32>
    %116 = math.exp %115 : vector<1x32xf32>
    %cst_118 = arith.constant dense<0.000000e+00> : vector<1xf32>
    %117 = vector.multi_reduction <add>, %116, %cst_118 [1] : vector<1x32xf32> to vector<1xf32>
    %118 = vector.shape_cast %117 : vector<1xf32> to vector<1x1xf32>
    %119 = vector.broadcast %118 : vector<1x1xf32> to vector<1x32xf32>
    %120 = arith.divf %116, %119 : vector<1x32xf32>
    %cst_119 = arith.constant 2.500000e-03 : f32
    %121 = vector.broadcast %cst_119 : f32 to vector<1x32xf32>
    %122 = arith.subf %120, %121 : vector<1x32xf32>
    %cst_120 = arith.constant 0.000000e+00 : f32
    %123 = vector.broadcast %cst_120 : f32 to vector<1x32xf32>
    %124 = arith.maximumf %122, %123 : vector<1x32xf32>
    %125 = arith.mulf %124, %120 : vector<1x32xf32>
    %126 = math.absf %122 : vector<1x32xf32>
    %cst_121 = arith.constant 9.99999996E-13 : f32
    %127 = vector.broadcast %cst_121 : f32 to vector<1x32xf32>
    %128 = arith.addf %126, %127 : vector<1x32xf32>
    %129 = arith.divf %125, %128 : vector<1x32xf32>
    %cst_122 = arith.constant dense<0.000000e+00> : vector<1xf32>
    %130 = vector.multi_reduction <add>, %129, %cst_122 [1] : vector<1x32xf32> to vector<1xf32>
    %131 = vector.shape_cast %130 : vector<1xf32> to vector<1x1xf32>
    %cst_123 = arith.constant 9.99999996E-13 : f32
    %132 = vector.broadcast %cst_123 : f32 to vector<1x1xf32>
    %133 = arith.maximumf %131, %132 : vector<1x1xf32>
    %134 = vector.broadcast %133 : vector<1x1xf32> to vector<1x32xf32>
    %135 = arith.divf %129, %134 : vector<1x32xf32>
    %cst_124 = arith.constant 0.000000e+00 : f32
    %136 = vector.broadcast %cst_124 : f32 to vector<7x224xf32>
    %c0_125 = arith.constant 0 : index
    %c0_126 = arith.constant 0 : index
    %c0_127 = arith.constant 0 : index
    %137 = vector.load %arg12[%c0_125, %c0_126, %c0_127] : memref<7x32x224xf32, #tpu.memory_space<vmem>>, vector<1x32x224xf32>
    %138 = vector.shape_cast %137 : vector<1x32x224xf32> to vector<32x224xf32>
    %cst_128 = arith.constant dense<0.000000e+00> : vector<1x224xf32>
    %139 = tpu.matmul %135, %138, %cst_128 {dimension_numbers = #tpu.dot_dimension_numbers<[1], [0], [0], [1], [0, 0, 1, 1], [], []>} : vector<1x32xf32>, vector<32x224xf32>, vector<1x224xf32> -> vector<1x224xf32>
    %c0_129 = arith.constant 0 : index
    %c0_130 = arith.constant 0 : index
    %c0_131 = arith.constant 0 : index
    %140 = vector.load %arg13[%c0_129, %c0_130, %c0_131] : memref<7x1x224xf32, #tpu.memory_space<vmem>>, vector<1x1x224xf32>
    %141 = vector.shape_cast %140 : vector<1x1x224xf32> to vector<1x224xf32>
    %142 = arith.addf %139, %141 : vector<1x224xf32>
    %cst_132 = arith.constant 0.000000e+00 : f32
    %143 = vector.broadcast %cst_132 : f32 to vector<1x224xf32>
    %144 = arith.maximumf %142, %143 : vector<1x224xf32>
    %c0_133 = arith.constant 0 : index
    %c0_134 = arith.constant 0 : index
    %c0_135 = arith.constant 0 : index
    %145 = vector.load %arg14[%c0_133, %c0_134, %c0_135] : memref<7x7x1xf32, #tpu.memory_space<vmem>>, vector<1x7x1xf32>
    %146 = vector.shape_cast %145 : vector<1x7x1xf32> to vector<7x1xf32>
    %cst_136 = arith.constant dense<0.000000e+00> : vector<7x224xf32>
    %147 = tpu.matmul %146, %144, %cst_136 {dimension_numbers = #tpu.dot_dimension_numbers<[1], [0], [0], [1], [0, 0, 1, 1], [], []>} : vector<7x1xf32>, vector<1x224xf32>, vector<7x224xf32> -> vector<7x224xf32>
    %148 = arith.addf %136, %147 : vector<7x224xf32>
    %c1_137 = arith.constant 1 : index
    %c0_138 = arith.constant 0 : index
    %c0_139 = arith.constant 0 : index
    %149 = vector.load %arg12[%c1_137, %c0_138, %c0_139] : memref<7x32x224xf32, #tpu.memory_space<vmem>>, vector<1x32x224xf32>
    %150 = vector.shape_cast %149 : vector<1x32x224xf32> to vector<32x224xf32>
    %cst_140 = arith.constant dense<0.000000e+00> : vector<1x224xf32>
    %151 = tpu.matmul %135, %150, %cst_140 {dimension_numbers = #tpu.dot_dimension_numbers<[1], [0], [0], [1], [0, 0, 1, 1], [], []>} : vector<1x32xf32>, vector<32x224xf32>, vector<1x224xf32> -> vector<1x224xf32>
    %c1_141 = arith.constant 1 : index
    %c0_142 = arith.constant 0 : index
    %c0_143 = arith.constant 0 : index
    %152 = vector.load %arg13[%c1_141, %c0_142, %c0_143] : memref<7x1x224xf32, #tpu.memory_space<vmem>>, vector<1x1x224xf32>
    %153 = vector.shape_cast %152 : vector<1x1x224xf32> to vector<1x224xf32>
    %154 = arith.addf %151, %153 : vector<1x224xf32>
    %cst_144 = arith.constant 0.000000e+00 : f32
    %155 = vector.broadcast %cst_144 : f32 to vector<1x224xf32>
    %156 = arith.maximumf %154, %155 : vector<1x224xf32>
    %c1_145 = arith.constant 1 : index
    %c0_146 = arith.constant 0 : index
    %c0_147 = arith.constant 0 : index
    %157 = vector.load %arg14[%c1_145, %c0_146, %c0_147] : memref<7x7x1xf32, #tpu.memory_space<vmem>>, vector<1x7x1xf32>
    %158 = vector.shape_cast %157 : vector<1x7x1xf32> to vector<7x1xf32>
    %cst_148 = arith.constant dense<0.000000e+00> : vector<7x224xf32>
    %159 = tpu.matmul %158, %156, %cst_148 {dimension_numbers = #tpu.dot_dimension_numbers<[1], [0], [0], [1], [0, 0, 1, 1], [], []>} : vector<7x1xf32>, vector<1x224xf32>, vector<7x224xf32> -> vector<7x224xf32>
    %160 = arith.addf %148, %159 : vector<7x224xf32>
    %c2_149 = arith.constant 2 : index
    %c0_150 = arith.constant 0 : index
    %c0_151 = arith.constant 0 : index
    %161 = vector.load %arg12[%c2_149, %c0_150, %c0_151] : memref<7x32x224xf32, #tpu.memory_space<vmem>>, vector<1x32x224xf32>
    %162 = vector.shape_cast %161 : vector<1x32x224xf32> to vector<32x224xf32>
    %cst_152 = arith.constant dense<0.000000e+00> : vector<1x224xf32>
    %163 = tpu.matmul %135, %162, %cst_152 {dimension_numbers = #tpu.dot_dimension_numbers<[1], [0], [0], [1], [0, 0, 1, 1], [], []>} : vector<1x32xf32>, vector<32x224xf32>, vector<1x224xf32> -> vector<1x224xf32>
    %c2_153 = arith.constant 2 : index
    %c0_154 = arith.constant 0 : index
    %c0_155 = arith.constant 0 : index
    %164 = vector.load %arg13[%c2_153, %c0_154, %c0_155] : memref<7x1x224xf32, #tpu.memory_space<vmem>>, vector<1x1x224xf32>
    %165 = vector.shape_cast %164 : vector<1x1x224xf32> to vector<1x224xf32>
    %166 = arith.addf %163, %165 : vector<1x224xf32>
    %cst_156 = arith.constant 0.000000e+00 : f32
    %167 = vector.broadcast %cst_156 : f32 to vector<1x224xf32>
    %168 = arith.maximumf %166, %167 : vector<1x224xf32>
    %c2_157 = arith.constant 2 : index
    %c0_158 = arith.constant 0 : index
    %c0_159 = arith.constant 0 : index
    %169 = vector.load %arg14[%c2_157, %c0_158, %c0_159] : memref<7x7x1xf32, #tpu.memory_space<vmem>>, vector<1x7x1xf32>
    %170 = vector.shape_cast %169 : vector<1x7x1xf32> to vector<7x1xf32>
    %cst_160 = arith.constant dense<0.000000e+00> : vector<7x224xf32>
    %171 = tpu.matmul %170, %168, %cst_160 {dimension_numbers = #tpu.dot_dimension_numbers<[1], [0], [0], [1], [0, 0, 1, 1], [], []>} : vector<7x1xf32>, vector<1x224xf32>, vector<7x224xf32> -> vector<7x224xf32>
    %172 = arith.addf %160, %171 : vector<7x224xf32>
    %c3_161 = arith.constant 3 : index
    %c0_162 = arith.constant 0 : index
    %c0_163 = arith.constant 0 : index
    %173 = vector.load %arg12[%c3_161, %c0_162, %c0_163] : memref<7x32x224xf32, #tpu.memory_space<vmem>>, vector<1x32x224xf32>
    %174 = vector.shape_cast %173 : vector<1x32x224xf32> to vector<32x224xf32>
    %cst_164 = arith.constant dense<0.000000e+00> : vector<1x224xf32>
    %175 = tpu.matmul %135, %174, %cst_164 {dimension_numbers = #tpu.dot_dimension_numbers<[1], [0], [0], [1], [0, 0, 1, 1], [], []>} : vector<1x32xf32>, vector<32x224xf32>, vector<1x224xf32> -> vector<1x224xf32>
    %c3_165 = arith.constant 3 : index
    %c0_166 = arith.constant 0 : index
    %c0_167 = arith.constant 0 : index
    %176 = vector.load %arg13[%c3_165, %c0_166, %c0_167] : memref<7x1x224xf32, #tpu.memory_space<vmem>>, vector<1x1x224xf32>
    %177 = vector.shape_cast %176 : vector<1x1x224xf32> to vector<1x224xf32>
    %178 = arith.addf %175, %177 : vector<1x224xf32>
    %cst_168 = arith.constant 0.000000e+00 : f32
    %179 = vector.broadcast %cst_168 : f32 to vector<1x224xf32>
    %180 = arith.maximumf %178, %179 : vector<1x224xf32>
    %c3_169 = arith.constant 3 : index
    %c0_170 = arith.constant 0 : index
    %c0_171 = arith.constant 0 : index
    %181 = vector.load %arg14[%c3_169, %c0_170, %c0_171] : memref<7x7x1xf32, #tpu.memory_space<vmem>>, vector<1x7x1xf32>
    %182 = vector.shape_cast %181 : vector<1x7x1xf32> to vector<7x1xf32>
    %cst_172 = arith.constant dense<0.000000e+00> : vector<7x224xf32>
    %183 = tpu.matmul %182, %180, %cst_172 {dimension_numbers = #tpu.dot_dimension_numbers<[1], [0], [0], [1], [0, 0, 1, 1], [], []>} : vector<7x1xf32>, vector<1x224xf32>, vector<7x224xf32> -> vector<7x224xf32>
    %184 = arith.addf %172, %183 : vector<7x224xf32>
    %c4_173 = arith.constant 4 : index
    %c0_174 = arith.constant 0 : index
    %c0_175 = arith.constant 0 : index
    %185 = vector.load %arg12[%c4_173, %c0_174, %c0_175] : memref<7x32x224xf32, #tpu.memory_space<vmem>>, vector<1x32x224xf32>
    %186 = vector.shape_cast %185 : vector<1x32x224xf32> to vector<32x224xf32>
    %cst_176 = arith.constant dense<0.000000e+00> : vector<1x224xf32>
    %187 = tpu.matmul %135, %186, %cst_176 {dimension_numbers = #tpu.dot_dimension_numbers<[1], [0], [0], [1], [0, 0, 1, 1], [], []>} : vector<1x32xf32>, vector<32x224xf32>, vector<1x224xf32> -> vector<1x224xf32>
    %c4_177 = arith.constant 4 : index
    %c0_178 = arith.constant 0 : index
    %c0_179 = arith.constant 0 : index
    %188 = vector.load %arg13[%c4_177, %c0_178, %c0_179] : memref<7x1x224xf32, #tpu.memory_space<vmem>>, vector<1x1x224xf32>
    %189 = vector.shape_cast %188 : vector<1x1x224xf32> to vector<1x224xf32>
    %190 = arith.addf %187, %189 : vector<1x224xf32>
    %cst_180 = arith.constant 0.000000e+00 : f32
    %191 = vector.broadcast %cst_180 : f32 to vector<1x224xf32>
    %192 = arith.maximumf %190, %191 : vector<1x224xf32>
    %c4_181 = arith.constant 4 : index
    %c0_182 = arith.constant 0 : index
    %c0_183 = arith.constant 0 : index
    %193 = vector.load %arg14[%c4_181, %c0_182, %c0_183] : memref<7x7x1xf32, #tpu.memory_space<vmem>>, vector<1x7x1xf32>
    %194 = vector.shape_cast %193 : vector<1x7x1xf32> to vector<7x1xf32>
    %cst_184 = arith.constant dense<0.000000e+00> : vector<7x224xf32>
    %195 = tpu.matmul %194, %192, %cst_184 {dimension_numbers = #tpu.dot_dimension_numbers<[1], [0], [0], [1], [0, 0, 1, 1], [], []>} : vector<7x1xf32>, vector<1x224xf32>, vector<7x224xf32> -> vector<7x224xf32>
    %196 = arith.addf %184, %195 : vector<7x224xf32>
    %c5_185 = arith.constant 5 : index
    %c0_186 = arith.constant 0 : index
    %c0_187 = arith.constant 0 : index
    %197 = vector.load %arg12[%c5_185, %c0_186, %c0_187] : memref<7x32x224xf32, #tpu.memory_space<vmem>>, vector<1x32x224xf32>
    %198 = vector.shape_cast %197 : vector<1x32x224xf32> to vector<32x224xf32>
    %cst_188 = arith.constant dense<0.000000e+00> : vector<1x224xf32>
    %199 = tpu.matmul %135, %198, %cst_188 {dimension_numbers = #tpu.dot_dimension_numbers<[1], [0], [0], [1], [0, 0, 1, 1], [], []>} : vector<1x32xf32>, vector<32x224xf32>, vector<1x224xf32> -> vector<1x224xf32>
    %c5_189 = arith.constant 5 : index
    %c0_190 = arith.constant 0 : index
    %c0_191 = arith.constant 0 : index
    %200 = vector.load %arg13[%c5_189, %c0_190, %c0_191] : memref<7x1x224xf32, #tpu.memory_space<vmem>>, vector<1x1x224xf32>
    %201 = vector.shape_cast %200 : vector<1x1x224xf32> to vector<1x224xf32>
    %202 = arith.addf %199, %201 : vector<1x224xf32>
    %cst_192 = arith.constant 0.000000e+00 : f32
    %203 = vector.broadcast %cst_192 : f32 to vector<1x224xf32>
    %204 = arith.maximumf %202, %203 : vector<1x224xf32>
    %c5_193 = arith.constant 5 : index
    %c0_194 = arith.constant 0 : index
    %c0_195 = arith.constant 0 : index
    %205 = vector.load %arg14[%c5_193, %c0_194, %c0_195] : memref<7x7x1xf32, #tpu.memory_space<vmem>>, vector<1x7x1xf32>
    %206 = vector.shape_cast %205 : vector<1x7x1xf32> to vector<7x1xf32>
    %cst_196 = arith.constant dense<0.000000e+00> : vector<7x224xf32>
    %207 = tpu.matmul %206, %204, %cst_196 {dimension_numbers = #tpu.dot_dimension_numbers<[1], [0], [0], [1], [0, 0, 1, 1], [], []>} : vector<7x1xf32>, vector<1x224xf32>, vector<7x224xf32> -> vector<7x224xf32>
    %208 = arith.addf %196, %207 : vector<7x224xf32>
    %c6_197 = arith.constant 6 : index
    %c0_198 = arith.constant 0 : index
    %c0_199 = arith.constant 0 : index
    %209 = vector.load %arg12[%c6_197, %c0_198, %c0_199] : memref<7x32x224xf32, #tpu.memory_space<vmem>>, vector<1x32x224xf32>
    %210 = vector.shape_cast %209 : vector<1x32x224xf32> to vector<32x224xf32>
    %cst_200 = arith.constant dense<0.000000e+00> : vector<1x224xf32>
    %211 = tpu.matmul %135, %210, %cst_200 {dimension_numbers = #tpu.dot_dimension_numbers<[1], [0], [0], [1], [0, 0, 1, 1], [], []>} : vector<1x32xf32>, vector<32x224xf32>, vector<1x224xf32> -> vector<1x224xf32>
    %c6_201 = arith.constant 6 : index
    %c0_202 = arith.constant 0 : index
    %c0_203 = arith.constant 0 : index
    %212 = vector.load %arg13[%c6_201, %c0_202, %c0_203] : memref<7x1x224xf32, #tpu.memory_space<vmem>>, vector<1x1x224xf32>
    %213 = vector.shape_cast %212 : vector<1x1x224xf32> to vector<1x224xf32>
    %214 = arith.addf %211, %213 : vector<1x224xf32>
    %cst_204 = arith.constant 0.000000e+00 : f32
    %215 = vector.broadcast %cst_204 : f32 to vector<1x224xf32>
    %216 = arith.maximumf %214, %215 : vector<1x224xf32>
    %c6_205 = arith.constant 6 : index
    %c0_206 = arith.constant 0 : index
    %c0_207 = arith.constant 0 : index
    %217 = vector.load %arg14[%c6_205, %c0_206, %c0_207] : memref<7x7x1xf32, #tpu.memory_space<vmem>>, vector<1x7x1xf32>
    %218 = vector.shape_cast %217 : vector<1x7x1xf32> to vector<7x1xf32>
    %cst_208 = arith.constant dense<0.000000e+00> : vector<7x224xf32>
    %219 = tpu.matmul %218, %216, %cst_208 {dimension_numbers = #tpu.dot_dimension_numbers<[1], [0], [0], [1], [0, 0, 1, 1], [], []>} : vector<7x1xf32>, vector<1x224xf32>, vector<7x224xf32> -> vector<7x224xf32>
    %220 = arith.addf %208, %219 : vector<7x224xf32>
    %cst_209 = arith.constant 0.000000e+00 : f32
    %221 = vector.broadcast %cst_209 : f32 to vector<14x224xf32>
    %c0_210 = arith.constant 0 : index
    %c0_211 = arith.constant 0 : index
    %c0_212 = arith.constant 0 : index
    %222 = vector.load %arg15[%c0_210, %c0_211, %c0_212] : memref<3x14x7xf32, #tpu.memory_space<vmem>>, vector<1x14x7xf32>
    %223 = vector.shape_cast %222 : vector<1x14x7xf32> to vector<14x7xf32>
    %cst_213 = arith.constant dense<0.000000e+00> : vector<14x224xf32>
    %224 = tpu.matmul %223, %220, %cst_213 {dimension_numbers = #tpu.dot_dimension_numbers<[1], [0], [0], [1], [0, 0, 1, 1], [], []>} : vector<14x7xf32>, vector<7x224xf32>, vector<14x224xf32> -> vector<14x224xf32>
    %c0_214 = arith.constant 0 : index
    %c0_215 = arith.constant 0 : index
    %c0_216 = arith.constant 0 : index
    %225 = vector.load %arg16[%c0_214, %c0_215, %c0_216] : memref<3x224x224xf32, #tpu.memory_space<vmem>>, vector<1x224x224xf32>
    %226 = vector.shape_cast %225 : vector<1x224x224xf32> to vector<224x224xf32>
    %cst_217 = arith.constant dense<0.000000e+00> : vector<14x224xf32>
    %227 = tpu.matmul %224, %226, %cst_217 {dimension_numbers = #tpu.dot_dimension_numbers<[1], [0], [0], [1], [0, 0, 1, 1], [], []>} : vector<14x224xf32>, vector<224x224xf32>, vector<14x224xf32> -> vector<14x224xf32>
    %228 = arith.addf %221, %227 : vector<14x224xf32>
    %c1_218 = arith.constant 1 : index
    %c0_219 = arith.constant 0 : index
    %c0_220 = arith.constant 0 : index
    %229 = vector.load %arg15[%c1_218, %c0_219, %c0_220] : memref<3x14x7xf32, #tpu.memory_space<vmem>>, vector<1x14x7xf32>
    %230 = vector.shape_cast %229 : vector<1x14x7xf32> to vector<14x7xf32>
    %cst_221 = arith.constant dense<0.000000e+00> : vector<14x224xf32>
    %231 = tpu.matmul %230, %220, %cst_221 {dimension_numbers = #tpu.dot_dimension_numbers<[1], [0], [0], [1], [0, 0, 1, 1], [], []>} : vector<14x7xf32>, vector<7x224xf32>, vector<14x224xf32> -> vector<14x224xf32>
    %c1_222 = arith.constant 1 : index
    %c0_223 = arith.constant 0 : index
    %c0_224 = arith.constant 0 : index
    %232 = vector.load %arg16[%c1_222, %c0_223, %c0_224] : memref<3x224x224xf32, #tpu.memory_space<vmem>>, vector<1x224x224xf32>
    %233 = vector.shape_cast %232 : vector<1x224x224xf32> to vector<224x224xf32>
    %cst_225 = arith.constant dense<0.000000e+00> : vector<14x224xf32>
    %234 = tpu.matmul %231, %233, %cst_225 {dimension_numbers = #tpu.dot_dimension_numbers<[1], [0], [0], [1], [0, 0, 1, 1], [], []>} : vector<14x224xf32>, vector<224x224xf32>, vector<14x224xf32> -> vector<14x224xf32>
    %235 = arith.addf %228, %234 : vector<14x224xf32>
    %c2_226 = arith.constant 2 : index
    %c0_227 = arith.constant 0 : index
    %c0_228 = arith.constant 0 : index
    %236 = vector.load %arg15[%c2_226, %c0_227, %c0_228] : memref<3x14x7xf32, #tpu.memory_space<vmem>>, vector<1x14x7xf32>
    %237 = vector.shape_cast %236 : vector<1x14x7xf32> to vector<14x7xf32>
    %cst_229 = arith.constant dense<0.000000e+00> : vector<14x224xf32>
    %238 = tpu.matmul %237, %220, %cst_229 {dimension_numbers = #tpu.dot_dimension_numbers<[1], [0], [0], [1], [0, 0, 1, 1], [], []>} : vector<14x7xf32>, vector<7x224xf32>, vector<14x224xf32> -> vector<14x224xf32>
    %c2_230 = arith.constant 2 : index
    %c0_231 = arith.constant 0 : index
    %c0_232 = arith.constant 0 : index
    %239 = vector.load %arg16[%c2_230, %c0_231, %c0_232] : memref<3x224x224xf32, #tpu.memory_space<vmem>>, vector<1x224x224xf32>
    %240 = vector.shape_cast %239 : vector<1x224x224xf32> to vector<224x224xf32>
    %cst_233 = arith.constant dense<0.000000e+00> : vector<14x224xf32>
    %241 = tpu.matmul %238, %240, %cst_233 {dimension_numbers = #tpu.dot_dimension_numbers<[1], [0], [0], [1], [0, 0, 1, 1], [], []>} : vector<14x224xf32>, vector<224x224xf32>, vector<14x224xf32> -> vector<14x224xf32>
    %242 = arith.addf %235, %241 : vector<14x224xf32>
    %c0_234 = arith.constant 0 : index
    %c0_235 = arith.constant 0 : index
    %243 = vector.load %arg17[%c0_234, %c0_235] : memref<1x224xf32, #tpu.memory_space<vmem>>, vector<1x224xf32>
    %244 = vector.broadcast %243 : vector<1x224xf32> to vector<14x224xf32>
    %245 = arith.addf %242, %244 : vector<14x224xf32>
    %cst_236 = arith.constant 0.000000e+00 : f32
    %246 = vector.broadcast %cst_236 : f32 to vector<14x224xf32>
    %247 = arith.maximumf %245, %246 : vector<14x224xf32>
    %cst_237 = arith.constant 0.000000e+00 : f32
    %248 = vector.broadcast %cst_237 : f32 to vector<28x28xf32>
    %c0_238 = arith.constant 0 : index
    %c0_239 = arith.constant 0 : index
    %c0_240 = arith.constant 0 : index
    %249 = vector.load %arg18[%c0_238, %c0_239, %c0_240] : memref<3x28x14xf32, #tpu.memory_space<vmem>>, vector<1x28x14xf32>
    %250 = vector.shape_cast %249 : vector<1x28x14xf32> to vector<28x14xf32>
    %cst_241 = arith.constant dense<0.000000e+00> : vector<28x224xf32>
    %251 = tpu.matmul %250, %247, %cst_241 {dimension_numbers = #tpu.dot_dimension_numbers<[1], [0], [0], [1], [0, 0, 1, 1], [], []>} : vector<28x14xf32>, vector<14x224xf32>, vector<28x224xf32> -> vector<28x224xf32>
    %c0_242 = arith.constant 0 : index
    %c0_243 = arith.constant 0 : index
    %c0_244 = arith.constant 0 : index
    %252 = vector.load %arg19[%c0_242, %c0_243, %c0_244] : memref<3x224x28xf32, #tpu.memory_space<vmem>>, vector<1x224x28xf32>
    %253 = vector.shape_cast %252 : vector<1x224x28xf32> to vector<224x28xf32>
    %cst_245 = arith.constant dense<0.000000e+00> : vector<28x28xf32>
    %254 = tpu.matmul %251, %253, %cst_245 {dimension_numbers = #tpu.dot_dimension_numbers<[1], [0], [0], [1], [0, 0, 1, 1], [], []>} : vector<28x224xf32>, vector<224x28xf32>, vector<28x28xf32> -> vector<28x28xf32>
    %255 = arith.addf %248, %254 : vector<28x28xf32>
    %c1_246 = arith.constant 1 : index
    %c0_247 = arith.constant 0 : index
    %c0_248 = arith.constant 0 : index
    %256 = vector.load %arg18[%c1_246, %c0_247, %c0_248] : memref<3x28x14xf32, #tpu.memory_space<vmem>>, vector<1x28x14xf32>
    %257 = vector.shape_cast %256 : vector<1x28x14xf32> to vector<28x14xf32>
    %cst_249 = arith.constant dense<0.000000e+00> : vector<28x224xf32>
    %258 = tpu.matmul %257, %247, %cst_249 {dimension_numbers = #tpu.dot_dimension_numbers<[1], [0], [0], [1], [0, 0, 1, 1], [], []>} : vector<28x14xf32>, vector<14x224xf32>, vector<28x224xf32> -> vector<28x224xf32>
    %c1_250 = arith.constant 1 : index
    %c0_251 = arith.constant 0 : index
    %c0_252 = arith.constant 0 : index
    %259 = vector.load %arg19[%c1_250, %c0_251, %c0_252] : memref<3x224x28xf32, #tpu.memory_space<vmem>>, vector<1x224x28xf32>
    %260 = vector.shape_cast %259 : vector<1x224x28xf32> to vector<224x28xf32>
    %cst_253 = arith.constant dense<0.000000e+00> : vector<28x28xf32>
    %261 = tpu.matmul %258, %260, %cst_253 {dimension_numbers = #tpu.dot_dimension_numbers<[1], [0], [0], [1], [0, 0, 1, 1], [], []>} : vector<28x224xf32>, vector<224x28xf32>, vector<28x28xf32> -> vector<28x28xf32>
    %262 = arith.addf %255, %261 : vector<28x28xf32>
    %c2_254 = arith.constant 2 : index
    %c0_255 = arith.constant 0 : index
    %c0_256 = arith.constant 0 : index
    %263 = vector.load %arg18[%c2_254, %c0_255, %c0_256] : memref<3x28x14xf32, #tpu.memory_space<vmem>>, vector<1x28x14xf32>
    %264 = vector.shape_cast %263 : vector<1x28x14xf32> to vector<28x14xf32>
    %cst_257 = arith.constant dense<0.000000e+00> : vector<28x224xf32>
    %265 = tpu.matmul %264, %247, %cst_257 {dimension_numbers = #tpu.dot_dimension_numbers<[1], [0], [0], [1], [0, 0, 1, 1], [], []>} : vector<28x14xf32>, vector<14x224xf32>, vector<28x224xf32> -> vector<28x224xf32>
    %c2_258 = arith.constant 2 : index
    %c0_259 = arith.constant 0 : index
    %c0_260 = arith.constant 0 : index
    %266 = vector.load %arg19[%c2_258, %c0_259, %c0_260] : memref<3x224x28xf32, #tpu.memory_space<vmem>>, vector<1x224x28xf32>
    %267 = vector.shape_cast %266 : vector<1x224x28xf32> to vector<224x28xf32>
    %cst_261 = arith.constant dense<0.000000e+00> : vector<28x28xf32>
    %268 = tpu.matmul %265, %267, %cst_261 {dimension_numbers = #tpu.dot_dimension_numbers<[1], [0], [0], [1], [0, 0, 1, 1], [], []>} : vector<28x224xf32>, vector<224x28xf32>, vector<28x28xf32> -> vector<28x28xf32>
    %269 = arith.addf %262, %268 : vector<28x28xf32>
    %c0_262 = arith.constant 0 : index
    %c0_263 = arith.constant 0 : index
    %270 = vector.load %arg20[%c0_262, %c0_263] : memref<1x28xf32, #tpu.memory_space<vmem>>, vector<1x28xf32>
    %271 = vector.broadcast %270 : vector<1x28xf32> to vector<28x28xf32>
    %272 = arith.addf %269, %271 : vector<28x28xf32>
    %273 = arith.negf %272 : vector<28x28xf32>
    %274 = math.exp %273 : vector<28x28xf32>
    %cst_264 = arith.constant 1.000000e+00 : f32
    %275 = vector.broadcast %cst_264 : f32 to vector<28x28xf32>
    %276 = arith.addf %275, %274 : vector<28x28xf32>
    %277 = arith.divf %275, %276 : vector<28x28xf32>
    %c0_265 = arith.constant 0 : index
    %c0_266 = arith.constant 0 : index
    %c0_267 = arith.constant 0 : index
    %278 = vector.load %arg21[%c0_265, %c0_266, %c0_267] : memref<1x28x28xf32, #tpu.memory_space<vmem>>, vector<1x28x28xf32>
    %279 = vector.shape_cast %278 : vector<1x28x28xf32> to vector<28x28xf32>
    %280 = vector.shape_cast %277 : vector<28x28xf32> to vector<1x28x28xf32>
    tpu.vector_store %arg21[%c0_265, %c0_266, %c0_267], %280 {strides = array<i32>} : memref<1x28x28xf32, #tpu.memory_space<vmem>>, vector<1x28x28xf32>,
    %c0_268 = arith.constant 0 : index
    %c0_269 = arith.constant 0 : index
    %c0_270 = arith.constant 0 : index
    %281 = vector.load %arg22[%c0_268, %c0_269, %c0_270] : memref<1x1x32xf32, #tpu.memory_space<vmem>>, vector<1x1x32xf32>
    %282 = vector.shape_cast %281 : vector<1x1x32xf32> to vector<1x32xf32>
    %283 = vector.shape_cast %135 : vector<1x32xf32> to vector<1x1x32xf32>
    tpu.vector_store %arg22[%c0_268, %c0_269, %c0_270], %283 {strides = array<i32>} : memref<1x1x32xf32, #tpu.memory_space<vmem>>, vector<1x1x32xf32>,
    %c0_271 = arith.constant 0 : index
    %c0_272 = arith.constant 0 : index
    %c0_273 = arith.constant 0 : index
    %284 = vector.load %arg23[%c0_271, %c0_272, %c0_273] : memref<1x1x32xf32, #tpu.memory_space<vmem>>, vector<1x1x32xf32>
    %285 = vector.shape_cast %284 : vector<1x1x32xf32> to vector<1x32xf32>
    %286 = vector.shape_cast %111 : vector<1x32xf32> to vector<1x1x32xf32>
    tpu.vector_store %arg23[%c0_271, %c0_272, %c0_273], %286 {strides = array<i32>} : memref<1x1x32xf32, #tpu.memory_space<vmem>>, vector<1x1x32xf32>,
    return
  }
  func.func @transform_0(%arg0: i32) -> (i32, i32, i32) {
    %c0_i32 = arith.constant 0 : i32
    %c0_i32_0 = arith.constant 0 : i32
    %c0_i32_1 = arith.constant 0 : i32
    return %arg0, %c0_i32, %c0_i32_0 : i32, i32, i32
  }
  func.func @transform_1(%arg0: i32) -> (i32, i32, i32) {
    %c0_i32 = arith.constant 0 : i32
    %c0_i32_0 = arith.constant 0 : i32
    %c0_i32_1 = arith.constant 0 : i32
    %c0_i32_2 = arith.constant 0 : i32
    return %c0_i32, %c0_i32_0, %c0_i32_1 : i32, i32, i32
  }
  func.func @transform_2(%arg0: i32) -> (i32, i32, i32) {
    %c0_i32 = arith.constant 0 : i32
    %c0_i32_0 = arith.constant 0 : i32
    %c0_i32_1 = arith.constant 0 : i32
    %c0_i32_2 = arith.constant 0 : i32
    return %c0_i32, %c0_i32_0, %c0_i32_1 : i32, i32, i32
  }
  func.func @transform_3(%arg0: i32) -> (i32, i32) {
    %c0_i32 = arith.constant 0 : i32
    %c0_i32_0 = arith.constant 0 : i32
    %c0_i32_1 = arith.constant 0 : i32
    return %c0_i32, %c0_i32_0 : i32, i32
  }
  func.func @transform_4(%arg0: i32) -> (i32, i32, i32) {
    %c0_i32 = arith.constant 0 : i32
    %c0_i32_0 = arith.constant 0 : i32
    %c0_i32_1 = arith.constant 0 : i32
    %c0_i32_2 = arith.constant 0 : i32
    return %c0_i32, %c0_i32_0, %c0_i32_1 : i32, i32, i32
  }
  func.func @transform_5(%arg0: i32) -> (i32, i32, i32) {
    %c0_i32 = arith.constant 0 : i32
    %c0_i32_0 = arith.constant 0 : i32
    %c0_i32_1 = arith.constant 0 : i32
    %c0_i32_2 = arith.constant 0 : i32
    return %c0_i32, %c0_i32_0, %c0_i32_1 : i32, i32, i32
  }
  func.func @transform_6(%arg0: i32) -> (i32, i32) {
    %c0_i32 = arith.constant 0 : i32
    %c0_i32_0 = arith.constant 0 : i32
    %c0_i32_1 = arith.constant 0 : i32
    return %c0_i32, %c0_i32_0 : i32, i32
  }
  func.func @transform_7(%arg0: i32) -> (i32, i32, i32) {
    %c0_i32 = arith.constant 0 : i32
    %c0_i32_0 = arith.constant 0 : i32
    %c0_i32_1 = arith.constant 0 : i32
    %c0_i32_2 = arith.constant 0 : i32
    return %c0_i32, %c0_i32_0, %c0_i32_1 : i32, i32, i32
  }
  func.func @transform_8(%arg0: i32) -> (i32, i32, i32) {
    %c0_i32 = arith.constant 0 : i32
    %c0_i32_0 = arith.constant 0 : i32
    %c0_i32_1 = arith.constant 0 : i32
    %c0_i32_2 = arith.constant 0 : i32
    return %c0_i32, %c0_i32_0, %c0_i32_1 : i32, i32, i32
  }
  func.func @transform_9(%arg0: i32) -> (i32, i32) {
    %c0_i32 = arith.constant 0 : i32
    %c0_i32_0 = arith.constant 0 : i32
    %c0_i32_1 = arith.constant 0 : i32
    return %c0_i32, %c0_i32_0 : i32, i32
  }
  func.func @transform_10(%arg0: i32) -> (i32, i32) {
    %c0_i32 = arith.constant 0 : i32
    %c0_i32_0 = arith.constant 0 : i32
    %c0_i32_1 = arith.constant 0 : i32
    return %c0_i32, %c0_i32_0 : i32, i32
  }
  func.func @transform_11(%arg0: i32) -> (i32, i32, i32) {
    %c0_i32 = arith.constant 0 : i32
    %c0_i32_0 = arith.constant 0 : i32
    %c0_i32_1 = arith.constant 0 : i32
    %c0_i32_2 = arith.constant 0 : i32
    return %c0_i32, %c0_i32_0, %c0_i32_1 : i32, i32, i32
  }
  func.func @transform_12(%arg0: i32) -> (i32, i32, i32) {
    %c0_i32 = arith.constant 0 : i32
    %c0_i32_0 = arith.constant 0 : i32
    %c0_i32_1 = arith.constant 0 : i32
    %c0_i32_2 = arith.constant 0 : i32
    return %c0_i32, %c0_i32_0, %c0_i32_1 : i32, i32, i32
  }
  func.func @transform_13(%arg0: i32) -> (i32, i32, i32) {
    %c0_i32 = arith.constant 0 : i32
    %c0_i32_0 = arith.constant 0 : i32
    %c0_i32_1 = arith.constant 0 : i32
    %c0_i32_2 = arith.constant 0 : i32
    return %c0_i32, %c0_i32_0, %c0_i32_1 : i32, i32, i32
  }
  func.func @transform_14(%arg0: i32) -> (i32, i32, i32) {
    %c0_i32 = arith.constant 0 : i32
    %c0_i32_0 = arith.constant 0 : i32
    %c0_i32_1 = arith.constant 0 : i32
    %c0_i32_2 = arith.constant 0 : i32
    return %c0_i32, %c0_i32_0, %c0_i32_1 : i32, i32, i32
  }
  func.func @transform_15(%arg0: i32) -> (i32, i32, i32) {
    %c0_i32 = arith.constant 0 : i32
    %c0_i32_0 = arith.constant 0 : i32
    %c0_i32_1 = arith.constant 0 : i32
    %c0_i32_2 = arith.constant 0 : i32
    return %c0_i32, %c0_i32_0, %c0_i32_1 : i32, i32, i32
  }
  func.func @transform_16(%arg0: i32) -> (i32, i32) {
    %c0_i32 = arith.constant 0 : i32
    %c0_i32_0 = arith.constant 0 : i32
    %c0_i32_1 = arith.constant 0 : i32
    return %c0_i32, %c0_i32_0 : i32, i32
  }
  func.func @transform_17(%arg0: i32) -> (i32, i32, i32) {
    %c0_i32 = arith.constant 0 : i32
    %c0_i32_0 = arith.constant 0 : i32
    %c0_i32_1 = arith.constant 0 : i32
    %c0_i32_2 = arith.constant 0 : i32
    return %c0_i32, %c0_i32_0, %c0_i32_1 : i32, i32, i32
  }
  func.func @transform_18(%arg0: i32) -> (i32, i32, i32) {
    %c0_i32 = arith.constant 0 : i32
    %c0_i32_0 = arith.constant 0 : i32
    %c0_i32_1 = arith.constant 0 : i32
    %c0_i32_2 = arith.constant 0 : i32
    return %c0_i32, %c0_i32_0, %c0_i32_1 : i32, i32, i32
  }
  func.func @transform_19(%arg0: i32) -> (i32, i32) {
    %c0_i32 = arith.constant 0 : i32
    %c0_i32_0 = arith.constant 0 : i32
    %c0_i32_1 = arith.constant 0 : i32
    return %c0_i32, %c0_i32_0 : i32, i32
  }
  func.func @transform_20(%arg0: i32) -> (i32, i32, i32) {
    %c0_i32 = arith.constant 0 : i32
    %c0_i32_0 = arith.constant 0 : i32
    %c0_i32_1 = arith.constant 0 : i32
    return %arg0, %c0_i32, %c0_i32_0 : i32, i32, i32
  }
  func.func @transform_21(%arg0: i32) -> (i32, i32, i32) {
    %c0_i32 = arith.constant 0 : i32
    %c0_i32_0 = arith.constant 0 : i32
    %c0_i32_1 = arith.constant 0 : i32
    return %arg0, %c0_i32, %c0_i32_0 : i32, i32, i32
  }
  func.func @transform_22(%arg0: i32) -> (i32, i32, i32) {
    %c0_i32 = arith.constant 0 : i32
    %c0_i32_0 = arith.constant 0 : i32
    %c0_i32_1 = arith.constant 0 : i32
    return %arg0, %c0_i32, %c0_i32_0 : i32, i32, i32
  }
}

</mosaic_0001>

<llo_original>
// kernel: latent_space_memae_forward.1
$region0: #{latent_space_memae_forward.1}
  #allocation0 [shape = 'u32[]', space=smem, size = 0x4, offset = 0x4, fixed_abs, tag = 'smem constant byte address 0x4 - core index']
  #allocation1 [shape = 'u32[72,128]{1,0:T(1,128)}', space=vmem, size = 0x9000, scoped, tag = 'internal scratch']
  #allocation2 [shape = 'f32[28,28]{1,0:T(8,128)}', space=vmem, size = 0x4000, scoped, tag = 'scratch operand']
  %s0 = inlined_call_operand.vmem [shape: f32[2,28,28], index: 0, kind: input, shape index: {}]
  %s1 = inlined_call_operand.hbm [shape: f32[3,14,28], index: 1, kind: input, shape index: {}]
  %s2 = inlined_call_operand.vmem [shape: f32[3,28,224], index: 2, kind: input, shape index: {}]
  %s3 = inlined_call_operand.vmem [shape: f32[1,224], index: 3, kind: input, shape index: {}, may-alias: {3,6,16}]
  %s4 = inlined_call_operand.hbm [shape: f32[3,7,14], index: 4, kind: input, shape index: {}]
  %s5 = inlined_call_operand.hbm [shape: f32[3,224,224], index: 5, kind: input, shape index: {}]
  %s6 = inlined_call_operand.vmem [shape: f32[1,224], index: 6, kind: input, shape index: {}, may-alias: {3,6,16}]
  %s7 = inlined_call_operand.vmem [shape: f32[7,1,7], index: 7, kind: input, shape index: {}]
  %s8 = inlined_call_operand.hbm [shape: f32[7,224,16], index: 8, kind: input, shape index: {}]
  %s9 = inlined_call_operand.vmem [shape: f32[1,16], index: 9, kind: input, shape index: {}]
  %s10 = inlined_call_operand.hbm [shape: f32[16,32], index: 10, kind: input, shape index: {}]
  %s11 = inlined_call_operand.hbm [shape: f32[7,32,224], index: 11, kind: input, shape index: {}]
  %s12 = inlined_call_operand.vmem [shape: f32[7,1,224], index: 12, kind: input, shape index: {}]
  %s13 = inlined_call_operand.vmem [shape: f32[7,7,1], index: 13, kind: input, shape index: {}]
  %s14 = inlined_call_operand.hbm [shape: f32[3,14,7], index: 14, kind: input, shape index: {}]
  %s15 = inlined_call_operand.hbm [shape: f32[3,224,224], index: 15, kind: input, shape index: {}]
  %s16 = inlined_call_operand.vmem [shape: f32[1,224], index: 16, kind: input, shape index: {}, may-alias: {3,6,16}]
  %s17 = inlined_call_operand.hbm [shape: f32[3,28,14], index: 17, kind: input, shape index: {}]
  %s18 = inlined_call_operand.hbm [shape: f32[3,224,28], index: 18, kind: input, shape index: {}]
  %s19 = inlined_call_operand.vmem [shape: f32[1,28], index: 19, kind: input, shape index: {}]
  %s20 = inlined_call_operand.vmem [shape: f32[2,28,28], index: 20, kind: output, shape index: {0}]
  %s21 = inlined_call_operand.hbm [shape: f32[2,1,32], index: 21, kind: output, shape index: {1}]
  %s22 = inlined_call_operand.hbm [shape: f32[2,1,32], index: 22, kind: output, shape index: {2}]
  %23 = xla_tuple %s20, %s21, %s22
  %s24 = sld [smem:[#allocation0]]
  $region169: #{latent_space_memae_forward.1} parent=0
    _
  %s26 = ssub.s32 1, %s24
  %s27 = scalar_select 0, %s26, %s24
  $region1: #{latent_space_memae_forward.1} parent=0
    #allocation3 [shape = 'u8[24576]{0}', space=vmem, size = 0x6000, scoped, tag = 'input window, operand 1, single buffered']
    #allocation4 [shape = 's32[2]{0}', space=sflag, size = 0x8, scoped, tag = 'scoped memory for latent_space_memae_forward.1']
    #allocation5 [shape = 's32[2]{0}', space=sflag, size = 0x8, scoped, tag = 'scoped memory for latent_space_memae_forward.1']
    #allocation6 [shape = 'u8[12288]{0}', space=vmem, size = 0x3000, scoped, tag = 'input window, operand 4, single buffered']
    #allocation7 [shape = 's32[1]{0}', space=sflag, size = 0x4, scoped, tag = 'scoped memory for latent_space_memae_forward.1']
    #allocation8 [shape = 'u8[688128]{0}', space=vmem, size = 0xa8000, scoped, tag = 'input window, operand 5, single buffered']
    #allocation9 [shape = 'u8[802816]{0}', space=vmem, size = 0xc4000, scoped, tag = 'input window, operand 8, single buffered']
    #allocation10 [shape = 's32[1]{0}', space=sflag, size = 0x4, scoped, tag = 'scoped memory for latent_space_memae_forward.1']
    #allocation11 [shape = 'u8[8192]{0}', space=vmem, size = 0x2000, scoped, tag = 'input window, operand 10, single buffered']
    #allocation12 [shape = 'u8[229376]{0}', space=vmem, size = 0x38000, scoped, tag = 'input window, operand 11, single buffered']
    #allocation13 [shape = 's32[1]{0}', space=sflag, size = 0x4, scoped, tag = 'scoped memory for latent_space_memae_forward.1']
    #allocation14 [shape = 'u8[24576]{0}', space=vmem, size = 0x6000, scoped, tag = 'input window, operand 14, single buffered']
    #allocation15 [shape = 'u8[688128]{0}', space=vmem, size = 0xa8000, scoped, tag = 'input window, operand 15, single buffered']
    #allocation16 [shape = 's32[1]{0}', space=sflag, size = 0x4, scoped, tag = 'scoped memory for latent_space_memae_forward.1']
    #allocation17 [shape = 'u8[49152]{0}', space=vmem, size = 0xc000, scoped, tag = 'input window, operand 17, single buffered']
    #allocation18 [shape = 'u8[344064]{0}', space=vmem, size = 0x54000, scoped, tag = 'input window, operand 18, single buffered']
    #allocation19 [shape = 's32[1]{0}', space=sflag, size = 0x4, scoped, tag = 'scoped memory for latent_space_memae_forward.1']
    #allocation20 [shape = 'u8[1024]{0}', space=vmem, size = 0x400, scoped, tag = 'output window, operand 1']
    #allocation21 [shape = 'u8[1024]{0}', space=vmem, size = 0x400, scoped, tag = 'output window, operand 2']
    #allocation22 [shape = 's32[2]{0}', space=sflag, size = 0x8, scoped, tag = 'scoped memory for latent_space_memae_forward.1']
    %28 = vsyncpa [#allocation4], 0
    %29 = vsyncpa [#allocation7], 0
    %30 = vsyncpa [#allocation10], 0
    %31 = vsyncpa [#allocation13], 0
    %32 = vsyncpa [#allocation16], 0
    %33 = vsyncpa [#allocation19], 0
    %34 = vsyncpa [#allocation5], 0
    %s35 = scalar_lea.sflag [#allocation5], 1
    %36 = vsyncpa %s35, 0
    %37 = vsyncpa [#allocation22], 0
    %s38 = scalar_lea.sflag [#allocation22], 1
    %39 = vsyncpa %s38, 0
    loop: start=0, step=1, limit=4
    $region2: #{latent_space_memae_forward.1} parent=1 // loop_pre_header
      _
    $region3: #{latent_space_memae_forward.1} parent=1 // loop_header
      %s41 = sphi 0, %s45
      %p42 = scmp.ge.s32.totalorder %s41, 4
      %s51 = sphi 0, %s53
      %s54 = sphi 0, %s51
      %s55 = sphi 0, %s54
      %s71 = sphi 0, %s55
      %s75 = sphi 0, %s75
      %s77 = sphi 0, %s75
      %s78 = sphi 0, %s77
      %s92 = sphi 0, %s78
      %s96 = sphi 0, %s96
      %s98 = sphi 0, %s96
      %s99 = sphi 0, %s98
      %s113 = sphi 0, %s99
      %s117 = sphi 0, %s117
      %s119 = sphi 0, %s117
      %s120 = sphi 0, %s119
      %s134 = sphi 0, %s120
      %s138 = sphi 0, %s138
      %s140 = sphi 0, %s138
      %s141 = sphi 0, %s140
      %s155 = sphi 0, %s141
      %s159 = sphi 0, %s159
      %s161 = sphi 0, %s159
      %s162 = sphi 0, %s161
      %s176 = sphi 0, %s162
      %s180 = sphi 0, %s180
      %s182 = sphi 0, %s180
      %s183 = sphi 0, %s182
      %s197 = sphi 0, %s183
      %s201 = sphi 0, %s201
      %s203 = sphi 0, %s201
      %s204 = sphi 0, %s203
      %s218 = sphi 0, %s204
      %s222 = sphi 0, %s222
      %s224 = sphi 0, %s222
      %s225 = sphi 0, %s224
      %s239 = sphi 0, %s225
      %s243 = sphi 0, %s243
      %s245 = sphi 0, %s243
      %s246 = sphi 0, %s245
      %s260 = sphi 0, %s246
      %s264 = sphi 0, %s264
      %s266 = sphi 0, %s264
      %s267 = sphi 0, %s266
      %s281 = sphi 0, %s267
      %s285 = sphi 0, %s285
      %s287 = sphi 0, %s285
      %s288 = sphi 0, %s287
      %s302 = sphi 0, %s288
      %s306 = sphi 0, %s306
      %s308 = sphi 0, %s306
      %s309 = sphi 0, %s308
      %s323 = sphi 0, %s309
      %s327 = sphi 0, %s327
      %s329 = sphi 0, %s327
      %s330 = sphi 0, %s329
      %s344 = sphi 0, %s330
      %s348 = sphi 0, %s348
      %s350 = sphi 0, %s348
      %s351 = sphi 0, %s350
      %s365 = sphi 0, %s351
      %s369 = sphi 0, %s369
      %s371 = sphi 0, %s369
      %s372 = sphi 0, %s371
      %s386 = sphi 0, %s372
      %s390 = sphi 0, %s390
      %s392 = sphi 0, %s390
      %s393 = sphi 0, %s392
      %s407 = sphi 0, %s393
      %s411 = sphi 0, %s411
      %s413 = sphi 0, %s411
      %s414 = sphi 0, %s413
      %s428 = sphi 0, %s414
      %s432 = sphi 0, %s432
      %s434 = sphi 0, %s432
      %s435 = sphi 0, %s434
      %s449 = sphi 0, %s435
      %s453 = sphi 0, %s453
      %s455 = sphi 0, %s453
      %s456 = sphi 0, %s455
      %s470 = sphi 0, %s456
      %s476 = sphi 0, %s478
      %s479 = sphi 0, %s476
      %s480 = sphi 0, %s479
      %s496 = sphi 0, %s480
      %s502 = sphi 0, %s504
      %s505 = sphi 0, %s502
      %s506 = sphi 0, %s505
      %s522 = sphi 0, %s506
      %s528 = sphi 0, %s530
      %s531 = sphi 0, %s528
      %s532 = sphi 0, %s531
      %s548 = sphi 0, %s532
    $region4: #{latent_space_memae_forward.1} parent=1 // loop_header_branch
      %44 = sbr.rel (%p42) target = $region8
    $region5: #{latent_space_memae_forward.1} parent=1 // loop_body
      %s46 = ssub.s32 %s41, 1
      %s47 = ssub.s32 %s41, 2
      %s48 = sadd.s32 %s41, 1
      %s49 = ssub.s32 %s41, %s48
      %p50 = scmp.eq.s32.totalorder %s49, 0
      %s52 = sadd.s32 %s51, 1
      %s53 = scalar_select %p50, %s51, %s52
      %p56 = pneg %p50
      %p57 = scmp.eq.s32.totalorder %s41, 1
      %p58 = por %p56, %p57
      %p59 = scmp.ne.s32.totalorder %s51, %s54
      %p60 = scmp.eq.s32.totalorder %s41, 0
      %p61 = por %p59, %p60
      %p62 = scmp.ne.s32.totalorder %s51, %s54
      %p63 = scmp.eq.s32.totalorder %s46, 1
      %p64 = por %p62, %p63
      %p65 = scmp.ne.s32.totalorder %s54, %s55
      %p66 = scmp.eq.s32.totalorder %s46, 0
      %p67 = por %p65, %p66
      %p68 = scmp.ne.s32.totalorder %s54, %s55
      %p69 = scmp.eq.s32.totalorder %s47, 1
      %p70 = por %p68, %p69
      %p72 = scmp.ne.s32.totalorder %s55, %s71
      %p73 = scmp.eq.s32.totalorder %s47, 0
      %p74 = por %p72, %p73
      %s76 = sadd.s32 %s75, 1
      %p79 = scmp.eq.s32.totalorder %s41, 1
      %p80 = scmp.ne.s32.totalorder %s75, %s77
      %p81 = scmp.eq.s32.totalorder %s41, 0
      %p82 = por %p80, %p81
      %p83 = scmp.ne.s32.totalorder %s75, %s77
      %p84 = scmp.eq.s32.totalorder %s46, 1
      %p85 = por %p83, %p84
      %p86 = scmp.ne.s32.totalorder %s77, %s78
      %p87 = scmp.eq.s32.totalorder %s46, 0
      %p88 = por %p86, %p87
      %p89 = scmp.ne.s32.totalorder %s77, %s78
      %p90 = scmp.eq.s32.totalorder %s47, 1
      %p91 = por %p89, %p90
      %p93 = scmp.ne.s32.totalorder %s78, %s92
      %p94 = scmp.eq.s32.totalorder %s47, 0
      %p95 = por %p93, %p94
      %s97 = sadd.s32 %s96, 1
      %p100 = scmp.eq.s32.totalorder %s41, 1
      %p101 = scmp.ne.s32.totalorder %s96, %s98
      %p102 = scmp.eq.s32.totalorder %s41, 0
      %p103 = por %p101, %p102
      %p104 = scmp.ne.s32.totalorder %s96, %s98
      %p105 = scmp.eq.s32.totalorder %s46, 1
      %p106 = por %p104, %p105
      %p107 = scmp.ne.s32.totalorder %s98, %s99
      %p108 = scmp.eq.s32.totalorder %s46, 0
      %p109 = por %p107, %p108
      %p110 = scmp.ne.s32.totalorder %s98, %s99
      %p111 = scmp.eq.s32.totalorder %s47, 1
      %p112 = por %p110, %p111
      %p114 = scmp.ne.s32.totalorder %s99, %s113
      %p115 = scmp.eq.s32.totalorder %s47, 0
      %p116 = por %p114, %p115
      %s118 = sadd.s32 %s117, 1
      %p121 = scmp.eq.s32.totalorder %s41, 1
      %p122 = scmp.ne.s32.totalorder %s117, %s119
      %p123 = scmp.eq.s32.totalorder %s41, 0
      %p124 = por %p122, %p123
      %p125 = scmp.ne.s32.totalorder %s117, %s119
      %p126 = scmp.eq.s32.totalorder %s46, 1
      %p127 = por %p125, %p126
      %p128 = scmp.ne.s32.totalorder %s119, %s120
      %p129 = scmp.eq.s32.totalorder %s46, 0
      %p130 = por %p128, %p129
      %p131 = scmp.ne.s32.totalorder %s119, %s120
      %p132 = scmp.eq.s32.totalorder %s47, 1
      %p133 = por %p131, %p132
      %p135 = scmp.ne.s32.totalorder %s120, %s134
      %p136 = scmp.eq.s32.totalorder %s47, 0
      %p137 = por %p135, %p136
      %s139 = sadd.s32 %s138, 1
      %p142 = scmp.eq.s32.totalorder %s41, 1
      %p143 = scmp.ne.s32.totalorder %s138, %s140
      %p144 = scmp.eq.s32.totalorder %s41, 0
      %p145 = por %p143, %p144
      %p146 = scmp.ne.s32.totalorder %s138, %s140
      %p147 = scmp.eq.s32.totalorder %s46, 1
      %p148 = por %p146, %p147
      %p149 = scmp.ne.s32.totalorder %s140, %s141
      %p150 = scmp.eq.s32.totalorder %s46, 0
      %p151 = por %p149, %p150
      %p152 = scmp.ne.s32.totalorder %s140, %s141
      %p153 = scmp.eq.s32.totalorder %s47, 1
      %p154 = por %p152, %p153
      %p156 = scmp.ne.s32.totalorder %s141, %s155
      %p157 = scmp.eq.s32.totalorder %s47, 0
      %p158 = por %p156, %p157
      %s160 = sadd.s32 %s159, 1
      %p163 = scmp.eq.s32.totalorder %s41, 1
      %p164 = scmp.ne.s32.totalorder %s159, %s161
      %p165 = scmp.eq.s32.totalorder %s41, 0
      %p166 = por %p164, %p165
      %p167 = scmp.ne.s32.totalorder %s159, %s161
      %p168 = scmp.eq.s32.totalorder %s46, 1
      %p169 = por %p167, %p168
      %p170 = scmp.ne.s32.totalorder %s161, %s162
      %p171 = scmp.eq.s32.totalorder %s46, 0
      %p172 = por %p170, %p171
      %p173 = scmp.ne.s32.totalorder %s161, %s162
      %p174 = scmp.eq.s32.totalorder %s47, 1
      %p175 = por %p173, %p174
      %p177 = scmp.ne.s32.totalorder %s162, %s176
      %p178 = scmp.eq.s32.totalorder %s47, 0
      %p179 = por %p177, %p178
      %s181 = sadd.s32 %s180, 1
      %p184 = scmp.eq.s32.totalorder %s41, 1
      %p185 = scmp.ne.s32.totalorder %s180, %s182
      %p186 = scmp.eq.s32.totalorder %s41, 0
      %p187 = por %p185, %p186
      %p188 = scmp.ne.s32.totalorder %s180, %s182
      %p189 = scmp.eq.s32.totalorder %s46, 1
      %p190 = por %p188, %p189
      %p191 = scmp.ne.s32.totalorder %s182, %s183
      %p192 = scmp.eq.s32.totalorder %s46, 0
      %p193 = por %p191, %p192
      %p194 = scmp.ne.s32.totalorder %s182, %s183
      %p195 = scmp.eq.s32.totalorder %s47, 1
      %p196 = por %p194, %p195
      %p198 = scmp.ne.s32.totalorder %s183, %s197
      %p199 = scmp.eq.s32.totalorder %s47, 0
      %p200 = por %p198, %p199
      %s202 = sadd.s32 %s201, 1
      %p205 = scmp.eq.s32.totalorder %s41, 1
      %p206 = scmp.ne.s32.totalorder %s201, %s203
      %p207 = scmp.eq.s32.totalorder %s41, 0
      %p208 = por %p206, %p207
      %p209 = scmp.ne.s32.totalorder %s201, %s203
      %p210 = scmp.eq.s32.totalorder %s46, 1
      %p211 = por %p209, %p210
      %p212 = scmp.ne.s32.totalorder %s203, %s204
      %p213 = scmp.eq.s32.totalorder %s46, 0
      %p214 = por %p212, %p213
      %p215 = scmp.ne.s32.totalorder %s203, %s204
      %p216 = scmp.eq.s32.totalorder %s47, 1
      %p217 = por %p215, %p216
      %p219 = scmp.ne.s32.totalorder %s204, %s218
      %p220 = scmp.eq.s32.totalorder %s47, 0
      %p221 = por %p219, %p220
      %s223 = sadd.s32 %s222, 1
      %p226 = scmp.eq.s32.totalorder %s41, 1
      %p227 = scmp.ne.s32.totalorder %s222, %s224
      %p228 = scmp.eq.s32.totalorder %s41, 0
      %p229 = por %p227, %p228
      %p230 = scmp.ne.s32.totalorder %s222, %s224
      %p231 = scmp.eq.s32.totalorder %s46, 1
      %p232 = por %p230, %p231
      %p233 = scmp.ne.s32.totalorder %s224, %s225
      %p234 = scmp.eq.s32.totalorder %s46, 0
      %p235 = por %p233, %p234
      %p236 = scmp.ne.s32.totalorder %s224, %s225
      %p237 = scmp.eq.s32.totalorder %s47, 1
      %p238 = por %p236, %p237
      %p240 = scmp.ne.s32.totalorder %s225, %s239
      %p241 = scmp.eq.s32.totalorder %s47, 0
      %p242 = por %p240, %p241
      %s244 = sadd.s32 %s243, 1
      %p247 = scmp.eq.s32.totalorder %s41, 1
      %p248 = scmp.ne.s32.totalorder %s243, %s245
      %p249 = scmp.eq.s32.totalorder %s41, 0
      %p250 = por %p248, %p249
      %p251 = scmp.ne.s32.totalorder %s243, %s245
      %p252 = scmp.eq.s32.totalorder %s46, 1
      %p253 = por %p251, %p252
      %p254 = scmp.ne.s32.totalorder %s245, %s246
      %p255 = scmp.eq.s32.totalorder %s46, 0
      %p256 = por %p254, %p255
      %p257 = scmp.ne.s32.totalorder %s245, %s246
      %p258 = scmp.eq.s32.totalorder %s47, 1
      %p259 = por %p257, %p258
      %p261 = scmp.ne.s32.totalorder %s246, %s260
      %p262 = scmp.eq.s32.totalorder %s47, 0
      %p263 = por %p261, %p262
      %s265 = sadd.s32 %s264, 1
      %p268 = scmp.eq.s32.totalorder %s41, 1
      %p269 = scmp.ne.s32.totalorder %s264, %s266
      %p270 = scmp.eq.s32.totalorder %s41, 0
      %p271 = por %p269, %p270
      %p272 = scmp.ne.s32.totalorder %s264, %s266
      %p273 = scmp.eq.s32.totalorder %s46, 1
      %p274 = por %p272, %p273
      %p275 = scmp.ne.s32.totalorder %s266, %s267
      %p276 = scmp.eq.s32.totalorder %s46, 0
      %p277 = por %p275, %p276
      %p278 = scmp.ne.s32.totalorder %s266, %s267
      %p279 = scmp.eq.s32.totalorder %s47, 1
      %p280 = por %p278, %p279
      %p282 = scmp.ne.s32.totalorder %s267, %s281
      %p283 = scmp.eq.s32.totalorder %s47, 0
      %p284 = por %p282, %p283
      %s286 = sadd.s32 %s285, 1
      %p289 = scmp.eq.s32.totalorder %s41, 1
      %p290 = scmp.ne.s32.totalorder %s285, %s287
      %p291 = scmp.eq.s32.totalorder %s41, 0
      %p292 = por %p290, %p291
      %p293 = scmp.ne.s32.totalorder %s285, %s287
      %p294 = scmp.eq.s32.totalorder %s46, 1
      %p295 = por %p293, %p294
      %p296 = scmp.ne.s32.totalorder %s287, %s288
      %p297 = scmp.eq.s32.totalorder %s46, 0
      %p298 = por %p296, %p297
      %p299 = scmp.ne.s32.totalorder %s287, %s288
      %p300 = scmp.eq.s32.totalorder %s47, 1
      %p301 = por %p299, %p300
      %p303 = scmp.ne.s32.totalorder %s288, %s302
      %p304 = scmp.eq.s32.totalorder %s47, 0
      %p305 = por %p303, %p304
      %s307 = sadd.s32 %s306, 1
      %p310 = scmp.eq.s32.totalorder %s41, 1
      %p311 = scmp.ne.s32.totalorder %s306, %s308
      %p312 = scmp.eq.s32.totalorder %s41, 0
      %p313 = por %p311, %p312
      %p314 = scmp.ne.s32.totalorder %s306, %s308
      %p315 = scmp.eq.s32.totalorder %s46, 1
      %p316 = por %p314, %p315
      %p317 = scmp.ne.s32.totalorder %s308, %s309
      %p318 = scmp.eq.s32.totalorder %s46, 0
      %p319 = por %p317, %p318
      %p320 = scmp.ne.s32.totalorder %s308, %s309
      %p321 = scmp.eq.s32.totalorder %s47, 1
      %p322 = por %p320, %p321
      %p324 = scmp.ne.s32.totalorder %s309, %s323
      %p325 = scmp.eq.s32.totalorder %s47, 0
      %p326 = por %p324, %p325
      %s328 = sadd.s32 %s327, 1
      %p331 = scmp.eq.s32.totalorder %s41, 1
      %p332 = scmp.ne.s32.totalorder %s327, %s329
      %p333 = scmp.eq.s32.totalorder %s41, 0
      %p334 = por %p332, %p333
      %p335 = scmp.ne.s32.totalorder %s327, %s329
      %p336 = scmp.eq.s32.totalorder %s46, 1
      %p337 = por %p335, %p336
      %p338 = scmp.ne.s32.totalorder %s329, %s330
      %p339 = scmp.eq.s32.totalorder %s46, 0
      %p340 = por %p338, %p339
      %p341 = scmp.ne.s32.totalorder %s329, %s330
      %p342 = scmp.eq.s32.totalorder %s47, 1
      %p343 = por %p341, %p342
      %p345 = scmp.ne.s32.totalorder %s330, %s344
      %p346 = scmp.eq.s32.totalorder %s47, 0
      %p347 = por %p345, %p346
      %s349 = sadd.s32 %s348, 1
      %p352 = scmp.eq.s32.totalorder %s41, 1
      %p353 = scmp.ne.s32.totalorder %s348, %s350
      %p354 = scmp.eq.s32.totalorder %s41, 0
      %p355 = por %p353, %p354
      %p356 = scmp.ne.s32.totalorder %s348, %s350
      %p357 = scmp.eq.s32.totalorder %s46, 1
      %p358 = por %p356, %p357
      %p359 = scmp.ne.s32.totalorder %s350, %s351
      %p360 = scmp.eq.s32.totalorder %s46, 0
      %p361 = por %p359, %p360
      %p362 = scmp.ne.s32.totalorder %s350, %s351
      %p363 = scmp.eq.s32.totalorder %s47, 1
      %p364 = por %p362, %p363
      %p366 = scmp.ne.s32.totalorder %s351, %s365
      %p367 = scmp.eq.s32.totalorder %s47, 0
      %p368 = por %p366, %p367
      %s370 = sadd.s32 %s369, 1
      %p373 = scmp.eq.s32.totalorder %s41, 1
      %p374 = scmp.ne.s32.totalorder %s369, %s371
      %p375 = scmp.eq.s32.totalorder %s41, 0
      %p376 = por %p374, %p375
      %p377 = scmp.ne.s32.totalorder %s369, %s371
      %p378 = scmp.eq.s32.totalorder %s46, 1
      %p379 = por %p377, %p378
      %p380 = scmp.ne.s32.totalorder %s371, %s372
      %p381 = scmp.eq.s32.totalorder %s46, 0
      %p382 = por %p380, %p381
      %p383 = scmp.ne.s32.totalorder %s371, %s372
      %p384 = scmp.eq.s32.totalorder %s47, 1
      %p385 = por %p383, %p384
      %p387 = scmp.ne.s32.totalorder %s372, %s386
      %p388 = scmp.eq.s32.totalorder %s47, 0
      %p389 = por %p387, %p388
      %s391 = sadd.s32 %s390, 1
      %p394 = scmp.eq.s32.totalorder %s41, 1
      %p395 = scmp.ne.s32.totalorder %s390, %s392
      %p396 = scmp.eq.s32.totalorder %s41, 0
      %p397 = por %p395, %p396
      %p398 = scmp.ne.s32.totalorder %s390, %s392
      %p399 = scmp.eq.s32.totalorder %s46, 1
      %p400 = por %p398, %p399
      %p401 = scmp.ne.s32.totalorder %s392, %s393
      %p402 = scmp.eq.s32.totalorder %s46, 0
      %p403 = por %p401, %p402
      %p404 = scmp.ne.s32.totalorder %s392, %s393
      %p405 = scmp.eq.s32.totalorder %s47, 1
      %p406 = por %p404, %p405
      %p408 = scmp.ne.s32.totalorder %s393, %s407
      %p409 = scmp.eq.s32.totalorder %s47, 0
      %p410 = por %p408, %p409
      %s412 = sadd.s32 %s411, 1
      %p415 = scmp.eq.s32.totalorder %s41, 1
      %p416 = scmp.ne.s32.totalorder %s411, %s413
      %p417 = scmp.eq.s32.totalorder %s41, 0
      %p418 = por %p416, %p417
      %p419 = scmp.ne.s32.totalorder %s411, %s413
      %p420 = scmp.eq.s32.totalorder %s46, 1
      %p421 = por %p419, %p420
      %p422 = scmp.ne.s32.totalorder %s413, %s414
      %p423 = scmp.eq.s32.totalorder %s46, 0
      %p424 = por %p422, %p423
      %p425 = scmp.ne.s32.totalorder %s413, %s414
      %p426 = scmp.eq.s32.totalorder %s47, 1
      %p427 = por %p425, %p426
      %p429 = scmp.ne.s32.totalorder %s414, %s428
      %p430 = scmp.eq.s32.totalorder %s47, 0
      %p431 = por %p429, %p430
      %s433 = sadd.s32 %s432, 1
      %p436 = scmp.eq.s32.totalorder %s41, 1
      %p437 = scmp.ne.s32.totalorder %s432, %s434
      %p438 = scmp.eq.s32.totalorder %s41, 0
      %p439 = por %p437, %p438
      %p440 = scmp.ne.s32.totalorder %s432, %s434
      %p441 = scmp.eq.s32.totalorder %s46, 1
      %p442 = por %p440, %p441
      %p443 = scmp.ne.s32.totalorder %s434, %s435
      %p444 = scmp.eq.s32.totalorder %s46, 0
      %p445 = por %p443, %p444
      %p446 = scmp.ne.s32.totalorder %s434, %s435
      %p447 = scmp.eq.s32.totalorder %s47, 1
      %p448 = por %p446, %p447
      %p450 = scmp.ne.s32.totalorder %s435, %s449
      %p451 = scmp.eq.s32.totalorder %s47, 0
      %p452 = por %p450, %p451
      %s454 = sadd.s32 %s453, 1
      %p457 = scmp.eq.s32.totalorder %s41, 1
      %p458 = scmp.ne.s32.totalorder %s453, %s455
      %p459 = scmp.eq.s32.totalorder %s41, 0
      %p460 = por %p458, %p459
      %p461 = scmp.ne.s32.totalorder %s453, %s455
      %p462 = scmp.eq.s32.totalorder %s46, 1
      %p463 = por %p461, %p462
      %p464 = scmp.ne.s32.totalorder %s455, %s456
      %p465 = scmp.eq.s32.totalorder %s46, 0
      %p466 = por %p464, %p465
      %p467 = scmp.ne.s32.totalorder %s455, %s456
      %p468 = scmp.eq.s32.totalorder %s47, 1
      %p469 = por %p467, %p468
      %p471 = scmp.ne.s32.totalorder %s456, %s470
      %p472 = scmp.eq.s32.totalorder %s47, 0
      %p473 = por %p471, %p472
      %s474 = ssub.s32 %s41, %s48
      %p475 = scmp.eq.s32.totalorder %s474, 0
      %s477 = sadd.s32 %s476, 1
      %s478 = scalar_select %p475, %s476, %s477
      %p481 = pneg %p475
      %p482 = scmp.eq.s32.totalorder %s41, 1
      %p483 = por %p481, %p482
      %p484 = scmp.ne.s32.totalorder %s476, %s479
      %p485 = scmp.eq.s32.totalorder %s41, 0
      %p486 = por %p484, %p485
      %p487 = scmp.ne.s32.totalorder %s476, %s479
      %p488 = scmp.eq.s32.totalorder %s46, 1
      %p489 = por %p487, %p488
      %p490 = scmp.ne.s32.totalorder %s479, %s480
      %p491 = scmp.eq.s32.totalorder %s46, 0
      %p492 = por %p490, %p491
      %p493 = scmp.ne.s32.totalorder %s479, %s480
      %p494 = scmp.eq.s32.totalorder %s47, 1
      %p495 = por %p493, %p494
      %p497 = scmp.ne.s32.totalorder %s480, %s496
      %p498 = scmp.eq.s32.totalorder %s47, 0
      %p499 = por %p497, %p498
      %s500 = ssub.s32 %s41, %s48
      %p501 = scmp.eq.s32.totalorder %s500, 0
      %s503 = sadd.s32 %s502, 1
      %s504 = scalar_select %p501, %s502, %s503
      %p507 = pneg %p501
      %p508 = scmp.eq.s32.totalorder %s41, 1
      %p509 = por %p507, %p508
      %p510 = scmp.ne.s32.totalorder %s502, %s505
      %p511 = scmp.eq.s32.totalorder %s41, 0
      %p512 = por %p510, %p511
      %p513 = scmp.ne.s32.totalorder %s502, %s505
      %p514 = scmp.eq.s32.totalorder %s46, 1
      %p515 = por %p513, %p514
      %p516 = scmp.ne.s32.totalorder %s505, %s506
      %p517 = scmp.eq.s32.totalorder %s46, 0
      %p518 = por %p516, %p517
      %p519 = scmp.ne.s32.totalorder %s505, %s506
      %p520 = scmp.eq.s32.totalorder %s47, 1
      %p521 = por %p519, %p520
      %p523 = scmp.ne.s32.totalorder %s506, %s522
      %p524 = scmp.eq.s32.totalorder %s47, 0
      %p525 = por %p523, %p524
      %s526 = ssub.s32 %s41, %s48
      %p527 = scmp.eq.s32.totalorder %s526, 0
      %s529 = sadd.s32 %s528, 1
      %s530 = scalar_select %p527, %s528, %s529
      %p533 = pneg %p527
      %p534 = scmp.eq.s32.totalorder %s41, 1
      %p535 = por %p533, %p534
      %p536 = scmp.ne.s32.totalorder %s528, %s531
      %p537 = scmp.eq.s32.totalorder %s41, 0
      %p538 = por %p536, %p537
      %p539 = scmp.ne.s32.totalorder %s528, %s531
      %p540 = scmp.eq.s32.totalorder %s46, 1
      %p541 = por %p539, %p540
      %p542 = scmp.ne.s32.totalorder %s531, %s532
      %p543 = scmp.eq.s32.totalorder %s46, 0
      %p544 = por %p542, %p543
      %p545 = scmp.ne.s32.totalorder %s531, %s532
      %p546 = scmp.eq.s32.totalorder %s47, 1
      %p547 = por %p545, %p546
      %p549 = scmp.ne.s32.totalorder %s532, %s548
      %p550 = scmp.eq.s32.totalorder %s47, 0
      %p551 = por %p549, %p550
      %p552 = scmp.le.s32.totalorder 1, %s41
      %p553 = scmp.lt.s32.totalorder %s41, 3
      %p554 = pnand %p552, %p553
      %p555 = pneg %p554
      // Predicated region
      $region9: #{latent_space_memae_forward.1} parent=5 // pred_check
        _
      $region10: #{latent_space_memae_forward.1} parent=5 // pred_check_branch
        %557 = sbr.rel (%p554) target = $region12
      $region11: #{latent_space_memae_forward.1} parent=5 // pred_region
        %s558 = ssub.s32 %s41, 1
        // Predicated region
        $region13: #{latent_space_memae_forward.1} parent=11 // pred_check
          %p559 = pneg %p88
        $region14: #{latent_space_memae_forward.1} parent=11 // pred_check_branch
          %561 = sbr.rel (%p559) target = $region16
        $region15: #{latent_space_memae_forward.1} parent=11 // pred_region
          %563 = vsyncadd [#allocation4], 0
          %s564 = sshll.u32 %s1, 4
          %s565 = int_to_ptr.hbm [resolvable:$true] %s564
          %s566 = sshll.u32 [#allocation3], 4
          %s567 = int_to_ptr.vmem [resolvable:$true] %s566
          %572 = dma.hbm_to_vmem [thread:$0]  %s565, 768, %s567, [#allocation4], 128, 128, 8
        $region16: #{latent_space_memae_forward.1} parent=11 // pred_fallthru
          _
        // Predicated region
        $region17: #{latent_space_memae_forward.1} parent=11 // pred_check
          %p573 = pneg %p109
        $region18: #{latent_space_memae_forward.1} parent=11 // pred_check_branch
          %575 = sbr.rel (%p573) target = $region20
        $region19: #{latent_space_memae_forward.1} parent=11 // pred_region
          _
        $region20: #{latent_space_memae_forward.1} parent=11 // pred_fallthru
          _
        // Predicated region
        $region21: #{latent_space_memae_forward.1} parent=11 // pred_check
          %p576 = pneg %p130
        $region22: #{latent_space_memae_forward.1} parent=11 // pred_check_branch
          %578 = sbr.rel (%p576) target = $region24
        $region23: #{latent_space_memae_forward.1} parent=11 // pred_region
          _
        $region24: #{latent_space_memae_forward.1} parent=11 // pred_fallthru
          _
        // Predicated region
        $region25: #{latent_space_memae_forward.1} parent=11 // pred_check
          %p579 = pneg %p151
        $region26: #{latent_space_memae_forward.1} parent=11 // pred_check_branch
          %581 = sbr.rel (%p579) target = $region28
        $region27: #{latent_space_memae_forward.1} parent=11 // pred_region
          %583 = vsyncadd [#allocation7], 0
          %s584 = sshll.u32 %s4, 4
          %s585 = int_to_ptr.hbm [resolvable:$true] %s584
          %s586 = sshll.u32 [#allocation6], 4
          %s587 = int_to_ptr.vmem [resolvable:$true] %s586
          %592 = dma.hbm_to_vmem [thread:$0]  %s585, 384, %s587, [#allocation7], 128, 128, 8
        $region28: #{latent_space_memae_forward.1} parent=11 // pred_fallthru
          _
        // Predicated region
        $region29: #{latent_space_memae_forward.1} parent=11 // pred_check
          %p593 = pneg %p172
        $region30: #{latent_space_memae_forward.1} parent=11 // pred_check_branch
          %595 = sbr.rel (%p593) target = $region32
        $region31: #{latent_space_memae_forward.1} parent=11 // pred_region
          %597 = vsyncadd [#allocation7], 0
          %s598 = sshll.u32 %s5, 4
          %s599 = int_to_ptr.hbm [resolvable:$true] %s598
          %s600 = sshll.u32 [#allocation8], 4
          %s601 = int_to_ptr.vmem [resolvable:$true] %s600
          %606 = dma.hbm_to_vmem [thread:$0]  %s599, 21504, %s601, [#allocation7], 256, 256, 16
        $region32: #{latent_space_memae_forward.1} parent=11 // pred_fallthru
          _
        // Predicated region
        $region33: #{latent_space_memae_forward.1} parent=11 // pred_check
          %p607 = pneg %p193
        $region34: #{latent_space_memae_forward.1} parent=11 // pred_check_branch
          %609 = sbr.rel (%p607) target = $region36
        $region35: #{latent_space_memae_forward.1} parent=11 // pred_region
          _
        $region36: #{latent_space_memae_forward.1} parent=11 // pred_fallthru
          _
        // Predicated region
        $region37: #{latent_space_memae_forward.1} parent=11 // pred_check
          %p610 = pneg %p214
        $region38: #{latent_space_memae_forward.1} parent=11 // pred_check_branch
          %612 = sbr.rel (%p610) target = $region40
        $region39: #{latent_space_memae_forward.1} parent=11 // pred_region
          _
        $region40: #{latent_space_memae_forward.1} parent=11 // pred_fallthru
          _
        // Predicated region
        $region41: #{latent_space_memae_forward.1} parent=11 // pred_check
          %p613 = pneg %p235
        $region42: #{latent_space_memae_forward.1} parent=11 // pred_check_branch
          %615 = sbr.rel (%p613) target = $region44
        $region43: #{latent_space_memae_forward.1} parent=11 // pred_region
          %617 = vsyncadd [#allocation10], 0
          %s618 = sshll.u32 %s8, 4
          %s619 = int_to_ptr.hbm [resolvable:$true] %s618
          %s620 = sshll.u32 [#allocation9], 4
          %s621 = int_to_ptr.vmem [resolvable:$true] %s620
          %626 = dma.hbm_to_vmem [thread:$0]  %s619, 25088, %s621, [#allocation10], 128, 128, 8
        $region44: #{latent_space_memae_forward.1} parent=11 // pred_fallthru
          _
        // Predicated region
        $region45: #{latent_space_memae_forward.1} parent=11 // pred_check
          %p627 = pneg %p256
        $region46: #{latent_space_memae_forward.1} parent=11 // pred_check_branch
          %629 = sbr.rel (%p627) target = $region48
        $region47: #{latent_space_memae_forward.1} parent=11 // pred_region
          _
        $region48: #{latent_space_memae_forward.1} parent=11 // pred_fallthru
          _
        // Predicated region
        $region49: #{latent_space_memae_forward.1} parent=11 // pred_check
          %p630 = pneg %p277
        $region50: #{latent_space_memae_forward.1} parent=11 // pred_check_branch
          %632 = sbr.rel (%p630) target = $region52
        $region51: #{latent_space_memae_forward.1} parent=11 // pred_region
          %634 = vsyncadd [#allocation10], 0
          %s635 = sshll.u32 %s10, 4
          %s636 = int_to_ptr.hbm [resolvable:$true] %s635
          %s637 = sshll.u32 [#allocation11], 4
          %s638 = int_to_ptr.vmem [resolvable:$true] %s637
          %643 = dma.hbm_to_vmem [thread:$0]  %s636, 256, %s638, [#allocation10], 128, 128, 8
        $region52: #{latent_space_memae_forward.1} parent=11 // pred_fallthru
          _
        // Predicated region
        $region53: #{latent_space_memae_forward.1} parent=11 // pred_check
          %p644 = pneg %p298
        $region54: #{latent_space_memae_forward.1} parent=11 // pred_check_branch
          %646 = sbr.rel (%p644) target = $region56
        $region55: #{latent_space_memae_forward.1} parent=11 // pred_region
          %648 = vsyncadd [#allocation13], 0
          %s649 = sshll.u32 %s11, 4
          %s650 = int_to_ptr.hbm [resolvable:$true] %s649
          %s651 = sshll.u32 [#allocation12], 4
          %s652 = int_to_ptr.vmem [resolvable:$true] %s651
          %657 = dma.hbm_to_vmem [thread:$0]  %s650, 7168, %s652, [#allocation13], 256, 256, 16
        $region56: #{latent_space_memae_forward.1} parent=11 // pred_fallthru
          _
        // Predicated region
        $region57: #{latent_space_memae_forward.1} parent=11 // pred_check
          %p658 = pneg %p319
        $region58: #{latent_space_memae_forward.1} parent=11 // pred_check_branch
          %660 = sbr.rel (%p658) target = $region60
        $region59: #{latent_space_memae_forward.1} parent=11 // pred_region
          _
        $region60: #{latent_space_memae_forward.1} parent=11 // pred_fallthru
          _
        // Predicated region
        $region61: #{latent_space_memae_forward.1} parent=11 // pred_check
          %p661 = pneg %p340
        $region62: #{latent_space_memae_forward.1} parent=11 // pred_check_branch
          %663 = sbr.rel (%p661) target = $region64
        $region63: #{latent_space_memae_forward.1} parent=11 // pred_region
          _
        $region64: #{latent_space_memae_forward.1} parent=11 // pred_fallthru
          _
        // Predicated region
        $region65: #{latent_space_memae_forward.1} parent=11 // pred_check
          %p664 = pneg %p361
        $region66: #{latent_space_memae_forward.1} parent=11 // pred_check_branch
          %666 = sbr.rel (%p664) target = $region68
        $region67: #{latent_space_memae_forward.1} parent=11 // pred_region
          %668 = vsyncadd [#allocation13], 0
          %s669 = sshll.u32 %s14, 4
          %s670 = int_to_ptr.hbm [resolvable:$true] %s669
          %s671 = sshll.u32 [#allocation14], 4
          %s672 = int_to_ptr.vmem [resolvable:$true] %s671
          %677 = dma.hbm_to_vmem [thread:$0]  %s670, 768, %s672, [#allocation13], 128, 128, 8
        $region68: #{latent_space_memae_forward.1} parent=11 // pred_fallthru
          _
        // Predicated region
        $region69: #{latent_space_memae_forward.1} parent=11 // pred_check
          %p678 = pneg %p382
        $region70: #{latent_space_memae_forward.1} parent=11 // pred_check_branch
          %680 = sbr.rel (%p678) target = $region72
        $region71: #{latent_space_memae_forward.1} parent=11 // pred_region
          %682 = vsyncadd [#allocation16], 0
          %s683 = sshll.u32 %s15, 4
          %s684 = int_to_ptr.hbm [resolvable:$true] %s683
          %s685 = sshll.u32 [#allocation15], 4
          %s686 = int_to_ptr.vmem [resolvable:$true] %s685
          %691 = dma.hbm_to_vmem [thread:$0]  %s684, 21504, %s686, [#allocation16], 256, 256, 16
        $region72: #{latent_space_memae_forward.1} parent=11 // pred_fallthru
          _
        // Predicated region
        $region73: #{latent_space_memae_forward.1} parent=11 // pred_check
          %p692 = pneg %p403
        $region74: #{latent_space_memae_forward.1} parent=11 // pred_check_branch
          %694 = sbr.rel (%p692) target = $region76
        $region75: #{latent_space_memae_forward.1} parent=11 // pred_region
          _
        $region76: #{latent_space_memae_forward.1} parent=11 // pred_fallthru
          _
        // Predicated region
        $region77: #{latent_space_memae_forward.1} parent=11 // pred_check
          %p695 = pneg %p424
        $region78: #{latent_space_memae_forward.1} parent=11 // pred_check_branch
          %697 = sbr.rel (%p695) target = $region80
        $region79: #{latent_space_memae_forward.1} parent=11 // pred_region
          %699 = vsyncadd [#allocation16], 0
          %s700 = sshll.u32 %s17, 4
          %s701 = int_to_ptr.hbm [resolvable:$true] %s700
          %s702 = sshll.u32 [#allocation17], 4
          %s703 = int_to_ptr.vmem [resolvable:$true] %s702
          %708 = dma.hbm_to_vmem [thread:$0]  %s701, 1536, %s703, [#allocation16], 128, 128, 8
        $region80: #{latent_space_memae_forward.1} parent=11 // pred_fallthru
          _
        // Predicated region
        $region81: #{latent_space_memae_forward.1} parent=11 // pred_check
          %p709 = pneg %p445
        $region82: #{latent_space_memae_forward.1} parent=11 // pred_check_branch
          %711 = sbr.rel (%p709) target = $region84
        $region83: #{latent_space_memae_forward.1} parent=11 // pred_region
          %713 = vsyncadd [#allocation19], 0
          %s714 = sshll.u32 %s18, 4
          %s715 = int_to_ptr.hbm [resolvable:$true] %s714
          %s716 = sshll.u32 [#allocation18], 4
          %s717 = int_to_ptr.vmem [resolvable:$true] %s716
          %722 = dma.hbm_to_vmem [thread:$0]  %s715, 10752, %s717, [#allocation19], 128, 128, 8
        $region84: #{latent_space_memae_forward.1} parent=11 // pred_fallthru
          _
        // Predicated region
        $region85: #{latent_space_memae_forward.1} parent=11 // pred_check
          %p723 = pneg %p466
        $region86: #{latent_space_memae_forward.1} parent=11 // pred_check_branch
          %725 = sbr.rel (%p723) target = $region88
        $region87: #{latent_space_memae_forward.1} parent=11 // pred_region
          _
        $region88: #{latent_space_memae_forward.1} parent=11 // pred_fallthru
          _
      $region12: #{latent_space_memae_forward.1} parent=5 // pred_fallthru
        _
      %p726 = scmp.lt.s32.totalorder %s41, 2
      // Predicated region
      $region89: #{latent_space_memae_forward.1} parent=5 // pred_check
        %p727 = pneg %p726
      $region90: #{latent_space_memae_forward.1} parent=5 // pred_check_branch
        %729 = sbr.rel (%p727) target = $region92
      $region91: #{latent_space_memae_forward.1} parent=5 // pred_region
        // Predicated region
        $region93: #{latent_space_memae_forward.1} parent=91 // pred_check
          %p730 = pneg %p61
        $region94: #{latent_space_memae_forward.1} parent=91 // pred_check_branch
          %732 = sbr.rel (%p730) target = $region96
        $region95: #{latent_space_memae_forward.1} parent=91 // pred_region
          %p733 = scmp.lt.s32.totalorder %s41, 1
          %s734 = scalar_select %p733, %s41, 1
          %s735 = smul.addr %s734, 4
          %s736 = smul.addr %s735, 8
          %s737 = scalar_lea.vmem %s0, %s736
        $region96: #{latent_space_memae_forward.1} parent=91 // pred_fallthru
          _
      $region92: #{latent_space_memae_forward.1} parent=5 // pred_fallthru
        _
      %p738 = scmp.le.s32.totalorder 1, %s41
      %p739 = scmp.lt.s32.totalorder %s41, 3
      %p740 = pnand %p738, %p739
      %p741 = pneg %p740
      // Predicated region
      $region97: #{latent_space_memae_forward.1} parent=5 // pred_check
        _
      $region98: #{latent_space_memae_forward.1} parent=5 // pred_check_branch
        %743 = sbr.rel (%p740) target = $region100
      $region99: #{latent_space_memae_forward.1} parent=5 // pred_region
        %s744 = ssub.s32 %s41, 1
        // Predicated region
        $region101: #{latent_space_memae_forward.1} parent=99 // pred_check
          %p745 = pneg %p88
        $region102: #{latent_space_memae_forward.1} parent=99 // pred_check_branch
          %747 = sbr.rel (%p745) target = $region104
        $region103: #{latent_space_memae_forward.1} parent=99 // pred_region
          %749 = dma.done [#allocation4], 768
        $region104: #{latent_space_memae_forward.1} parent=99 // pred_fallthru
          _
        // Predicated region
        $region105: #{latent_space_memae_forward.1} parent=99 // pred_check
          %p750 = pneg %p151
        $region106: #{latent_space_memae_forward.1} parent=99 // pred_check_branch
          %752 = sbr.rel (%p750) target = $region108
        $region107: #{latent_space_memae_forward.1} parent=99 // pred_region
          %754 = dma.done [#allocation7], 384
        $region108: #{latent_space_memae_forward.1} parent=99 // pred_fallthru
          _
        // Predicated region
        $region109: #{latent_space_memae_forward.1} parent=99 // pred_check
          %p755 = pneg %p172
        $region110: #{latent_space_memae_forward.1} parent=99 // pred_check_branch
          %757 = sbr.rel (%p755) target = $region112
        $region111: #{latent_space_memae_forward.1} parent=99 // pred_region
          %759 = dma.done [#allocation7], 21504
        $region112: #{latent_space_memae_forward.1} parent=99 // pred_fallthru
          _
        // Predicated region
        $region113: #{latent_space_memae_forward.1} parent=99 // pred_check
          %p760 = pneg %p235
        $region114: #{latent_space_memae_forward.1} parent=99 // pred_check_branch
          %762 = sbr.rel (%p760) target = $region116
        $region115: #{latent_space_memae_forward.1} parent=99 // pred_region
          %764 = dma.done [#allocation10], 25088
        $region116: #{latent_space_memae_forward.1} parent=99 // pred_fallthru
          _
        // Predicated region
        $region117: #{latent_space_memae_forward.1} parent=99 // pred_check
          %p765 = pneg %p277
        $region118: #{latent_space_memae_forward.1} parent=99 // pred_check_branch
          %767 = sbr.rel (%p765) target = $region120
        $region119: #{latent_space_memae_forward.1} parent=99 // pred_region
          %769 = dma.done [#allocation10], 256
        $region120: #{latent_space_memae_forward.1} parent=99 // pred_fallthru
          _
        // Predicated region
        $region121: #{latent_space_memae_forward.1} parent=99 // pred_check
          %p770 = pneg %p298
        $region122: #{latent_space_memae_forward.1} parent=99 // pred_check_branch
          %772 = sbr.rel (%p770) target = $region124
        $region123: #{latent_space_memae_forward.1} parent=99 // pred_region
          %774 = dma.done [#allocation13], 7168
        $region124: #{latent_space_memae_forward.1} parent=99 // pred_fallthru
          _
        // Predicated region
        $region125: #{latent_space_memae_forward.1} parent=99 // pred_check
          %p775 = pneg %p361
        $region126: #{latent_space_memae_forward.1} parent=99 // pred_check_branch
          %777 = sbr.rel (%p775) target = $region128
        $region127: #{latent_space_memae_forward.1} parent=99 // pred_region
          %779 = dma.done [#allocation13], 768
        $region128: #{latent_space_memae_forward.1} parent=99 // pred_fallthru
          _
        // Predicated region
        $region129: #{latent_space_memae_forward.1} parent=99 // pred_check
          %p780 = pneg %p382
        $region130: #{latent_space_memae_forward.1} parent=99 // pred_check_branch
          %782 = sbr.rel (%p780) target = $region132
        $region131: #{latent_space_memae_forward.1} parent=99 // pred_region
          %784 = dma.done [#allocation16], 21504
        $region132: #{latent_space_memae_forward.1} parent=99 // pred_fallthru
          _
        // Predicated region
        $region133: #{latent_space_memae_forward.1} parent=99 // pred_check
          %p785 = pneg %p424
        $region134: #{latent_space_memae_forward.1} parent=99 // pred_check_branch
          %787 = sbr.rel (%p785) target = $region136
        $region135: #{latent_space_memae_forward.1} parent=99 // pred_region
          %789 = dma.done [#allocation16], 1536
        $region136: #{latent_space_memae_forward.1} parent=99 // pred_fallthru
          _
        // Predicated region
        $region137: #{latent_space_memae_forward.1} parent=99 // pred_check
          %p790 = pneg %p445
        $region138: #{latent_space_memae_forward.1} parent=99 // pred_check_branch
          %792 = sbr.rel (%p790) target = $region140
        $region139: #{latent_space_memae_forward.1} parent=99 // pred_region
          %794 = dma.done [#allocation19], 10752
        $region140: #{latent_space_memae_forward.1} parent=99 // pred_fallthru
          _
        %p795 = scmp.lt.s32.totalorder %s46, 1
        %s796 = scalar_select %p795, %s46, 1
        %s797 = smul.addr %s796, 4
        %s798 = smul.addr %s797, 8
        %s799 = scalar_lea.vmem %s0, %s798
        %p800 = pneg %p67
        %p801 = pneg %p64
        %p802 = pneg %p88
        %p803 = pneg %p85
        %p804 = pneg %p109
        %p805 = pneg %p106
        %p806 = pneg %p130
        %p807 = pneg %p127
        %p808 = pneg %p151
        %p809 = pneg %p148
        %p810 = pneg %p172
        %p811 = pneg %p169
        %p812 = pneg %p193
        %p813 = pneg %p190
        %p814 = pneg %p214
        %p815 = pneg %p211
        %p816 = pneg %p235
        %p817 = pneg %p232
        %p818 = pneg %p256
        %p819 = pneg %p253
        %p820 = pneg %p277
        %p821 = pneg %p274
        %p822 = pneg %p298
        %p823 = pneg %p295
        %p824 = pneg %p319
        %p825 = pneg %p316
        %p826 = pneg %p340
        %p827 = pneg %p337
        %p828 = pneg %p361
        %p829 = pneg %p358
        %p830 = pneg %p382
        %p831 = pneg %p379
        %p832 = pneg %p403
        %p833 = pneg %p400
        %p834 = pneg %p424
        %p835 = pneg %p421
        %p836 = pneg %p445
        %p837 = pneg %p442
        %p838 = pneg %p466
        %p839 = pneg %p463
        %p840 = pneg %p492
        %p841 = pneg %p489
        %p842 = scmp.lt.s32.totalorder %s46, 1
        %s843 = scalar_select %p842, %s46, 1
        %s844 = smul.addr %s843, 4
        %s845 = smul.addr %s844, 8
        %s846 = scalar_lea.vmem %s20, %s845
        %p847 = pneg %p518
        %p848 = pneg %p515
        %s849 = sand.u32 %s505, 1
        %s850 = scalar_lea.sflag [#allocation5], %s849
        %s851 = sand.u32 %s505, 1
        %s852 = scalar_lea.vmem [#allocation20], %s851
        %p853 = pneg %p544
        %p854 = pneg %p541
        %s855 = sand.u32 %s531, 1
        %s856 = scalar_lea.sflag [#allocation22], %s855
        %s857 = sand.u32 %s531, 1
        %s858 = scalar_lea.vmem [#allocation21], %s857
        %p859 = scmp.lt.s32.totalorder %s46, 1
        %s860 = scalar_select %p859, %s46, 1
        %s861 = smul.addr %s860, 4
        %s862 = smul.addr %s861, 8
        %s863 = scalar_lea.vmem %s0, %s862
        %p864 = scmp.lt.s32.totalorder %s46, 1
        %s865 = scalar_select %p864, %s46, 1
        %s866 = smul.addr %s865, 4
        %s867 = smul.addr %s866, 8
        %s868 = scalar_lea.vmem %s20, %s867
        %v869 = vld [vmem:[%s863] sm:$0xff]
        %v870 = vld [vmem:[%s863 + $0x8] sm:$0xff]
        %v871 = vld [vmem:[%s863 + $0x10] sm:$0xff]
        %v872 = vld [vmem:[%s863 + $0x18] sm:$0xf]
        %vm873 = vcmask 228352
        %874 = vst.msk [vmem:[#allocation2] sm:$0xff] %vm873, %v869
        %875 = vst.msk [vmem:[#allocation2 + $0x8] sm:$0xff] %vm873, %v870
        %876 = vst.msk [vmem:[#allocation2 + $0x10] sm:$0xff] %vm873, %v871
        %vm877 = vcmask 224256
        %878 = vst.msk [vmem:[#allocation2 + $0x18] sm:$0xf] %vm877, %v872
        %v879 = vld [vmem:[#allocation2] sm:$0xff]
        %v880 = vld [vmem:[#allocation2 + $0x8] sm:$0xff]
        %v881 = vld [vmem:[#allocation2 + $0x10] sm:$0xff]
        %v882 = vld [vmem:[#allocation2 + $0x18] sm:$0xf]
        %v883 = vld [vmem:[#allocation3] sm:$0xff]
        %v884 = vld [vmem:[#allocation3 + $0x8] sm:$0x3f]
        %v886 = vsel %vm873, %v883, 0
        %v889 = vsel %vm873, %v884, 0
        %vm891 = vcmask 1043456
        %v893 = vsel %vm891, %v882, 0
        %895 = vmatpush.msra.mxu0 0.0
        %896 = vmatpush.msra.mxu0 0.0
        %897 = vmatpush.msra.mxu0 0.0
        %898 = vmatpush.msra.mxu0 0.0
        %899 = vmatpush.msra.mxu0 0.0
        %900 = vmatpush.msra.mxu0 0.0
        %901 = vmatpush.msra.mxu0 0.0
        %902 = vmatpush.msra.mxu0 0.0
        %903 = vmatpush.msra.mxu0 0.0
        %904 = vmatpush.msra.mxu0 0.0
        %905 = vmatpush.msra.mxu0 0.0
        %906 = vmatpush.msra.mxu0 0.0
        %907 = vmatpush.msra.mxu0 %v893
        %908 = vmatpush.msra.mxu0 %v881
        %909 = vmatpush.msra.mxu0 %v880
        %910 = vmatpush.msra.mxu0 %v879
        %911 = vmatmul.f32.gmra.mxu0 %v886
        %v912 = vpop.f32.mrf.mxu0
        %v913 = vadd.f32 0.0, %v912
        %914 = vmatmul.f32.gmra.mxu0 %v889
        %v915 = vpop.f32.mrf.mxu0
        %v916 = vadd.f32 0.0, %v915
        %917 = vdwg.mxu0
        %v918 = vld [vmem:[%s2] sm:$0xff]
        %v919 = vld [vmem:[%s2 + $0x8] sm:$0xff]
        %v920 = vld [vmem:[%s2 + $0x10] sm:$0xff]
        %v921 = vld [vmem:[%s2 + $0x18] sm:$0xff]
        %v922 = vld [vmem:[%s2 + $0x20] sm:$0xff]
        %v923 = vld [vmem:[%s2 + $0x28] sm:$0xff]
        %v924 = vld [vmem:[%s2 + $0x30] sm:$0xf]
        %v925 = vld [vmem:[%s2 + $0x38] sm:$0xf]
        %s926 = scalar_lea.vmem [#allocation3], 16
        %v927 = vld [vmem:[%s926] sm:$0xff]
        %v928 = vld [vmem:[%s926 + $0x8] sm:$0x3f]
        %v930 = vsel %vm873, %v927, 0
        %v933 = vsel %vm873, %v928, 0
        %935 = vmatpush.msra.mxu0 0.0
        %936 = vmatpush.msra.mxu0 0.0
        %937 = vmatpush.msra.mxu0 0.0
        %938 = vmatpush.msra.mxu0 0.0
        %939 = vmatpush.msra.mxu0 0.0
        %940 = vmatpush.msra.mxu0 0.0
        %941 = vmatpush.msra.mxu0 0.0
        %942 = vmatpush.msra.mxu0 0.0
        %943 = vmatpush.msra.mxu0 0.0
        %944 = vmatpush.msra.mxu0 0.0
        %945 = vmatpush.msra.mxu0 0.0
        %946 = vmatpush.msra.mxu0 0.0
        %947 = vmatpush.msra.mxu0 %v893
        %948 = vmatpush.msra.mxu0 %v881
        %949 = vmatpush.msra.mxu0 %v880
        %950 = vmatpush.msra.mxu0 %v879
        %951 = vmatmul.f32.gmra.mxu0 %v930
        %v952 = vpop.f32.mrf.mxu0
        %v953 = vadd.f32 0.0, %v952
        %954 = vmatmul.f32.gmra.mxu0 %v933
        %v955 = vpop.f32.mrf.mxu0
        %v956 = vadd.f32 0.0, %v955
        %957 = vdwg.mxu0
        %s958 = scalar_lea.vmem %s2, 64
        %v959 = vld [vmem:[%s958] sm:$0xff]
        %v960 = vld [vmem:[%s958 + $0x8] sm:$0xff]
        %v961 = vld [vmem:[%s958 + $0x10] sm:$0xff]
        %v962 = vld [vmem:[%s958 + $0x18] sm:$0xff]
        %v963 = vld [vmem:[%s958 + $0x20] sm:$0xff]
        %v964 = vld [vmem:[%s958 + $0x28] sm:$0xff]
        %v965 = vld [vmem:[%s958 + $0x30] sm:$0xf]
        %v966 = vld [vmem:[%s958 + $0x38] sm:$0xf]
        %v968 = vsel %vm873, %v953, 0
        %v971 = vsel %vm873, %v956, 0
        %v974 = vsel %vm891, %v965, 0
        %v977 = vsel %vm891, %v966, 0
        %979 = vmatpush.msra.mxu0 0.0
        %980 = vmatpush.msra.mxu0 0.0
        %981 = vmatpush.msra.mxu0 0.0
        %982 = vmatpush.msra.mxu0 0.0
        %983 = vmatpush.msra.mxu0 0.0
        %984 = vmatpush.msra.mxu0 0.0
        %985 = vmatpush.msra.mxu0 0.0
        %986 = vmatpush.msra.mxu0 0.0
        %987 = vmatpush.msra.mxu0 0.0
        %988 = vmatpush.msra.mxu0 0.0
        %989 = vmatpush.msra.mxu0 0.0
        %990 = vmatpush.msra.mxu0 0.0
        %991 = vmatpush.msra.mxu0 %v974
        %992 = vmatpush.msra.mxu0 %v963
        %993 = vmatpush.msra.mxu0 %v961
        %994 = vmatpush.msra.mxu0 %v959
        %995 = vmatmul.f32.gmra.mxu0 %v968
        %v996 = vpop.f32.mrf.mxu0
        %v997 = vadd.f32 0.0, %v996
        %998 = vmatmul.f32.gmra.mxu0 %v971
        %v999 = vpop.f32.mrf.mxu0
        %v1000 = vadd.f32 0.0, %v999
        %1001 = vdwg.mxu0
        %1002 = vmatpush.msra.mxu0 0.0
        %1003 = vmatpush.msra.mxu0 0.0
        %1004 = vmatpush.msra.mxu0 0.0
        %1005 = vmatpush.msra.mxu0 0.0
        %1006 = vmatpush.msra.mxu0 0.0
        %1007 = vmatpush.msra.mxu0 0.0
        %1008 = vmatpush.msra.mxu0 0.0
        %1009 = vmatpush.msra.mxu0 0.0
        %1010 = vmatpush.msra.mxu0 0.0
        %1011 = vmatpush.msra.mxu0 0.0
        %1012 = vmatpush.msra.mxu0 0.0
        %1013 = vmatpush.msra.mxu0 0.0
        %1014 = vmatpush.msra.mxu0 %v977
        %1015 = vmatpush.msra.mxu0 %v964
        %1016 = vmatpush.msra.mxu0 %v962
        %1017 = vmatpush.msra.mxu0 %v960
        %1018 = vmatmul.f32.gmra.mxu0 %v968
        %v1019 = vpop.f32.mrf.mxu0
        %v1020 = vadd.f32 0.0, %v1019
        %1021 = vmatmul.f32.gmra.mxu0 %v971
        %v1022 = vpop.f32.mrf.mxu0
        %v1023 = vadd.f32 0.0, %v1022
        %1024 = vdwg.mxu0
        %v1026 = vsel %vm873, %v913, 0
        %v1029 = vsel %vm873, %v916, 0
        %v1032 = vsel %vm891, %v924, 0
        %v1035 = vsel %vm891, %v925, 0
        %1037 = vmatpush.msra.mxu0 0.0
        %1038 = vmatpush.msra.mxu0 0.0
        %1039 = vmatpush.msra.mxu0 0.0
        %1040 = vmatpush.msra.mxu0 0.0
        %1041 = vmatpush.msra.mxu0 0.0
        %1042 = vmatpush.msra.mxu0 0.0
        %1043 = vmatpush.msra.mxu0 0.0
        %1044 = vmatpush.msra.mxu0 0.0
        %1045 = vmatpush.msra.mxu0 0.0
        %1046 = vmatpush.msra.mxu0 0.0
        %1047 = vmatpush.msra.mxu0 0.0
        %1048 = vmatpush.msra.mxu0 0.0
        %1049 = vmatpush.msra.mxu0 %v1032
        %1050 = vmatpush.msra.mxu0 %v922
        %1051 = vmatpush.msra.mxu0 %v920
        %1052 = vmatpush.msra.mxu0 %v918
        %1053 = vmatmul.f32.gmra.mxu0 %v1026
        %v1054 = vpop.f32.mrf.mxu0
        %v1055 = vadd.f32 %v997, %v1054
        %1056 = vmatmul.f32.gmra.mxu0 %v1029
        %v1057 = vpop.f32.mrf.mxu0
        %v1058 = vadd.f32 %v1000, %v1057
        %1059 = vdwg.mxu0
        %1060 = vmatpush.msra.mxu0 0.0
        %1061 = vmatpush.msra.mxu0 0.0
        %1062 = vmatpush.msra.mxu0 0.0
        %1063 = vmatpush.msra.mxu0 0.0
        %1064 = vmatpush.msra.mxu0 0.0
        %1065 = vmatpush.msra.mxu0 0.0
        %1066 = vmatpush.msra.mxu0 0.0
        %1067 = vmatpush.msra.mxu0 0.0
        %1068 = vmatpush.msra.mxu0 0.0
        %1069 = vmatpush.msra.mxu0 0.0
        %1070 = vmatpush.msra.mxu0 0.0
        %1071 = vmatpush.msra.mxu0 0.0
        %1072 = vmatpush.msra.mxu0 %v1035
        %1073 = vmatpush.msra.mxu0 %v923
        %1074 = vmatpush.msra.mxu0 %v921
        %1075 = vmatpush.msra.mxu0 %v919
        %1076 = vmatmul.f32.gmra.mxu0 %v1026
        %v1077 = vpop.f32.mrf.mxu0
        %v1078 = vadd.f32 %v1020, %v1077
        %1079 = vmatmul.f32.gmra.mxu0 %v1029
        %v1080 = vpop.f32.mrf.mxu0
        %v1081 = vadd.f32 %v1023, %v1080
        %1082 = vdwg.mxu0
        %s1083 = scalar_lea.vmem [#allocation3], 32
        %v1084 = vld [vmem:[%s1083] sm:$0xff]
        %v1085 = vld [vmem:[%s1083 + $0x8] sm:$0x3f]
        %v1087 = vsel %vm873, %v1084, 0
        %v1090 = vsel %vm873, %v1085, 0
        %1092 = vmatpush.msra.mxu0 0.0
        %1093 = vmatpush.msra.mxu0 0.0
        %1094 = vmatpush.msra.mxu0 0.0
        %1095 = vmatpush.msra.mxu0 0.0
        %1096 = vmatpush.msra.mxu0 0.0
        %1097 = vmatpush.msra.mxu0 0.0
        %1098 = vmatpush.msra.mxu0 0.0
        %1099 = vmatpush.msra.mxu0 0.0
        %1100 = vmatpush.msra.mxu0 0.0
        %1101 = vmatpush.msra.mxu0 0.0
        %1102 = vmatpush.msra.mxu0 0.0
        %1103 = vmatpush.msra.mxu0 0.0
        %1104 = vmatpush.msra.mxu0 %v893
        %1105 = vmatpush.msra.mxu0 %v881
        %1106 = vmatpush.msra.mxu0 %v880
        %1107 = vmatpush.msra.mxu0 %v879
        %1108 = vmatmul.f32.gmra.mxu0 %v1087
        %v1109 = vpop.f32.mrf.mxu0
        %v1110 = vadd.f32 0.0, %v1109
        %1111 = vmatmul.f32.gmra.mxu0 %v1090
        %v1112 = vpop.f32.mrf.mxu0
        %v1113 = vadd.f32 0.0, %v1112
        %1114 = vdwg.mxu0
        %s1115 = scalar_lea.vmem %s2, 128
        %v1116 = vld [vmem:[%s1115] sm:$0xff]
        %v1117 = vld [vmem:[%s1115 + $0x8] sm:$0xff]
        %v1118 = vld [vmem:[%s1115 + $0x10] sm:$0xff]
        %v1119 = vld [vmem:[%s1115 + $0x18] sm:$0xff]
        %v1120 = vld [vmem:[%s1115 + $0x20] sm:$0xff]
        %v1121 = vld [vmem:[%s1115 + $0x28] sm:$0xff]
        %v1122 = vld [vmem:[%s1115 + $0x30] sm:$0xf]
        %v1123 = vld [vmem:[%s1115 + $0x38] sm:$0xf]
        %v1125 = vsel %vm873, %v1110, 0
        %v1128 = vsel %vm873, %v1113, 0
        %v1131 = vsel %vm891, %v1122, 0
        %v1134 = vsel %vm891, %v1123, 0
        %1136 = vmatpush.msra.mxu0 0.0
        %1137 = vmatpush.msra.mxu0 0.0
        %1138 = vmatpush.msra.mxu0 0.0
        %1139 = vmatpush.msra.mxu0 0.0
        %1140 = vmatpush.msra.mxu0 0.0
        %1141 = vmatpush.msra.mxu0 0.0
        %1142 = vmatpush.msra.mxu0 0.0
        %1143 = vmatpush.msra.mxu0 0.0
        %1144 = vmatpush.msra.mxu0 0.0
        %1145 = vmatpush.msra.mxu0 0.0
        %1146 = vmatpush.msra.mxu0 0.0
        %1147 = vmatpush.msra.mxu0 0.0
        %1148 = vmatpush.msra.mxu0 %v1131
        %1149 = vmatpush.msra.mxu0 %v1120
        %1150 = vmatpush.msra.mxu0 %v1118
        %1151 = vmatpush.msra.mxu0 %v1116
        %1152 = vmatmul.f32.gmra.mxu0 %v1125
        %v1153 = vpop.f32.mrf.mxu0
        %v1154 = vadd.f32 0.0, %v1153
        %1155 = vmatmul.f32.gmra.mxu0 %v1128
        %v1156 = vpop.f32.mrf.mxu0
        %v1157 = vadd.f32 0.0, %v1156
        %1158 = vdwg.mxu0
        %1159 = vmatpush.msra.mxu0 0.0
        %1160 = vmatpush.msra.mxu0 0.0
        %1161 = vmatpush.msra.mxu0 0.0
        %1162 = vmatpush.msra.mxu0 0.0
        %1163 = vmatpush.msra.mxu0 0.0
        %1164 = vmatpush.msra.mxu0 0.0
        %1165 = vmatpush.msra.mxu0 0.0
        %1166 = vmatpush.msra.mxu0 0.0
        %1167 = vmatpush.msra.mxu0 0.0
        %1168 = vmatpush.msra.mxu0 0.0
        %1169 = vmatpush.msra.mxu0 0.0
        %1170 = vmatpush.msra.mxu0 0.0
        %1171 = vmatpush.msra.mxu0 %v1134
        %1172 = vmatpush.msra.mxu0 %v1121
        %1173 = vmatpush.msra.mxu0 %v1119
        %1174 = vmatpush.msra.mxu0 %v1117
        %1175 = vmatmul.f32.gmra.mxu0 %v1125
        %v1176 = vpop.f32.mrf.mxu0
        %v1177 = vadd.f32 0.0, %v1176
        %1178 = vmatmul.f32.gmra.mxu0 %v1128
        %v1179 = vpop.f32.mrf.mxu0
        %v1180 = vadd.f32 0.0, %v1179
        %1181 = vdwg.mxu0
        %v1182 = vadd.f32 %v1055, %v1154
        %v1183 = vadd.f32 %v1078, %v1177
        %v1184 = vadd.f32 %v1058, %v1157
        %v1185 = vadd.f32 %v1081, %v1180
        %v1186 = vld [vmem:[%s3] sm:$0x3]
        %v1188 = vperm.slane %v1186, 0
        %v1189 = vperm.slane %v1186, 1
        %v1192 = vadd.f32 %v1182, %v1188
        %v1193 = vadd.f32 %v1183, %v1189
        %v1194 = vadd.f32 %v1184, %v1188
        %v1195 = vadd.f32 %v1185, %v1189
        %v1196 = vmax.f32 %v1192, 0.0
        %v1197 = vmax.f32 %v1193, 0.0
        %v1198 = vmax.f32 %v1194, 0.0
        %v1199 = vmax.f32 %v1195, 0.0
        %v1200 = vld [vmem:[#allocation6] sm:$0x7f]
        %vm1201 = vcmask 113664
        %v1203 = vsel %vm1201, %v1200, 0
        %vm1205 = vcmask 1045504
        %v1207 = vsel %vm1205, %v1198, 0
        %v1210 = vsel %vm1205, %v1199, 0
        %1212 = vmatpush.msra.mxu0 0.0
        %1213 = vmatpush.msra.mxu0 0.0
        %1214 = vmatpush.msra.mxu0 0.0
        %1215 = vmatpush.msra.mxu0 0.0
        %1216 = vmatpush.msra.mxu0 0.0
        %1217 = vmatpush.msra.mxu0 0.0
        %1218 = vmatpush.msra.mxu0 0.0
        %1219 = vmatpush.msra.mxu0 0.0
        %1220 = vmatpush.msra.mxu0 0.0
        %1221 = vmatpush.msra.mxu0 0.0
        %1222 = vmatpush.msra.mxu0 0.0
        %1223 = vmatpush.msra.mxu0 0.0
        %1224 = vmatpush.msra.mxu0 0.0
        %1225 = vmatpush.msra.mxu0 0.0
        %1226 = vmatpush.msra.mxu0 %v1207
        %1227 = vmatpush.msra.mxu0 %v1196
        %1228 = vmatmul.f32.gmra.mxu0 %v1203
        %v1229 = vpop.f32.mrf.mxu0
        %v1230 = vadd.f32 0.0, %v1229
        %1231 = vdwg.mxu0
        %1232 = vmatpush.msra.mxu0 0.0
        %1233 = vmatpush.msra.mxu0 0.0
        %1234 = vmatpush.msra.mxu0 0.0
        %1235 = vmatpush.msra.mxu0 0.0
        %1236 = vmatpush.msra.mxu0 0.0
        %1237 = vmatpush.msra.mxu0 0.0
        %1238 = vmatpush.msra.mxu0 0.0
        %1239 = vmatpush.msra.mxu0 0.0
        %1240 = vmatpush.msra.mxu0 0.0
        %1241 = vmatpush.msra.mxu0 0.0
        %1242 = vmatpush.msra.mxu0 0.0
        %1243 = vmatpush.msra.mxu0 0.0
        %1244 = vmatpush.msra.mxu0 0.0
        %1245 = vmatpush.msra.mxu0 0.0
        %1246 = vmatpush.msra.mxu0 %v1210
        %1247 = vmatpush.msra.mxu0 %v1197
        %1248 = vmatmul.f32.gmra.mxu0 %v1203
        %v1249 = vpop.f32.mrf.mxu0
        %v1250 = vadd.f32 0.0, %v1249
        %1251 = vdwg.mxu0
        %v1252 = vld [vmem:[#allocation8] sm:$0xff]
        %v1253 = vld [vmem:[#allocation8 + $0x8] sm:$0xff]
        %v1254 = vld [vmem:[#allocation8 + $0x10] sm:$0xff]
        %v1255 = vld [vmem:[#allocation8 + $0x18] sm:$0xff]
        %v1256 = vld [vmem:[#allocation8 + $0x20] sm:$0xff]
        %v1257 = vld [vmem:[#allocation8 + $0x28] sm:$0xff]
        %v1258 = vld [vmem:[#allocation8 + $0x30] sm:$0xff]
        %v1259 = vld [vmem:[#allocation8 + $0x38] sm:$0xff]
        %v1260 = vld [vmem:[#allocation8 + $0x40] sm:$0xff]
        %v1261 = vld [vmem:[#allocation8 + $0x48] sm:$0xff]
        %v1262 = vld [vmem:[#allocation8 + $0x50] sm:$0xff]
        %v1263 = vld [vmem:[#allocation8 + $0x58] sm:$0xff]
        %v1264 = vld [vmem:[#allocation8 + $0x60] sm:$0xff]
        %v1265 = vld [vmem:[#allocation8 + $0x68] sm:$0xff]
        %v1266 = vld [vmem:[#allocation8 + $0x70] sm:$0xff]
        %v1267 = vld [vmem:[#allocation8 + $0x78] sm:$0xff]
        %v1268 = vld [vmem:[#allocation8 + $0x80] sm:$0xff]
        %v1269 = vld [vmem:[#allocation8 + $0x88] sm:$0xff]
        %v1270 = vld [vmem:[#allocation8 + $0x90] sm:$0xff]
        %v1271 = vld [vmem:[#allocation8 + $0x98] sm:$0xff]
        %v1272 = vld [vmem:[#allocation8 + $0xa0] sm:$0xff]
        %v1273 = vld [vmem:[#allocation8 + $0xa8] sm:$0xff]
        %v1274 = vld [vmem:[#allocation8 + $0xb0] sm:$0xff]
        %v1275 = vld [vmem:[#allocation8 + $0xb8] sm:$0xff]
        %v1276 = vld [vmem:[#allocation8 + $0xc0] sm:$0xff]
        %v1277 = vld [vmem:[#allocation8 + $0xc8] sm:$0xff]
        %v1278 = vld [vmem:[#allocation8 + $0xd0] sm:$0xff]
        %v1279 = vld [vmem:[#allocation8 + $0xd8] sm:$0xff]
        %v1280 = vld [vmem:[#allocation8 + $0xe0] sm:$0xff]
        %v1281 = vld [vmem:[#allocation8 + $0xe8] sm:$0xff]
        %v1282 = vld [vmem:[#allocation8 + $0xf0] sm:$0xff]
        %v1283 = vld [vmem:[#allocation8 + $0xf8] sm:$0xff]
        %v1284 = vld [vmem:[#allocation8 + $0x100] sm:$0xff]
        %v1285 = vld [vmem:[#allocation8 + $0x108] sm:$0xff]
        %v1286 = vld [vmem:[#allocation8 + $0x110] sm:$0xff]
        %v1287 = vld [vmem:[#allocation8 + $0x118] sm:$0xff]
        %v1288 = vld [vmem:[#allocation8 + $0x120] sm:$0xff]
        %v1289 = vld [vmem:[#allocation8 + $0x128] sm:$0xff]
        %v1290 = vld [vmem:[#allocation8 + $0x130] sm:$0xff]
        %v1291 = vld [vmem:[#allocation8 + $0x138] sm:$0xff]
        %v1292 = vld [vmem:[#allocation8 + $0x140] sm:$0xff]
        %v1293 = vld [vmem:[#allocation8 + $0x148] sm:$0xff]
        %v1294 = vld [vmem:[#allocation8 + $0x150] sm:$0xff]
        %v1295 = vld [vmem:[#allocation8 + $0x158] sm:$0xff]
        %v1296 = vld [vmem:[#allocation8 + $0x160] sm:$0xff]
        %v1297 = vld [vmem:[#allocation8 + $0x168] sm:$0xff]
        %v1298 = vld [vmem:[#allocation8 + $0x170] sm:$0xff]
        %v1299 = vld [vmem:[#allocation8 + $0x178] sm:$0xff]
        %v1300 = vld [vmem:[#allocation8 + $0x180] sm:$0xff]
        %v1301 = vld [vmem:[#allocation8 + $0x188] sm:$0xff]
        %v1302 = vld [vmem:[#allocation8 + $0x190] sm:$0xff]
        %v1303 = vld [vmem:[#allocation8 + $0x198] sm:$0xff]
        %v1304 = vld [vmem:[#allocation8 + $0x1a0] sm:$0xff]
        %v1305 = vld [vmem:[#allocation8 + $0x1a8] sm:$0xff]
        %v1306 = vld [vmem:[#allocation8 + $0x1b0] sm:$0xff]
        %v1307 = vld [vmem:[#allocation8 + $0x1b8] sm:$0xff]
        %s1308 = scalar_lea.vmem [#allocation6], 8
        %v1309 = vld [vmem:[%s1308] sm:$0x7f]
        %v1311 = vsel %vm1201, %v1309, 0
        %1313 = vmatpush.msra.mxu0 0.0
        %1314 = vmatpush.msra.mxu0 0.0
        %1315 = vmatpush.msra.mxu0 0.0
        %1316 = vmatpush.msra.mxu0 0.0
        %1317 = vmatpush.msra.mxu0 0.0
        %1318 = vmatpush.msra.mxu0 0.0
        %1319 = vmatpush.msra.mxu0 0.0
        %1320 = vmatpush.msra.mxu0 0.0
        %1321 = vmatpush.msra.mxu0 0.0
        %1322 = vmatpush.msra.mxu0 0.0
        %1323 = vmatpush.msra.mxu0 0.0
        %1324 = vmatpush.msra.mxu0 0.0
        %1325 = vmatpush.msra.mxu0 0.0
        %1326 = vmatpush.msra.mxu0 0.0
        %1327 = vmatpush.msra.mxu0 %v1207
        %1328 = vmatpush.msra.mxu0 %v1196
        %1329 = vmatmul.f32.gmra.mxu0 %v1311
        %v1330 = vpop.f32.mrf.mxu0
        %v1331 = vadd.f32 0.0, %v1330
        %1332 = vdwg.mxu0
        %1333 = vmatpush.msra.mxu0 0.0
        %1334 = vmatpush.msra.mxu0 0.0
        %1335 = vmatpush.msra.mxu0 0.0
        %1336 = vmatpush.msra.mxu0 0.0
        %1337 = vmatpush.msra.mxu0 0.0
        %1338 = vmatpush.msra.mxu0 0.0
        %1339 = vmatpush.msra.mxu0 0.0
        %1340 = vmatpush.msra.mxu0 0.0
        %1341 = vmatpush.msra.mxu0 0.0
        %1342 = vmatpush.msra.mxu0 0.0
        %1343 = vmatpush.msra.mxu0 0.0
        %1344 = vmatpush.msra.mxu0 0.0
        %1345 = vmatpush.msra.mxu0 0.0
        %1346 = vmatpush.msra.mxu0 0.0
        %1347 = vmatpush.msra.mxu0 %v1210
        %1348 = vmatpush.msra.mxu0 %v1197
        %1349 = vmatmul.f32.gmra.mxu0 %v1311
        %v1350 = vpop.f32.mrf.mxu0
        %v1351 = vadd.f32 0.0, %v1350
        %1352 = vdwg.mxu0
        %s1353 = scalar_lea.vmem [#allocation8], 448
        %v1354 = vld [vmem:[%s1353] sm:$0xff]
        %v1355 = vld [vmem:[%s1353 + $0x8] sm:$0xff]
        %v1356 = vld [vmem:[%s1353 + $0x10] sm:$0xff]
        %v1357 = vld [vmem:[%s1353 + $0x18] sm:$0xff]
        %v1358 = vld [vmem:[%s1353 + $0x20] sm:$0xff]
        %v1359 = vld [vmem:[%s1353 + $0x28] sm:$0xff]
        %v1360 = vld [vmem:[%s1353 + $0x30] sm:$0xff]
        %v1361 = vld [vmem:[%s1353 + $0x38] sm:$0xff]
        %v1362 = vld [vmem:[%s1353 + $0x40] sm:$0xff]
        %v1363 = vld [vmem:[%s1353 + $0x48] sm:$0xff]
        %v1364 = vld [vmem:[%s1353 + $0x50] sm:$0xff]
        %v1365 = vld [vmem:[%s1353 + $0x58] sm:$0xff]
        %v1366 = vld [vmem:[%s1353 + $0x60] sm:$0xff]
        %v1367 = vld [vmem:[%s1353 + $0x68] sm:$0xff]
        %v1368 = vld [vmem:[%s1353 + $0x70] sm:$0xff]
        %v1369 = vld [vmem:[%s1353 + $0x78] sm:$0xff]
        %v1370 = vld [vmem:[%s1353 + $0x80] sm:$0xff]
        %v1371 = vld [vmem:[%s1353 + $0x88] sm:$0xff]
        %v1372 = vld [vmem:[%s1353 + $0x90] sm:$0xff]
        %v1373 = vld [vmem:[%s1353 + $0x98] sm:$0xff]
        %v1374 = vld [vmem:[%s1353 + $0xa0] sm:$0xff]
        %v1375 = vld [vmem:[%s1353 + $0xa8] sm:$0xff]
        %v1376 = vld [vmem:[%s1353 + $0xb0] sm:$0xff]
        %v1377 = vld [vmem:[%s1353 + $0xb8] sm:$0xff]
        %v1378 = vld [vmem:[%s1353 + $0xc0] sm:$0xff]
        %v1379 = vld [vmem:[%s1353 + $0xc8] sm:$0xff]
        %v1380 = vld [vmem:[%s1353 + $0xd0] sm:$0xff]
        %v1381 = vld [vmem:[%s1353 + $0xd8] sm:$0xff]
        %v1382 = vld [vmem:[%s1353 + $0xe0] sm:$0xff]
        %v1383 = vld [vmem:[%s1353 + $0xe8] sm:$0xff]
        %v1384 = vld [vmem:[%s1353 + $0xf0] sm:$0xff]
        %v1385 = vld [vmem:[%s1353 + $0xf8] sm:$0xff]
        %v1386 = vld [vmem:[%s1353 + $0x100] sm:$0xff]
        %v1387 = vld [vmem:[%s1353 + $0x108] sm:$0xff]
        %v1388 = vld [vmem:[%s1353 + $0x110] sm:$0xff]
        %v1389 = vld [vmem:[%s1353 + $0x118] sm:$0xff]
        %v1390 = vld [vmem:[%s1353 + $0x120] sm:$0xff]
        %v1391 = vld [vmem:[%s1353 + $0x128] sm:$0xff]
        %v1392 = vld [vmem:[%s1353 + $0x130] sm:$0xff]
        %v1393 = vld [vmem:[%s1353 + $0x138] sm:$0xff]
        %v1394 = vld [vmem:[%s1353 + $0x140] sm:$0xff]
        %v1395 = vld [vmem:[%s1353 + $0x148] sm:$0xff]
        %v1396 = vld [vmem:[%s1353 + $0x150] sm:$0xff]
        %v1397 = vld [vmem:[%s1353 + $0x158] sm:$0xff]
        %v1398 = vld [vmem:[%s1353 + $0x160] sm:$0xff]
        %v1399 = vld [vmem:[%s1353 + $0x168] sm:$0xff]
        %v1400 = vld [vmem:[%s1353 + $0x170] sm:$0xff]
        %v1401 = vld [vmem:[%s1353 + $0x178] sm:$0xff]
        %v1402 = vld [vmem:[%s1353 + $0x180] sm:$0xff]
        %v1403 = vld [vmem:[%s1353 + $0x188] sm:$0xff]
        %v1404 = vld [vmem:[%s1353 + $0x190] sm:$0xff]
        %v1405 = vld [vmem:[%s1353 + $0x198] sm:$0xff]
        %v1406 = vld [vmem:[%s1353 + $0x1a0] sm:$0xff]
        %v1407 = vld [vmem:[%s1353 + $0x1a8] sm:$0xff]
        %v1408 = vld [vmem:[%s1353 + $0x1b0] sm:$0xff]
        %v1409 = vld [vmem:[%s1353 + $0x1b8] sm:$0xff]
        %vm1410 = vcmask 785408
        %v1412 = vsel %vm1410, %v1351, 0
        %1414 = vmatpush.msra.mxu0 %v1384
        %1415 = vmatpush.msra.mxu0 %v1382
        %1416 = vmatpush.msra.mxu0 %v1380
        %1417 = vmatpush.msra.mxu0 %v1378
        %1418 = vmatpush.msra.mxu0 %v1376
        %1419 = vmatpush.msra.mxu0 %v1374
        %1420 = vmatpush.msra.mxu0 %v1372
        %1421 = vmatpush.msra.mxu0 %v1370
        %1422 = vmatpush.msra.mxu0 %v1368
        %1423 = vmatpush.msra.mxu0 %v1366
        %1424 = vmatpush.msra.mxu0 %v1364
        %1425 = vmatpush.msra.mxu0 %v1362
        %1426 = vmatpush.msra.mxu0 %v1360
        %1427 = vmatpush.msra.mxu0 %v1358
        %1428 = vmatpush.msra.mxu0 %v1356
        %1429 = vmatpush.msra.mxu0 %v1354
        %1430 = vmatmul.f32.gmra.mxu0 %v1331
        %v1431 = vpop.f32.mrf.mxu0
        %v1432 = vadd.f32 0.0, %v1431
        %1433 = vdwg.mxu0
        %1434 = vmatpush.msra.mxu0 0.0
        %1435 = vmatpush.msra.mxu0 0.0
        %1436 = vmatpush.msra.mxu0 0.0
        %1437 = vmatpush.msra.mxu0 0.0
        %1438 = vmatpush.msra.mxu0 %v1408
        %1439 = vmatpush.msra.mxu0 %v1406
        %1440 = vmatpush.msra.mxu0 %v1404
        %1441 = vmatpush.msra.mxu0 %v1402
        %1442 = vmatpush.msra.mxu0 %v1400
        %1443 = vmatpush.msra.mxu0 %v1398
        %1444 = vmatpush.msra.mxu0 %v1396
        %1445 = vmatpush.msra.mxu0 %v1394
        %1446 = vmatpush.msra.mxu0 %v1392
        %1447 = vmatpush.msra.mxu0 %v1390
        %1448 = vmatpush.msra.mxu0 %v1388
        %1449 = vmatpush.msra.mxu0 %v1386
        %1450 = vmatmul.f32.gmra.mxu0 %v1412
        %v1451 = vpop.f32.mrf.mxu0
        %v1452 = vadd.f32 %v1432, %v1451
        %1453 = vdwg.mxu0
        %1454 = vmatpush.msra.mxu0 %v1385
        %1455 = vmatpush.msra.mxu0 %v1383
        %1456 = vmatpush.msra.mxu0 %v1381
        %1457 = vmatpush.msra.mxu0 %v1379
        %1458 = vmatpush.msra.mxu0 %v1377
        %1459 = vmatpush.msra.mxu0 %v1375
        %1460 = vmatpush.msra.mxu0 %v1373
        %1461 = vmatpush.msra.mxu0 %v1371
        %1462 = vmatpush.msra.mxu0 %v1369
        %1463 = vmatpush.msra.mxu0 %v1367
        %1464 = vmatpush.msra.mxu0 %v1365
        %1465 = vmatpush.msra.mxu0 %v1363
        %1466 = vmatpush.msra.mxu0 %v1361
        %1467 = vmatpush.msra.mxu0 %v1359
        %1468 = vmatpush.msra.mxu0 %v1357
        %1469 = vmatpush.msra.mxu0 %v1355
        %1470 = vmatmul.f32.gmra.mxu0 %v1331
        %v1471 = vpop.f32.mrf.mxu0
        %v1472 = vadd.f32 0.0, %v1471
        %1473 = vdwg.mxu0
        %1474 = vmatpush.msra.mxu0 0.0
        %1475 = vmatpush.msra.mxu0 0.0
        %1476 = vmatpush.msra.mxu0 0.0
        %1477 = vmatpush.msra.mxu0 0.0
        %1478 = vmatpush.msra.mxu0 %v1409
        %1479 = vmatpush.msra.mxu0 %v1407
        %1480 = vmatpush.msra.mxu0 %v1405
        %1481 = vmatpush.msra.mxu0 %v1403
        %1482 = vmatpush.msra.mxu0 %v1401
        %1483 = vmatpush.msra.mxu0 %v1399
        %1484 = vmatpush.msra.mxu0 %v1397
        %1485 = vmatpush.msra.mxu0 %v1395
        %1486 = vmatpush.msra.mxu0 %v1393
        %1487 = vmatpush.msra.mxu0 %v1391
        %1488 = vmatpush.msra.mxu0 %v1389
        %1489 = vmatpush.msra.mxu0 %v1387
        %1490 = vmatmul.f32.gmra.mxu0 %v1412
        %v1491 = vpop.f32.mrf.mxu0
        %v1492 = vadd.f32 %v1472, %v1491
        %1493 = vdwg.mxu0
        %v1495 = vsel %vm1410, %v1250, 0
        %1497 = vmatpush.msra.mxu0 %v1282
        %1498 = vmatpush.msra.mxu0 %v1280
        %1499 = vmatpush.msra.mxu0 %v1278
        %1500 = vmatpush.msra.mxu0 %v1276
        %1501 = vmatpush.msra.mxu0 %v1274
        %1502 = vmatpush.msra.mxu0 %v1272
        %1503 = vmatpush.msra.mxu0 %v1270
        %1504 = vmatpush.msra.mxu0 %v1268
        %1505 = vmatpush.msra.mxu0 %v1266
        %1506 = vmatpush.msra.mxu0 %v1264
        %1507 = vmatpush.msra.mxu0 %v1262
        %1508 = vmatpush.msra.mxu0 %v1260
        %1509 = vmatpush.msra.mxu0 %v1258
        %1510 = vmatpush.msra.mxu0 %v1256
        %1511 = vmatpush.msra.mxu0 %v1254
        %1512 = vmatpush.msra.mxu0 %v1252
        %1513 = vmatmul.f32.gmra.mxu0 %v1230
        %v1514 = vpop.f32.mrf.mxu0
        %v1515 = vadd.f32 %v1452, %v1514
        %1516 = vdwg.mxu0
        %1517 = vmatpush.msra.mxu0 0.0
        %1518 = vmatpush.msra.mxu0 0.0
        %1519 = vmatpush.msra.mxu0 0.0
        %1520 = vmatpush.msra.mxu0 0.0
        %1521 = vmatpush.msra.mxu0 %v1306
        %1522 = vmatpush.msra.mxu0 %v1304
        %1523 = vmatpush.msra.mxu0 %v1302
        %1524 = vmatpush.msra.mxu0 %v1300
        %1525 = vmatpush.msra.mxu0 %v1298
        %1526 = vmatpush.msra.mxu0 %v1296
        %1527 = vmatpush.msra.mxu0 %v1294
        %1528 = vmatpush.msra.mxu0 %v1292
        %1529 = vmatpush.msra.mxu0 %v1290
        %1530 = vmatpush.msra.mxu0 %v1288
        %1531 = vmatpush.msra.mxu0 %v1286
        %1532 = vmatpush.msra.mxu0 %v1284
        %1533 = vmatmul.f32.gmra.mxu0 %v1495
        %v1534 = vpop.f32.mrf.mxu0
        %v1535 = vadd.f32 %v1515, %v1534
        %1536 = vdwg.mxu0
        %1537 = vmatpush.msra.mxu0 %v1283
        %1538 = vmatpush.msra.mxu0 %v1281
        %1539 = vmatpush.msra.mxu0 %v1279
        %1540 = vmatpush.msra.mxu0 %v1277
        %1541 = vmatpush.msra.mxu0 %v1275
        %1542 = vmatpush.msra.mxu0 %v1273
        %1543 = vmatpush.msra.mxu0 %v1271
        %1544 = vmatpush.msra.mxu0 %v1269
        %1545 = vmatpush.msra.mxu0 %v1267
        %1546 = vmatpush.msra.mxu0 %v1265
        %1547 = vmatpush.msra.mxu0 %v1263
        %1548 = vmatpush.msra.mxu0 %v1261
        %1549 = vmatpush.msra.mxu0 %v1259
        %1550 = vmatpush.msra.mxu0 %v1257
        %1551 = vmatpush.msra.mxu0 %v1255
        %1552 = vmatpush.msra.mxu0 %v1253
        %1553 = vmatmul.f32.gmra.mxu0 %v1230
        %v1554 = vpop.f32.mrf.mxu0
        %v1555 = vadd.f32 %v1492, %v1554
        %1556 = vdwg.mxu0
        %1557 = vmatpush.msra.mxu0 0.0
        %1558 = vmatpush.msra.mxu0 0.0
        %1559 = vmatpush.msra.mxu0 0.0
        %1560 = vmatpush.msra.mxu0 0.0
        %1561 = vmatpush.msra.mxu0 %v1307
        %1562 = vmatpush.msra.mxu0 %v1305
        %1563 = vmatpush.msra.mxu0 %v1303
        %1564 = vmatpush.msra.mxu0 %v1301
        %1565 = vmatpush.msra.mxu0 %v1299
        %1566 = vmatpush.msra.mxu0 %v1297
        %1567 = vmatpush.msra.mxu0 %v1295
        %1568 = vmatpush.msra.mxu0 %v1293
        %1569 = vmatpush.msra.mxu0 %v1291
        %1570 = vmatpush.msra.mxu0 %v1289
        %1571 = vmatpush.msra.mxu0 %v1287
        %1572 = vmatpush.msra.mxu0 %v1285
        %1573 = vmatmul.f32.gmra.mxu0 %v1495
        %v1574 = vpop.f32.mrf.mxu0
        %v1575 = vadd.f32 %v1555, %v1574
        %1576 = vdwg.mxu0
        %s1577 = scalar_lea.vmem [#allocation6], 16
        %v1578 = vld [vmem:[%s1577] sm:$0x7f]
        %v1580 = vsel %vm1201, %v1578, 0
        %1582 = vmatpush.msra.mxu0 0.0
        %1583 = vmatpush.msra.mxu0 0.0
        %1584 = vmatpush.msra.mxu0 0.0
        %1585 = vmatpush.msra.mxu0 0.0
        %1586 = vmatpush.msra.mxu0 0.0
        %1587 = vmatpush.msra.mxu0 0.0
        %1588 = vmatpush.msra.mxu0 0.0
        %1589 = vmatpush.msra.mxu0 0.0
        %1590 = vmatpush.msra.mxu0 0.0
        %1591 = vmatpush.msra.mxu0 0.0
        %1592 = vmatpush.msra.mxu0 0.0
        %1593 = vmatpush.msra.mxu0 0.0
        %1594 = vmatpush.msra.mxu0 0.0
        %1595 = vmatpush.msra.mxu0 0.0
        %1596 = vmatpush.msra.mxu0 %v1207
        %1597 = vmatpush.msra.mxu0 %v1196
        %1598 = vmatmul.f32.gmra.mxu0 %v1580
        %v1599 = vpop.f32.mrf.mxu0
        %v1600 = vadd.f32 0.0, %v1599
        %1601 = vdwg.mxu0
        %1602 = vmatpush.msra.mxu0 0.0
        %1603 = vmatpush.msra.mxu0 0.0
        %1604 = vmatpush.msra.mxu0 0.0
        %1605 = vmatpush.msra.mxu0 0.0
        %1606 = vmatpush.msra.mxu0 0.0
        %1607 = vmatpush.msra.mxu0 0.0
        %1608 = vmatpush.msra.mxu0 0.0
        %1609 = vmatpush.msra.mxu0 0.0
        %1610 = vmatpush.msra.mxu0 0.0
        %1611 = vmatpush.msra.mxu0 0.0
        %1612 = vmatpush.msra.mxu0 0.0
        %1613 = vmatpush.msra.mxu0 0.0
        %1614 = vmatpush.msra.mxu0 0.0
        %1615 = vmatpush.msra.mxu0 0.0
        %1616 = vmatpush.msra.mxu0 %v1210
        %1617 = vmatpush.msra.mxu0 %v1197
        %1618 = vmatmul.f32.gmra.mxu0 %v1580
        %v1619 = vpop.f32.mrf.mxu0
        %v1620 = vadd.f32 0.0, %v1619
        %1621 = vdwg.mxu0
        %s1622 = scalar_lea.vmem [#allocation8], 896
        %v1623 = vld [vmem:[%s1622] sm:$0xff]
        %v1624 = vld [vmem:[%s1622 + $0x8] sm:$0xff]
        %v1625 = vld [vmem:[%s1622 + $0x10] sm:$0xff]
        %v1626 = vld [vmem:[%s1622 + $0x18] sm:$0xff]
        %v1627 = vld [vmem:[%s1622 + $0x20] sm:$0xff]
        %v1628 = vld [vmem:[%s1622 + $0x28] sm:$0xff]
        %v1629 = vld [vmem:[%s1622 + $0x30] sm:$0xff]
        %v1630 = vld [vmem:[%s1622 + $0x38] sm:$0xff]
        %v1631 = vld [vmem:[%s1622 + $0x40] sm:$0xff]
        %v1632 = vld [vmem:[%s1622 + $0x48] sm:$0xff]
        %v1633 = vld [vmem:[%s1622 + $0x50] sm:$0xff]
        %v1634 = vld [vmem:[%s1622 + $0x58] sm:$0xff]
        %v1635 = vld [vmem:[%s1622 + $0x60] sm:$0xff]
        %v1636 = vld [vmem:[%s1622 + $0x68] sm:$0xff]
        %v1637 = vld [vmem:[%s1622 + $0x70] sm:$0xff]
        %v1638 = vld [vmem:[%s1622 + $0x78] sm:$0xff]
        %v1639 = vld [vmem:[%s1622 + $0x80] sm:$0xff]
        %v1640 = vld [vmem:[%s1622 + $0x88] sm:$0xff]
        %v1641 = vld [vmem:[%s1622 + $0x90] sm:$0xff]
        %v1642 = vld [vmem:[%s1622 + $0x98] sm:$0xff]
        %v1643 = vld [vmem:[%s1622 + $0xa0] sm:$0xff]
        %v1644 = vld [vmem:[%s1622 + $0xa8] sm:$0xff]
        %v1645 = vld [vmem:[%s1622 + $0xb0] sm:$0xff]
        %v1646 = vld [vmem:[%s1622 + $0xb8] sm:$0xff]
        %v1647 = vld [vmem:[%s1622 + $0xc0] sm:$0xff]
        %v1648 = vld [vmem:[%s1622 + $0xc8] sm:$0xff]
        %v1649 = vld [vmem:[%s1622 + $0xd0] sm:$0xff]
        %v1650 = vld [vmem:[%s1622 + $0xd8] sm:$0xff]
        %v1651 = vld [vmem:[%s1622 + $0xe0] sm:$0xff]
        %v1652 = vld [vmem:[%s1622 + $0xe8] sm:$0xff]
        %v1653 = vld [vmem:[%s1622 + $0xf0] sm:$0xff]
        %v1654 = vld [vmem:[%s1622 + $0xf8] sm:$0xff]
        %v1655 = vld [vmem:[%s1622 + $0x100] sm:$0xff]
        %v1656 = vld [vmem:[%s1622 + $0x108] sm:$0xff]
        %v1657 = vld [vmem:[%s1622 + $0x110] sm:$0xff]
        %v1658 = vld [vmem:[%s1622 + $0x118] sm:$0xff]
        %v1659 = vld [vmem:[%s1622 + $0x120] sm:$0xff]
        %v1660 = vld [vmem:[%s1622 + $0x128] sm:$0xff]
        %v1661 = vld [vmem:[%s1622 + $0x130] sm:$0xff]
        %v1662 = vld [vmem:[%s1622 + $0x138] sm:$0xff]
        %v1663 = vld [vmem:[%s1622 + $0x140] sm:$0xff]
        %v1664 = vld [vmem:[%s1622 + $0x148] sm:$0xff]
        %v1665 = vld [vmem:[%s1622 + $0x150] sm:$0xff]
        %v1666 = vld [vmem:[%s1622 + $0x158] sm:$0xff]
        %v1667 = vld [vmem:[%s1622 + $0x160] sm:$0xff]
        %v1668 = vld [vmem:[%s1622 + $0x168] sm:$0xff]
        %v1669 = vld [vmem:[%s1622 + $0x170] sm:$0xff]
        %v1670 = vld [vmem:[%s1622 + $0x178] sm:$0xff]
        %v1671 = vld [vmem:[%s1622 + $0x180] sm:$0xff]
        %v1672 = vld [vmem:[%s1622 + $0x188] sm:$0xff]
        %v1673 = vld [vmem:[%s1622 + $0x190] sm:$0xff]
        %v1674 = vld [vmem:[%s1622 + $0x198] sm:$0xff]
        %v1675 = vld [vmem:[%s1622 + $0x1a0] sm:$0xff]
        %v1676 = vld [vmem:[%s1622 + $0x1a8] sm:$0xff]
        %v1677 = vld [vmem:[%s1622 + $0x1b0] sm:$0xff]
        %v1678 = vld [vmem:[%s1622 + $0x1b8] sm:$0xff]
        %v1680 = vsel %vm1410, %v1620, 0
        %1682 = vmatpush.msra.mxu0 %v1653
        %1683 = vmatpush.msra.mxu0 %v1651
        %1684 = vmatpush.msra.mxu0 %v1649
        %1685 = vmatpush.msra.mxu0 %v1647
        %1686 = vmatpush.msra.mxu0 %v1645
        %1687 = vmatpush.msra.mxu0 %v1643
        %1688 = vmatpush.msra.mxu0 %v1641
        %1689 = vmatpush.msra.mxu0 %v1639
        %1690 = vmatpush.msra.mxu0 %v1637
        %1691 = vmatpush.msra.mxu0 %v1635
        %1692 = vmatpush.msra.mxu0 %v1633
        %1693 = vmatpush.msra.mxu0 %v1631
        %1694 = vmatpush.msra.mxu0 %v1629
        %1695 = vmatpush.msra.mxu0 %v1627
        %1696 = vmatpush.msra.mxu0 %v1625
        %1697 = vmatpush.msra.mxu0 %v1623
        %1698 = vmatmul.f32.gmra.mxu0 %v1600
        %v1699 = vpop.f32.mrf.mxu0
        %v1700 = vadd.f32 0.0, %v1699
        %1701 = vdwg.mxu0
        %1702 = vmatpush.msra.mxu0 0.0
        %1703 = vmatpush.msra.mxu0 0.0
        %1704 = vmatpush.msra.mxu0 0.0
        %1705 = vmatpush.msra.mxu0 0.0
        %1706 = vmatpush.msra.mxu0 %v1677
        %1707 = vmatpush.msra.mxu0 %v1675
        %1708 = vmatpush.msra.mxu0 %v1673
        %1709 = vmatpush.msra.mxu0 %v1671
        %1710 = vmatpush.msra.mxu0 %v1669
        %1711 = vmatpush.msra.mxu0 %v1667
        %1712 = vmatpush.msra.mxu0 %v1665
        %1713 = vmatpush.msra.mxu0 %v1663
        %1714 = vmatpush.msra.mxu0 %v1661
        %1715 = vmatpush.msra.mxu0 %v1659
        %1716 = vmatpush.msra.mxu0 %v1657
        %1717 = vmatpush.msra.mxu0 %v1655
        %1718 = vmatmul.f32.gmra.mxu0 %v1680
        %v1719 = vpop.f32.mrf.mxu0
        %v1720 = vadd.f32 %v1700, %v1719
        %1721 = vdwg.mxu0
        %1722 = vmatpush.msra.mxu0 %v1654
        %1723 = vmatpush.msra.mxu0 %v1652
        %1724 = vmatpush.msra.mxu0 %v1650
        %1725 = vmatpush.msra.mxu0 %v1648
        %1726 = vmatpush.msra.mxu0 %v1646
        %1727 = vmatpush.msra.mxu0 %v1644
        %1728 = vmatpush.msra.mxu0 %v1642
        %1729 = vmatpush.msra.mxu0 %v1640
        %1730 = vmatpush.msra.mxu0 %v1638
        %1731 = vmatpush.msra.mxu0 %v1636
        %1732 = vmatpush.msra.mxu0 %v1634
        %1733 = vmatpush.msra.mxu0 %v1632
        %1734 = vmatpush.msra.mxu0 %v1630
        %1735 = vmatpush.msra.mxu0 %v1628
        %1736 = vmatpush.msra.mxu0 %v1626
        %1737 = vmatpush.msra.mxu0 %v1624
        %1738 = vmatmul.f32.gmra.mxu0 %v1600
        %v1739 = vpop.f32.mrf.mxu0
        %v1740 = vadd.f32 0.0, %v1739
        %1741 = vdwg.mxu0
        %1742 = vmatpush.msra.mxu0 0.0
        %1743 = vmatpush.msra.mxu0 0.0
        %1744 = vmatpush.msra.mxu0 0.0
        %1745 = vmatpush.msra.mxu0 0.0
        %1746 = vmatpush.msra.mxu0 %v1678
        %1747 = vmatpush.msra.mxu0 %v1676
        %1748 = vmatpush.msra.mxu0 %v1674
        %1749 = vmatpush.msra.mxu0 %v1672
        %1750 = vmatpush.msra.mxu0 %v1670
        %1751 = vmatpush.msra.mxu0 %v1668
        %1752 = vmatpush.msra.mxu0 %v1666
        %1753 = vmatpush.msra.mxu0 %v1664
        %1754 = vmatpush.msra.mxu0 %v1662
        %1755 = vmatpush.msra.mxu0 %v1660
        %1756 = vmatpush.msra.mxu0 %v1658
        %1757 = vmatpush.msra.mxu0 %v1656
        %1758 = vmatmul.f32.gmra.mxu0 %v1680
        %v1759 = vpop.f32.mrf.mxu0
        %v1760 = vadd.f32 %v1740, %v1759
        %1761 = vdwg.mxu0
        %v1762 = vadd.f32 %v1535, %v1720
        %v1763 = vadd.f32 %v1575, %v1760
        %v1764 = vld [vmem:[%s6] sm:$0x3]
        %v1766 = vperm.slane %v1764, 0
        %v1767 = vperm.slane %v1764, 1
        %v1770 = vadd.f32 %v1762, %v1766
        %v1771 = vadd.f32 %v1763, %v1767
        %v1772 = vmax.f32 %v1770, 0.0
        %v1773 = vmax.f32 %v1771, 0.0
        %v1774 = vld [vmem:[%s9] sm:$0x1]
        %v1775 = vadd.f32 %v1774, 0.0
        %v1776 = vld [vmem:[%s7] sm:$0x1]
        %vm1777 = vcmask 56320
        %v1779 = vsel %vm1777, %v1776, 0
        %vm1781 = vcmask 1046528
        %v1783 = vsel %vm1781, %v1772, 0
        %v1786 = vsel %vm1781, %v1773, 0
        %1788 = vmatpush.msra.mxu0 0.0
        %1789 = vmatpush.msra.mxu0 0.0
        %1790 = vmatpush.msra.mxu0 0.0
        %1791 = vmatpush.msra.mxu0 0.0
        %1792 = vmatpush.msra.mxu0 0.0
        %1793 = vmatpush.msra.mxu0 0.0
        %1794 = vmatpush.msra.mxu0 0.0
        %1795 = vmatpush.msra.mxu0 0.0
        %1796 = vmatpush.msra.mxu0 0.0
        %1797 = vmatpush.msra.mxu0 0.0
        %1798 = vmatpush.msra.mxu0 0.0
        %1799 = vmatpush.msra.mxu0 0.0
        %1800 = vmatpush.msra.mxu0 0.0
        %1801 = vmatpush.msra.mxu0 0.0
        %1802 = vmatpush.msra.mxu0 0.0
        %1803 = vmatpush.msra.mxu0 %v1783
        %1804 = vmatmul.f32.gmra.mxu0 %v1779
        %v1805 = vpop.f32.mrf.mxu0
        %v1806 = vadd.f32 0.0, %v1805
        %1807 = vdwg.mxu0
        %1808 = vmatpush.msra.mxu0 0.0
        %1809 = vmatpush.msra.mxu0 0.0
        %1810 = vmatpush.msra.mxu0 0.0
        %1811 = vmatpush.msra.mxu0 0.0
        %1812 = vmatpush.msra.mxu0 0.0
        %1813 = vmatpush.msra.mxu0 0.0
        %1814 = vmatpush.msra.mxu0 0.0
        %1815 = vmatpush.msra.mxu0 0.0
        %1816 = vmatpush.msra.mxu0 0.0
        %1817 = vmatpush.msra.mxu0 0.0
        %1818 = vmatpush.msra.mxu0 0.0
        %1819 = vmatpush.msra.mxu0 0.0
        %1820 = vmatpush.msra.mxu0 0.0
        %1821 = vmatpush.msra.mxu0 0.0
        %1822 = vmatpush.msra.mxu0 0.0
        %1823 = vmatpush.msra.mxu0 %v1786
        %1824 = vmatmul.f32.gmra.mxu0 %v1779
        %v1825 = vpop.f32.mrf.mxu0
        %v1826 = vadd.f32 0.0, %v1825
        %1827 = vdwg.mxu0
        %v1828 = vld [vmem:[#allocation9] sm:$0xff]
        %v1829 = vld [vmem:[#allocation9 + $0x8] sm:$0xff]
        %v1830 = vld [vmem:[#allocation9 + $0x10] sm:$0xff]
        %v1831 = vld [vmem:[#allocation9 + $0x18] sm:$0xff]
        %v1832 = vld [vmem:[#allocation9 + $0x20] sm:$0xff]
        %v1833 = vld [vmem:[#allocation9 + $0x28] sm:$0xff]
        %v1834 = vld [vmem:[#allocation9 + $0x30] sm:$0xff]
        %v1835 = vld [vmem:[#allocation9 + $0x38] sm:$0xff]
        %v1836 = vld [vmem:[#allocation9 + $0x40] sm:$0xff]
        %v1837 = vld [vmem:[#allocation9 + $0x48] sm:$0xff]
        %v1838 = vld [vmem:[#allocation9 + $0x50] sm:$0xff]
        %v1839 = vld [vmem:[#allocation9 + $0x58] sm:$0xff]
        %v1840 = vld [vmem:[#allocation9 + $0x60] sm:$0xff]
        %v1841 = vld [vmem:[#allocation9 + $0x68] sm:$0xff]
        %v1842 = vld [vmem:[#allocation9 + $0x70] sm:$0xff]
        %v1843 = vld [vmem:[#allocation9 + $0x78] sm:$0xff]
        %v1844 = vld [vmem:[#allocation9 + $0x80] sm:$0xff]
        %v1845 = vld [vmem:[#allocation9 + $0x88] sm:$0xff]
        %v1846 = vld [vmem:[#allocation9 + $0x90] sm:$0xff]
        %v1847 = vld [vmem:[#allocation9 + $0x98] sm:$0xff]
        %v1848 = vld [vmem:[#allocation9 + $0xa0] sm:$0xff]
        %v1849 = vld [vmem:[#allocation9 + $0xa8] sm:$0xff]
        %v1850 = vld [vmem:[#allocation9 + $0xb0] sm:$0xff]
        %v1851 = vld [vmem:[#allocation9 + $0xb8] sm:$0xff]
        %v1852 = vld [vmem:[#allocation9 + $0xc0] sm:$0xff]
        %v1853 = vld [vmem:[#allocation9 + $0xc8] sm:$0xff]
        %v1854 = vld [vmem:[#allocation9 + $0xd0] sm:$0xff]
        %v1855 = vld [vmem:[#allocation9 + $0xd8] sm:$0xff]
        %v1857 = vsel %vm1410, %v1826, 0
        %1859 = vmatpush.msra.mxu0 %v1843
        %1860 = vmatpush.msra.mxu0 %v1842
        %1861 = vmatpush.msra.mxu0 %v1841
        %1862 = vmatpush.msra.mxu0 %v1840
        %1863 = vmatpush.msra.mxu0 %v1839
        %1864 = vmatpush.msra.mxu0 %v1838
        %1865 = vmatpush.msra.mxu0 %v1837
        %1866 = vmatpush.msra.mxu0 %v1836
        %1867 = vmatpush.msra.mxu0 %v1835
        %1868 = vmatpush.msra.mxu0 %v1834
        %1869 = vmatpush.msra.mxu0 %v1833
        %1870 = vmatpush.msra.mxu0 %v1832
        %1871 = vmatpush.msra.mxu0 %v1831
        %1872 = vmatpush.msra.mxu0 %v1830
        %1873 = vmatpush.msra.mxu0 %v1829
        %1874 = vmatpush.msra.mxu0 %v1828
        %1875 = vmatmul.f32.gmra.mxu0 %v1806
        %v1876 = vpop.f32.mrf.mxu0
        %v1877 = vadd.f32 0.0, %v1876
        %1878 = vdwg.mxu0
        %1879 = vmatpush.msra.mxu0 0.0
        %1880 = vmatpush.msra.mxu0 0.0
        %1881 = vmatpush.msra.mxu0 0.0
        %1882 = vmatpush.msra.mxu0 0.0
        %1883 = vmatpush.msra.mxu0 %v1855
        %1884 = vmatpush.msra.mxu0 %v1854
        %1885 = vmatpush.msra.mxu0 %v1853
        %1886 = vmatpush.msra.mxu0 %v1852
        %1887 = vmatpush.msra.mxu0 %v1851
        %1888 = vmatpush.msra.mxu0 %v1850
        %1889 = vmatpush.msra.mxu0 %v1849
        %1890 = vmatpush.msra.mxu0 %v1848
        %1891 = vmatpush.msra.mxu0 %v1847
        %1892 = vmatpush.msra.mxu0 %v1846
        %1893 = vmatpush.msra.mxu0 %v1845
        %1894 = vmatpush.msra.mxu0 %v1844
        %1895 = vmatmul.f32.gmra.mxu0 %v1857
        %v1896 = vpop.f32.mrf.mxu0
        %v1897 = vadd.f32 %v1877, %v1896
        %1898 = vdwg.mxu0
        %v1899 = vadd.f32 %v1775, %v1897
        %s1900 = scalar_lea.vmem %s7, 1
        %v1901 = vld [vmem:[%s1900] sm:$0x1]
        %v1903 = vsel %vm1777, %v1901, 0
        %1905 = vmatpush.msra.mxu0 0.0
        %1906 = vmatpush.msra.mxu0 0.0
        %1907 = vmatpush.msra.mxu0 0.0
        %1908 = vmatpush.msra.mxu0 0.0
        %1909 = vmatpush.msra.mxu0 0.0
        %1910 = vmatpush.msra.mxu0 0.0
        %1911 = vmatpush.msra.mxu0 0.0
        %1912 = vmatpush.msra.mxu0 0.0
        %1913 = vmatpush.msra.mxu0 0.0
        %1914 = vmatpush.msra.mxu0 0.0
        %1915 = vmatpush.msra.mxu0 0.0
        %1916 = vmatpush.msra.mxu0 0.0
        %1917 = vmatpush.msra.mxu0 0.0
        %1918 = vmatpush.msra.mxu0 0.0
        %1919 = vmatpush.msra.mxu0 0.0
        %1920 = vmatpush.msra.mxu0 %v1783
        %1921 = vmatmul.f32.gmra.mxu0 %v1903
        %v1922 = vpop.f32.mrf.mxu0
        %v1923 = vadd.f32 0.0, %v1922
        %1924 = vdwg.mxu0
        %1925 = vmatpush.msra.mxu0 0.0
        %1926 = vmatpush.msra.mxu0 0.0
        %1927 = vmatpush.msra.mxu0 0.0
        %1928 = vmatpush.msra.mxu0 0.0
        %1929 = vmatpush.msra.mxu0 0.0
        %1930 = vmatpush.msra.mxu0 0.0
        %1931 = vmatpush.msra.mxu0 0.0
        %1932 = vmatpush.msra.mxu0 0.0
        %1933 = vmatpush.msra.mxu0 0.0
        %1934 = vmatpush.msra.mxu0 0.0
        %1935 = vmatpush.msra.mxu0 0.0
        %1936 = vmatpush.msra.mxu0 0.0
        %1937 = vmatpush.msra.mxu0 0.0
        %1938 = vmatpush.msra.mxu0 0.0
        %1939 = vmatpush.msra.mxu0 0.0
        %1940 = vmatpush.msra.mxu0 %v1786
        %1941 = vmatmul.f32.gmra.mxu0 %v1903
        %v1942 = vpop.f32.mrf.mxu0
        %v1943 = vadd.f32 0.0, %v1942
        %1944 = vdwg.mxu0
        %s1945 = scalar_lea.vmem [#allocation9], 224
        %v1946 = vld [vmem:[%s1945] sm:$0xff]
        %v1947 = vld [vmem:[%s1945 + $0x8] sm:$0xff]
        %v1948 = vld [vmem:[%s1945 + $0x10] sm:$0xff]
        %v1949 = vld [vmem:[%s1945 + $0x18] sm:$0xff]
        %v1950 = vld [vmem:[%s1945 + $0x20] sm:$0xff]
        %v1951 = vld [vmem:[%s1945 + $0x28] sm:$0xff]
        %v1952 = vld [vmem:[%s1945 + $0x30] sm:$0xff]
        %v1953 = vld [vmem:[%s1945 + $0x38] sm:$0xff]
        %v1954 = vld [vmem:[%s1945 + $0x40] sm:$0xff]
        %v1955 = vld [vmem:[%s1945 + $0x48] sm:$0xff]
        %v1956 = vld [vmem:[%s1945 + $0x50] sm:$0xff]
        %v1957 = vld [vmem:[%s1945 + $0x58] sm:$0xff]
        %v1958 = vld [vmem:[%s1945 + $0x60] sm:$0xff]
        %v1959 = vld [vmem:[%s1945 + $0x68] sm:$0xff]
        %v1960 = vld [vmem:[%s1945 + $0x70] sm:$0xff]
        %v1961 = vld [vmem:[%s1945 + $0x78] sm:$0xff]
        %v1962 = vld [vmem:[%s1945 + $0x80] sm:$0xff]
        %v1963 = vld [vmem:[%s1945 + $0x88] sm:$0xff]
        %v1964 = vld [vmem:[%s1945 + $0x90] sm:$0xff]
        %v1965 = vld [vmem:[%s1945 + $0x98] sm:$0xff]
        %v1966 = vld [vmem:[%s1945 + $0xa0] sm:$0xff]
        %v1967 = vld [vmem:[%s1945 + $0xa8] sm:$0xff]
        %v1968 = vld [vmem:[%s1945 + $0xb0] sm:$0xff]
        %v1969 = vld [vmem:[%s1945 + $0xb8] sm:$0xff]
        %v1970 = vld [vmem:[%s1945 + $0xc0] sm:$0xff]
        %v1971 = vld [vmem:[%s1945 + $0xc8] sm:$0xff]
        %v1972 = vld [vmem:[%s1945 + $0xd0] sm:$0xff]
        %v1973 = vld [vmem:[%s1945 + $0xd8] sm:$0xff]
        %v1975 = vsel %vm1410, %v1943, 0
        %1977 = vmatpush.msra.mxu0 %v1961
        %1978 = vmatpush.msra.mxu0 %v1960
        %1979 = vmatpush.msra.mxu0 %v1959
        %1980 = vmatpush.msra.mxu0 %v1958
        %1981 = vmatpush.msra.mxu0 %v1957
        %1982 = vmatpush.msra.mxu0 %v1956
        %1983 = vmatpush.msra.mxu0 %v1955
        %1984 = vmatpush.msra.mxu0 %v1954
        %1985 = vmatpush.msra.mxu0 %v1953
        %1986 = vmatpush.msra.mxu0 %v1952
        %1987 = vmatpush.msra.mxu0 %v1951
        %1988 = vmatpush.msra.mxu0 %v1950
        %1989 = vmatpush.msra.mxu0 %v1949
        %1990 = vmatpush.msra.mxu0 %v1948
        %1991 = vmatpush.msra.mxu0 %v1947
        %1992 = vmatpush.msra.mxu0 %v1946
        %1993 = vmatmul.f32.gmra.mxu0 %v1923
        %v1994 = vpop.f32.mrf.mxu0
        %v1995 = vadd.f32 0.0, %v1994
        %1996 = vdwg.mxu0
        %1997 = vmatpush.msra.mxu0 0.0
        %1998 = vmatpush.msra.mxu0 0.0
        %1999 = vmatpush.msra.mxu0 0.0
        %2000 = vmatpush.msra.mxu0 0.0
        %2001 = vmatpush.msra.mxu0 %v1973
        %2002 = vmatpush.msra.mxu0 %v1972
        %2003 = vmatpush.msra.mxu0 %v1971
        %2004 = vmatpush.msra.mxu0 %v1970
        %2005 = vmatpush.msra.mxu0 %v1969
        %2006 = vmatpush.msra.mxu0 %v1968
        %2007 = vmatpush.msra.mxu0 %v1967
        %2008 = vmatpush.msra.mxu0 %v1966
        %2009 = vmatpush.msra.mxu0 %v1965
        %2010 = vmatpush.msra.mxu0 %v1964
        %2011 = vmatpush.msra.mxu0 %v1963
        %2012 = vmatpush.msra.mxu0 %v1962
        %2013 = vmatmul.f32.gmra.mxu0 %v1975
        %v2014 = vpop.f32.mrf.mxu0
        %v2015 = vadd.f32 %v1995, %v2014
        %2016 = vdwg.mxu0
        %v2017 = vadd.f32 %v1899, %v2015
        %s2018 = scalar_lea.vmem %s7, 2
        %v2019 = vld [vmem:[%s2018] sm:$0x1]
        %v2021 = vsel %vm1777, %v2019, 0
        %2023 = vmatpush.msra.mxu0 0.0
        %2024 = vmatpush.msra.mxu0 0.0
        %2025 = vmatpush.msra.mxu0 0.0
        %2026 = vmatpush.msra.mxu0 0.0
        %2027 = vmatpush.msra.mxu0 0.0
        %2028 = vmatpush.msra.mxu0 0.0
        %2029 = vmatpush.msra.mxu0 0.0
        %2030 = vmatpush.msra.mxu0 0.0
        %2031 = vmatpush.msra.mxu0 0.0
        %2032 = vmatpush.msra.mxu0 0.0
        %2033 = vmatpush.msra.mxu0 0.0
        %2034 = vmatpush.msra.mxu0 0.0
        %2035 = vmatpush.msra.mxu0 0.0
        %2036 = vmatpush.msra.mxu0 0.0
        %2037 = vmatpush.msra.mxu0 0.0
        %2038 = vmatpush.msra.mxu0 %v1783
        %2039 = vmatmul.f32.gmra.mxu0 %v2021
        %v2040 = vpop.f32.mrf.mxu0
        %v2041 = vadd.f32 0.0, %v2040
        %2042 = vdwg.mxu0
        %2043 = vmatpush.msra.mxu0 0.0
        %2044 = vmatpush.msra.mxu0 0.0
        %2045 = vmatpush.msra.mxu0 0.0
        %2046 = vmatpush.msra.mxu0 0.0
        %2047 = vmatpush.msra.mxu0 0.0
        %2048 = vmatpush.msra.mxu0 0.0
        %2049 = vmatpush.msra.mxu0 0.0
        %2050 = vmatpush.msra.mxu0 0.0
        %2051 = vmatpush.msra.mxu0 0.0
        %2052 = vmatpush.msra.mxu0 0.0
        %2053 = vmatpush.msra.mxu0 0.0
        %2054 = vmatpush.msra.mxu0 0.0
        %2055 = vmatpush.msra.mxu0 0.0
        %2056 = vmatpush.msra.mxu0 0.0
        %2057 = vmatpush.msra.mxu0 0.0
        %2058 = vmatpush.msra.mxu0 %v1786
        %2059 = vmatmul.f32.gmra.mxu0 %v2021
        %v2060 = vpop.f32.mrf.mxu0
        %v2061 = vadd.f32 0.0, %v2060
        %2062 = vdwg.mxu0
        %s2063 = scalar_lea.vmem [#allocation9], 448
        %v2064 = vld [vmem:[%s2063] sm:$0xff]
        %v2065 = vld [vmem:[%s2063 + $0x8] sm:$0xff]
        %v2066 = vld [vmem:[%s2063 + $0x10] sm:$0xff]
        %v2067 = vld [vmem:[%s2063 + $0x18] sm:$0xff]
        %v2068 = vld [vmem:[%s2063 + $0x20] sm:$0xff]
        %v2069 = vld [vmem:[%s2063 + $0x28] sm:$0xff]
        %v2070 = vld [vmem:[%s2063 + $0x30] sm:$0xff]
        %v2071 = vld [vmem:[%s2063 + $0x38] sm:$0xff]
        %v2072 = vld [vmem:[%s2063 + $0x40] sm:$0xff]
        %v2073 = vld [vmem:[%s2063 + $0x48] sm:$0xff]
        %v2074 = vld [vmem:[%s2063 + $0x50] sm:$0xff]
        %v2075 = vld [vmem:[%s2063 + $0x58] sm:$0xff]
        %v2076 = vld [vmem:[%s2063 + $0x60] sm:$0xff]
        %v2077 = vld [vmem:[%s2063 + $0x68] sm:$0xff]
        %v2078 = vld [vmem:[%s2063 + $0x70] sm:$0xff]
        %v2079 = vld [vmem:[%s2063 + $0x78] sm:$0xff]
        %v2080 = vld [vmem:[%s2063 + $0x80] sm:$0xff]
        %v2081 = vld [vmem:[%s2063 + $0x88] sm:$0xff]
        %v2082 = vld [vmem:[%s2063 + $0x90] sm:$0xff]
        %v2083 = vld [vmem:[%s2063 + $0x98] sm:$0xff]
        %v2084 = vld [vmem:[%s2063 + $0xa0] sm:$0xff]
        %v2085 = vld [vmem:[%s2063 + $0xa8] sm:$0xff]
        %v2086 = vld [vmem:[%s2063 + $0xb0] sm:$0xff]
        %v2087 = vld [vmem:[%s2063 + $0xb8] sm:$0xff]
        %v2088 = vld [vmem:[%s2063 + $0xc0] sm:$0xff]
        %v2089 = vld [vmem:[%s2063 + $0xc8] sm:$0xff]
        %v2090 = vld [vmem:[%s2063 + $0xd0] sm:$0xff]
        %v2091 = vld [vmem:[%s2063 + $0xd8] sm:$0xff]
        %v2093 = vsel %vm1410, %v2061, 0
        %2095 = vmatpush.msra.mxu0 %v2079
        %2096 = vmatpush.msra.mxu0 %v2078
        %2097 = vmatpush.msra.mxu0 %v2077
        %2098 = vmatpush.msra.mxu0 %v2076
        %2099 = vmatpush.msra.mxu0 %v2075
        %2100 = vmatpush.msra.mxu0 %v2074
        %2101 = vmatpush.msra.mxu0 %v2073
        %2102 = vmatpush.msra.mxu0 %v2072
        %2103 = vmatpush.msra.mxu0 %v2071
        %2104 = vmatpush.msra.mxu0 %v2070
        %2105 = vmatpush.msra.mxu0 %v2069
        %2106 = vmatpush.msra.mxu0 %v2068
        %2107 = vmatpush.msra.mxu0 %v2067
        %2108 = vmatpush.msra.mxu0 %v2066
        %2109 = vmatpush.msra.mxu0 %v2065
        %2110 = vmatpush.msra.mxu0 %v2064
        %2111 = vmatmul.f32.gmra.mxu0 %v2041
        %v2112 = vpop.f32.mrf.mxu0
        %v2113 = vadd.f32 0.0, %v2112
        %2114 = vdwg.mxu0
        %2115 = vmatpush.msra.mxu0 0.0
        %2116 = vmatpush.msra.mxu0 0.0
        %2117 = vmatpush.msra.mxu0 0.0
        %2118 = vmatpush.msra.mxu0 0.0
        %2119 = vmatpush.msra.mxu0 %v2091
        %2120 = vmatpush.msra.mxu0 %v2090
        %2121 = vmatpush.msra.mxu0 %v2089
        %2122 = vmatpush.msra.mxu0 %v2088
        %2123 = vmatpush.msra.mxu0 %v2087
        %2124 = vmatpush.msra.mxu0 %v2086
        %2125 = vmatpush.msra.mxu0 %v2085
        %2126 = vmatpush.msra.mxu0 %v2084
        %2127 = vmatpush.msra.mxu0 %v2083
        %2128 = vmatpush.msra.mxu0 %v2082
        %2129 = vmatpush.msra.mxu0 %v2081
        %2130 = vmatpush.msra.mxu0 %v2080
        %2131 = vmatmul.f32.gmra.mxu0 %v2093
        %v2132 = vpop.f32.mrf.mxu0
        %v2133 = vadd.f32 %v2113, %v2132
        %2134 = vdwg.mxu0
        %v2135 = vadd.f32 %v2017, %v2133
        %s2136 = scalar_lea.vmem %s7, 3
        %v2137 = vld [vmem:[%s2136] sm:$0x1]
        %v2139 = vsel %vm1777, %v2137, 0
        %2141 = vmatpush.msra.mxu0 0.0
        %2142 = vmatpush.msra.mxu0 0.0
        %2143 = vmatpush.msra.mxu0 0.0
        %2144 = vmatpush.msra.mxu0 0.0
        %2145 = vmatpush.msra.mxu0 0.0
        %2146 = vmatpush.msra.mxu0 0.0
        %2147 = vmatpush.msra.mxu0 0.0
        %2148 = vmatpush.msra.mxu0 0.0
        %2149 = vmatpush.msra.mxu0 0.0
        %2150 = vmatpush.msra.mxu0 0.0
        %2151 = vmatpush.msra.mxu0 0.0
        %2152 = vmatpush.msra.mxu0 0.0
        %2153 = vmatpush.msra.mxu0 0.0
        %2154 = vmatpush.msra.mxu0 0.0
        %2155 = vmatpush.msra.mxu0 0.0
        %2156 = vmatpush.msra.mxu0 %v1783
        %2157 = vmatmul.f32.gmra.mxu0 %v2139
        %v2158 = vpop.f32.mrf.mxu0
        %v2159 = vadd.f32 0.0, %v2158
        %2160 = vdwg.mxu0
        %2161 = vmatpush.msra.mxu0 0.0
        %2162 = vmatpush.msra.mxu0 0.0
        %2163 = vmatpush.msra.mxu0 0.0
        %2164 = vmatpush.msra.mxu0 0.0
        %2165 = vmatpush.msra.mxu0 0.0
        %2166 = vmatpush.msra.mxu0 0.0
        %2167 = vmatpush.msra.mxu0 0.0
        %2168 = vmatpush.msra.mxu0 0.0
        %2169 = vmatpush.msra.mxu0 0.0
        %2170 = vmatpush.msra.mxu0 0.0
        %2171 = vmatpush.msra.mxu0 0.0
        %2172 = vmatpush.msra.mxu0 0.0
        %2173 = vmatpush.msra.mxu0 0.0
        %2174 = vmatpush.msra.mxu0 0.0
        %2175 = vmatpush.msra.mxu0 0.0
        %2176 = vmatpush.msra.mxu0 %v1786
        %2177 = vmatmul.f32.gmra.mxu0 %v2139
        %v2178 = vpop.f32.mrf.mxu0
        %v2179 = vadd.f32 0.0, %v2178
        %2180 = vdwg.mxu0
        %s2181 = scalar_lea.vmem [#allocation9], 672
        %v2182 = vld [vmem:[%s2181] sm:$0xff]
        %v2183 = vld [vmem:[%s2181 + $0x8] sm:$0xff]
        %v2184 = vld [vmem:[%s2181 + $0x10] sm:$0xff]
        %v2185 = vld [vmem:[%s2181 + $0x18] sm:$0xff]
        %v2186 = vld [vmem:[%s2181 + $0x20] sm:$0xff]
        %v2187 = vld [vmem:[%s2181 + $0x28] sm:$0xff]
        %v2188 = vld [vmem:[%s2181 + $0x30] sm:$0xff]
        %v2189 = vld [vmem:[%s2181 + $0x38] sm:$0xff]
        %v2190 = vld [vmem:[%s2181 + $0x40] sm:$0xff]
        %v2191 = vld [vmem:[%s2181 + $0x48] sm:$0xff]
        %v2192 = vld [vmem:[%s2181 + $0x50] sm:$0xff]
        %v2193 = vld [vmem:[%s2181 + $0x58] sm:$0xff]
        %v2194 = vld [vmem:[%s2181 + $0x60] sm:$0xff]
        %v2195 = vld [vmem:[%s2181 + $0x68] sm:$0xff]
        %v2196 = vld [vmem:[%s2181 + $0x70] sm:$0xff]
        %v2197 = vld [vmem:[%s2181 + $0x78] sm:$0xff]
        %v2198 = vld [vmem:[%s2181 + $0x80] sm:$0xff]
        %v2199 = vld [vmem:[%s2181 + $0x88] sm:$0xff]
        %v2200 = vld [vmem:[%s2181 + $0x90] sm:$0xff]
        %v2201 = vld [vmem:[%s2181 + $0x98] sm:$0xff]
        %v2202 = vld [vmem:[%s2181 + $0xa0] sm:$0xff]
        %v2203 = vld [vmem:[%s2181 + $0xa8] sm:$0xff]
        %v2204 = vld [vmem:[%s2181 + $0xb0] sm:$0xff]
        %v2205 = vld [vmem:[%s2181 + $0xb8] sm:$0xff]
        %v2206 = vld [vmem:[%s2181 + $0xc0] sm:$0xff]
        %v2207 = vld [vmem:[%s2181 + $0xc8] sm:$0xff]
        %v2208 = vld [vmem:[%s2181 + $0xd0] sm:$0xff]
        %v2209 = vld [vmem:[%s2181 + $0xd8] sm:$0xff]
        %v2211 = vsel %vm1410, %v2179, 0
        %2213 = vmatpush.msra.mxu0 %v2197
        %2214 = vmatpush.msra.mxu0 %v2196
        %2215 = vmatpush.msra.mxu0 %v2195
        %2216 = vmatpush.msra.mxu0 %v2194
        %2217 = vmatpush.msra.mxu0 %v2193
        %2218 = vmatpush.msra.mxu0 %v2192
        %2219 = vmatpush.msra.mxu0 %v2191
        %2220 = vmatpush.msra.mxu0 %v2190
        %2221 = vmatpush.msra.mxu0 %v2189
        %2222 = vmatpush.msra.mxu0 %v2188
        %2223 = vmatpush.msra.mxu0 %v2187
        %2224 = vmatpush.msra.mxu0 %v2186
        %2225 = vmatpush.msra.mxu0 %v2185
        %2226 = vmatpush.msra.mxu0 %v2184
        %2227 = vmatpush.msra.mxu0 %v2183
        %2228 = vmatpush.msra.mxu0 %v2182
        %2229 = vmatmul.f32.gmra.mxu0 %v2159
        %v2230 = vpop.f32.mrf.mxu0
        %v2231 = vadd.f32 0.0, %v2230
        %2232 = vdwg.mxu0
        %2233 = vmatpush.msra.mxu0 0.0
        %2234 = vmatpush.msra.mxu0 0.0
        %2235 = vmatpush.msra.mxu0 0.0
        %2236 = vmatpush.msra.mxu0 0.0
        %2237 = vmatpush.msra.mxu0 %v2209
        %2238 = vmatpush.msra.mxu0 %v2208
        %2239 = vmatpush.msra.mxu0 %v2207
        %2240 = vmatpush.msra.mxu0 %v2206
        %2241 = vmatpush.msra.mxu0 %v2205
        %2242 = vmatpush.msra.mxu0 %v2204
        %2243 = vmatpush.msra.mxu0 %v2203
        %2244 = vmatpush.msra.mxu0 %v2202
        %2245 = vmatpush.msra.mxu0 %v2201
        %2246 = vmatpush.msra.mxu0 %v2200
        %2247 = vmatpush.msra.mxu0 %v2199
        %2248 = vmatpush.msra.mxu0 %v2198
        %2249 = vmatmul.f32.gmra.mxu0 %v2211
        %v2250 = vpop.f32.mrf.mxu0
        %v2251 = vadd.f32 %v2231, %v2250
        %2252 = vdwg.mxu0
        %v2253 = vadd.f32 %v2135, %v2251
        %s2254 = scalar_lea.vmem %s7, 4
        %v2255 = vld [vmem:[%s2254] sm:$0x1]
        %v2257 = vsel %vm1777, %v2255, 0
        %2259 = vmatpush.msra.mxu0 0.0
        %2260 = vmatpush.msra.mxu0 0.0
        %2261 = vmatpush.msra.mxu0 0.0
        %2262 = vmatpush.msra.mxu0 0.0
        %2263 = vmatpush.msra.mxu0 0.0
        %2264 = vmatpush.msra.mxu0 0.0
        %2265 = vmatpush.msra.mxu0 0.0
        %2266 = vmatpush.msra.mxu0 0.0
        %2267 = vmatpush.msra.mxu0 0.0
        %2268 = vmatpush.msra.mxu0 0.0
        %2269 = vmatpush.msra.mxu0 0.0
        %2270 = vmatpush.msra.mxu0 0.0
        %2271 = vmatpush.msra.mxu0 0.0
        %2272 = vmatpush.msra.mxu0 0.0
        %2273 = vmatpush.msra.mxu0 0.0
        %2274 = vmatpush.msra.mxu0 %v1783
        %2275 = vmatmul.f32.gmra.mxu0 %v2257
        %v2276 = vpop.f32.mrf.mxu0
        %v2277 = vadd.f32 0.0, %v2276
        %2278 = vdwg.mxu0
        %2279 = vmatpush.msra.mxu0 0.0
        %2280 = vmatpush.msra.mxu0 0.0
        %2281 = vmatpush.msra.mxu0 0.0
        %2282 = vmatpush.msra.mxu0 0.0
        %2283 = vmatpush.msra.mxu0 0.0
        %2284 = vmatpush.msra.mxu0 0.0
        %2285 = vmatpush.msra.mxu0 0.0
        %2286 = vmatpush.msra.mxu0 0.0
        %2287 = vmatpush.msra.mxu0 0.0
        %2288 = vmatpush.msra.mxu0 0.0
        %2289 = vmatpush.msra.mxu0 0.0
        %2290 = vmatpush.msra.mxu0 0.0
        %2291 = vmatpush.msra.mxu0 0.0
        %2292 = vmatpush.msra.mxu0 0.0
        %2293 = vmatpush.msra.mxu0 0.0
        %2294 = vmatpush.msra.mxu0 %v1786
        %2295 = vmatmul.f32.gmra.mxu0 %v2257
        %v2296 = vpop.f32.mrf.mxu0
        %v2297 = vadd.f32 0.0, %v2296
        %2298 = vdwg.mxu0
        %s2299 = scalar_lea.vmem [#allocation9], 896
        %v2300 = vld [vmem:[%s2299] sm:$0xff]
        %v2301 = vld [vmem:[%s2299 + $0x8] sm:$0xff]
        %v2302 = vld [vmem:[%s2299 + $0x10] sm:$0xff]
        %v2303 = vld [vmem:[%s2299 + $0x18] sm:$0xff]
        %v2304 = vld [vmem:[%s2299 + $0x20] sm:$0xff]
        %v2305 = vld [vmem:[%s2299 + $0x28] sm:$0xff]
        %v2306 = vld [vmem:[%s2299 + $0x30] sm:$0xff]
        %v2307 = vld [vmem:[%s2299 + $0x38] sm:$0xff]
        %v2308 = vld [vmem:[%s2299 + $0x40] sm:$0xff]
        %v2309 = vld [vmem:[%s2299 + $0x48] sm:$0xff]
        %v2310 = vld [vmem:[%s2299 + $0x50] sm:$0xff]
        %v2311 = vld [vmem:[%s2299 + $0x58] sm:$0xff]
        %v2312 = vld [vmem:[%s2299 + $0x60] sm:$0xff]
        %v2313 = vld [vmem:[%s2299 + $0x68] sm:$0xff]
        %v2314 = vld [vmem:[%s2299 + $0x70] sm:$0xff]
        %v2315 = vld [vmem:[%s2299 + $0x78] sm:$0xff]
        %v2316 = vld [vmem:[%s2299 + $0x80] sm:$0xff]
        %v2317 = vld [vmem:[%s2299 + $0x88] sm:$0xff]
        %v2318 = vld [vmem:[%s2299 + $0x90] sm:$0xff]
        %v2319 = vld [vmem:[%s2299 + $0x98] sm:$0xff]
        %v2320 = vld [vmem:[%s2299 + $0xa0] sm:$0xff]
        %v2321 = vld [vmem:[%s2299 + $0xa8] sm:$0xff]
        %v2322 = vld [vmem:[%s2299 + $0xb0] sm:$0xff]
        %v2323 = vld [vmem:[%s2299 + $0xb8] sm:$0xff]
        %v2324 = vld [vmem:[%s2299 + $0xc0] sm:$0xff]
        %v2325 = vld [vmem:[%s2299 + $0xc8] sm:$0xff]
        %v2326 = vld [vmem:[%s2299 + $0xd0] sm:$0xff]
        %v2327 = vld [vmem:[%s2299 + $0xd8] sm:$0xff]
        %v2329 = vsel %vm1410, %v2297, 0
        %2331 = vmatpush.msra.mxu0 %v2315
        %2332 = vmatpush.msra.mxu0 %v2314
        %2333 = vmatpush.msra.mxu0 %v2313
        %2334 = vmatpush.msra.mxu0 %v2312
        %2335 = vmatpush.msra.mxu0 %v2311
        %2336 = vmatpush.msra.mxu0 %v2310
        %2337 = vmatpush.msra.mxu0 %v2309
        %2338 = vmatpush.msra.mxu0 %v2308
        %2339 = vmatpush.msra.mxu0 %v2307
        %2340 = vmatpush.msra.mxu0 %v2306
        %2341 = vmatpush.msra.mxu0 %v2305
        %2342 = vmatpush.msra.mxu0 %v2304
        %2343 = vmatpush.msra.mxu0 %v2303
        %2344 = vmatpush.msra.mxu0 %v2302
        %2345 = vmatpush.msra.mxu0 %v2301
        %2346 = vmatpush.msra.mxu0 %v2300
        %2347 = vmatmul.f32.gmra.mxu0 %v2277
        %v2348 = vpop.f32.mrf.mxu0
        %v2349 = vadd.f32 0.0, %v2348
        %2350 = vdwg.mxu0
        %2351 = vmatpush.msra.mxu0 0.0
        %2352 = vmatpush.msra.mxu0 0.0
        %2353 = vmatpush.msra.mxu0 0.0
        %2354 = vmatpush.msra.mxu0 0.0
        %2355 = vmatpush.msra.mxu0 %v2327
        %2356 = vmatpush.msra.mxu0 %v2326
        %2357 = vmatpush.msra.mxu0 %v2325
        %2358 = vmatpush.msra.mxu0 %v2324
        %2359 = vmatpush.msra.mxu0 %v2323
        %2360 = vmatpush.msra.mxu0 %v2322
        %2361 = vmatpush.msra.mxu0 %v2321
        %2362 = vmatpush.msra.mxu0 %v2320
        %2363 = vmatpush.msra.mxu0 %v2319
        %2364 = vmatpush.msra.mxu0 %v2318
        %2365 = vmatpush.msra.mxu0 %v2317
        %2366 = vmatpush.msra.mxu0 %v2316
        %2367 = vmatmul.f32.gmra.mxu0 %v2329
        %v2368 = vpop.f32.mrf.mxu0
        %v2369 = vadd.f32 %v2349, %v2368
        %2370 = vdwg.mxu0
        %v2371 = vadd.f32 %v2253, %v2369
        %s2372 = scalar_lea.vmem %s7, 5
        %v2373 = vld [vmem:[%s2372] sm:$0x1]
        %v2375 = vsel %vm1777, %v2373, 0
        %2377 = vmatpush.msra.mxu0 0.0
        %2378 = vmatpush.msra.mxu0 0.0
        %2379 = vmatpush.msra.mxu0 0.0
        %2380 = vmatpush.msra.mxu0 0.0
        %2381 = vmatpush.msra.mxu0 0.0
        %2382 = vmatpush.msra.mxu0 0.0
        %2383 = vmatpush.msra.mxu0 0.0
        %2384 = vmatpush.msra.mxu0 0.0
        %2385 = vmatpush.msra.mxu0 0.0
        %2386 = vmatpush.msra.mxu0 0.0
        %2387 = vmatpush.msra.mxu0 0.0
        %2388 = vmatpush.msra.mxu0 0.0
        %2389 = vmatpush.msra.mxu0 0.0
        %2390 = vmatpush.msra.mxu0 0.0
        %2391 = vmatpush.msra.mxu0 0.0
        %2392 = vmatpush.msra.mxu0 %v1783
        %2393 = vmatmul.f32.gmra.mxu0 %v2375
        %v2394 = vpop.f32.mrf.mxu0
        %v2395 = vadd.f32 0.0, %v2394
        %2396 = vdwg.mxu0
        %2397 = vmatpush.msra.mxu0 0.0
        %2398 = vmatpush.msra.mxu0 0.0
        %2399 = vmatpush.msra.mxu0 0.0
        %2400 = vmatpush.msra.mxu0 0.0
        %2401 = vmatpush.msra.mxu0 0.0
        %2402 = vmatpush.msra.mxu0 0.0
        %2403 = vmatpush.msra.mxu0 0.0
        %2404 = vmatpush.msra.mxu0 0.0
        %2405 = vmatpush.msra.mxu0 0.0
        %2406 = vmatpush.msra.mxu0 0.0
        %2407 = vmatpush.msra.mxu0 0.0
        %2408 = vmatpush.msra.mxu0 0.0
        %2409 = vmatpush.msra.mxu0 0.0
        %2410 = vmatpush.msra.mxu0 0.0
        %2411 = vmatpush.msra.mxu0 0.0
        %2412 = vmatpush.msra.mxu0 %v1786
        %2413 = vmatmul.f32.gmra.mxu0 %v2375
        %v2414 = vpop.f32.mrf.mxu0
        %v2415 = vadd.f32 0.0, %v2414
        %2416 = vdwg.mxu0
        %s2417 = scalar_lea.vmem [#allocation9], 1120
        %v2418 = vld [vmem:[%s2417] sm:$0xff]
        %v2419 = vld [vmem:[%s2417 + $0x8] sm:$0xff]
        %v2420 = vld [vmem:[%s2417 + $0x10] sm:$0xff]
        %v2421 = vld [vmem:[%s2417 + $0x18] sm:$0xff]
        %v2422 = vld [vmem:[%s2417 + $0x20] sm:$0xff]
        %v2423 = vld [vmem:[%s2417 + $0x28] sm:$0xff]
        %v2424 = vld [vmem:[%s2417 + $0x30] sm:$0xff]
        %v2425 = vld [vmem:[%s2417 + $0x38] sm:$0xff]
        %v2426 = vld [vmem:[%s2417 + $0x40] sm:$0xff]
        %v2427 = vld [vmem:[%s2417 + $0x48] sm:$0xff]
        %v2428 = vld [vmem:[%s2417 + $0x50] sm:$0xff]
        %v2429 = vld [vmem:[%s2417 + $0x58] sm:$0xff]
        %v2430 = vld [vmem:[%s2417 + $0x60] sm:$0xff]
        %v2431 = vld [vmem:[%s2417 + $0x68] sm:$0xff]
        %v2432 = vld [vmem:[%s2417 + $0x70] sm:$0xff]
        %v2433 = vld [vmem:[%s2417 + $0x78] sm:$0xff]
        %v2434 = vld [vmem:[%s2417 + $0x80] sm:$0xff]
        %v2435 = vld [vmem:[%s2417 + $0x88] sm:$0xff]
        %v2436 = vld [vmem:[%s2417 + $0x90] sm:$0xff]
        %v2437 = vld [vmem:[%s2417 + $0x98] sm:$0xff]
        %v2438 = vld [vmem:[%s2417 + $0xa0] sm:$0xff]
        %v2439 = vld [vmem:[%s2417 + $0xa8] sm:$0xff]
        %v2440 = vld [vmem:[%s2417 + $0xb0] sm:$0xff]
        %v2441 = vld [vmem:[%s2417 + $0xb8] sm:$0xff]
        %v2442 = vld [vmem:[%s2417 + $0xc0] sm:$0xff]
        %v2443 = vld [vmem:[%s2417 + $0xc8] sm:$0xff]
        %v2444 = vld [vmem:[%s2417 + $0xd0] sm:$0xff]
        %v2445 = vld [vmem:[%s2417 + $0xd8] sm:$0xff]
        %v2447 = vsel %vm1410, %v2415, 0
        %2449 = vmatpush.msra.mxu0 %v2433
        %2450 = vmatpush.msra.mxu0 %v2432
        %2451 = vmatpush.msra.mxu0 %v2431
        %2452 = vmatpush.msra.mxu0 %v2430
        %2453 = vmatpush.msra.mxu0 %v2429
        %2454 = vmatpush.msra.mxu0 %v2428
        %2455 = vmatpush.msra.mxu0 %v2427
        %2456 = vmatpush.msra.mxu0 %v2426
        %2457 = vmatpush.msra.mxu0 %v2425
        %2458 = vmatpush.msra.mxu0 %v2424
        %2459 = vmatpush.msra.mxu0 %v2423
        %2460 = vmatpush.msra.mxu0 %v2422
        %2461 = vmatpush.msra.mxu0 %v2421
        %2462 = vmatpush.msra.mxu0 %v2420
        %2463 = vmatpush.msra.mxu0 %v2419
        %2464 = vmatpush.msra.mxu0 %v2418
        %2465 = vmatmul.f32.gmra.mxu0 %v2395
        %v2466 = vpop.f32.mrf.mxu0
        %v2467 = vadd.f32 0.0, %v2466
        %2468 = vdwg.mxu0
        %2469 = vmatpush.msra.mxu0 0.0
        %2470 = vmatpush.msra.mxu0 0.0
        %2471 = vmatpush.msra.mxu0 0.0
        %2472 = vmatpush.msra.mxu0 0.0
        %2473 = vmatpush.msra.mxu0 %v2445
        %2474 = vmatpush.msra.mxu0 %v2444
        %2475 = vmatpush.msra.mxu0 %v2443
        %2476 = vmatpush.msra.mxu0 %v2442
        %2477 = vmatpush.msra.mxu0 %v2441
        %2478 = vmatpush.msra.mxu0 %v2440
        %2479 = vmatpush.msra.mxu0 %v2439
        %2480 = vmatpush.msra.mxu0 %v2438
        %2481 = vmatpush.msra.mxu0 %v2437
        %2482 = vmatpush.msra.mxu0 %v2436
        %2483 = vmatpush.msra.mxu0 %v2435
        %2484 = vmatpush.msra.mxu0 %v2434
        %2485 = vmatmul.f32.gmra.mxu0 %v2447
        %v2486 = vpop.f32.mrf.mxu0
        %v2487 = vadd.f32 %v2467, %v2486
        %2488 = vdwg.mxu0
        %v2489 = vadd.f32 %v2371, %v2487
        %s2490 = scalar_lea.vmem %s7, 6
        %v2491 = vld [vmem:[%s2490] sm:$0x1]
        %v2493 = vsel %vm1777, %v2491, 0
        %2495 = vmatpush.msra.mxu0 0.0
        %2496 = vmatpush.msra.mxu0 0.0
        %2497 = vmatpush.msra.mxu0 0.0
        %2498 = vmatpush.msra.mxu0 0.0
        %2499 = vmatpush.msra.mxu0 0.0
        %2500 = vmatpush.msra.mxu0 0.0
        %2501 = vmatpush.msra.mxu0 0.0
        %2502 = vmatpush.msra.mxu0 0.0
        %2503 = vmatpush.msra.mxu0 0.0
        %2504 = vmatpush.msra.mxu0 0.0
        %2505 = vmatpush.msra.mxu0 0.0
        %2506 = vmatpush.msra.mxu0 0.0
        %2507 = vmatpush.msra.mxu0 0.0
        %2508 = vmatpush.msra.mxu0 0.0
        %2509 = vmatpush.msra.mxu0 0.0
        %2510 = vmatpush.msra.mxu0 %v1783
        %2511 = vmatmul.f32.gmra.mxu0 %v2493
        %v2512 = vpop.f32.mrf.mxu0
        %v2513 = vadd.f32 0.0, %v2512
        %2514 = vdwg.mxu0
        %2515 = vmatpush.msra.mxu0 0.0
        %2516 = vmatpush.msra.mxu0 0.0
        %2517 = vmatpush.msra.mxu0 0.0
        %2518 = vmatpush.msra.mxu0 0.0
        %2519 = vmatpush.msra.mxu0 0.0
        %2520 = vmatpush.msra.mxu0 0.0
        %2521 = vmatpush.msra.mxu0 0.0
        %2522 = vmatpush.msra.mxu0 0.0
        %2523 = vmatpush.msra.mxu0 0.0
        %2524 = vmatpush.msra.mxu0 0.0
        %2525 = vmatpush.msra.mxu0 0.0
        %2526 = vmatpush.msra.mxu0 0.0
        %2527 = vmatpush.msra.mxu0 0.0
        %2528 = vmatpush.msra.mxu0 0.0
        %2529 = vmatpush.msra.mxu0 0.0
        %2530 = vmatpush.msra.mxu0 %v1786
        %2531 = vmatmul.f32.gmra.mxu0 %v2493
        %v2532 = vpop.f32.mrf.mxu0
        %v2533 = vadd.f32 0.0, %v2532
        %2534 = vdwg.mxu0
        %s2535 = scalar_lea.vmem [#allocation9], 1344
        %v2536 = vld [vmem:[%s2535] sm:$0xff]
        %v2537 = vld [vmem:[%s2535 + $0x8] sm:$0xff]
        %v2538 = vld [vmem:[%s2535 + $0x10] sm:$0xff]
        %v2539 = vld [vmem:[%s2535 + $0x18] sm:$0xff]
        %v2540 = vld [vmem:[%s2535 + $0x20] sm:$0xff]
        %v2541 = vld [vmem:[%s2535 + $0x28] sm:$0xff]
        %v2542 = vld [vmem:[%s2535 + $0x30] sm:$0xff]
        %v2543 = vld [vmem:[%s2535 + $0x38] sm:$0xff]
        %v2544 = vld [vmem:[%s2535 + $0x40] sm:$0xff]
        %v2545 = vld [vmem:[%s2535 + $0x48] sm:$0xff]
        %v2546 = vld [vmem:[%s2535 + $0x50] sm:$0xff]
        %v2547 = vld [vmem:[%s2535 + $0x58] sm:$0xff]
        %v2548 = vld [vmem:[%s2535 + $0x60] sm:$0xff]
        %v2549 = vld [vmem:[%s2535 + $0x68] sm:$0xff]
        %v2550 = vld [vmem:[%s2535 + $0x70] sm:$0xff]
        %v2551 = vld [vmem:[%s2535 + $0x78] sm:$0xff]
        %v2552 = vld [vmem:[%s2535 + $0x80] sm:$0xff]
        %v2553 = vld [vmem:[%s2535 + $0x88] sm:$0xff]
        %v2554 = vld [vmem:[%s2535 + $0x90] sm:$0xff]
        %v2555 = vld [vmem:[%s2535 + $0x98] sm:$0xff]
        %v2556 = vld [vmem:[%s2535 + $0xa0] sm:$0xff]
        %v2557 = vld [vmem:[%s2535 + $0xa8] sm:$0xff]
        %v2558 = vld [vmem:[%s2535 + $0xb0] sm:$0xff]
        %v2559 = vld [vmem:[%s2535 + $0xb8] sm:$0xff]
        %v2560 = vld [vmem:[%s2535 + $0xc0] sm:$0xff]
        %v2561 = vld [vmem:[%s2535 + $0xc8] sm:$0xff]
        %v2562 = vld [vmem:[%s2535 + $0xd0] sm:$0xff]
        %v2563 = vld [vmem:[%s2535 + $0xd8] sm:$0xff]
        %v2565 = vsel %vm1410, %v2533, 0
        %2567 = vmatpush.msra.mxu0 %v2551
        %2568 = vmatpush.msra.mxu0 %v2550
        %2569 = vmatpush.msra.mxu0 %v2549
        %2570 = vmatpush.msra.mxu0 %v2548
        %2571 = vmatpush.msra.mxu0 %v2547
        %2572 = vmatpush.msra.mxu0 %v2546
        %2573 = vmatpush.msra.mxu0 %v2545
        %2574 = vmatpush.msra.mxu0 %v2544
        %2575 = vmatpush.msra.mxu0 %v2543
        %2576 = vmatpush.msra.mxu0 %v2542
        %2577 = vmatpush.msra.mxu0 %v2541
        %2578 = vmatpush.msra.mxu0 %v2540
        %2579 = vmatpush.msra.mxu0 %v2539
        %2580 = vmatpush.msra.mxu0 %v2538
        %2581 = vmatpush.msra.mxu0 %v2537
        %2582 = vmatpush.msra.mxu0 %v2536
        %2583 = vmatmul.f32.gmra.mxu0 %v2513
        %v2584 = vpop.f32.mrf.mxu0
        %v2585 = vadd.f32 0.0, %v2584
        %2586 = vdwg.mxu0
        %2587 = vmatpush.msra.mxu0 0.0
        %2588 = vmatpush.msra.mxu0 0.0
        %2589 = vmatpush.msra.mxu0 0.0
        %2590 = vmatpush.msra.mxu0 0.0
        %2591 = vmatpush.msra.mxu0 %v2563
        %2592 = vmatpush.msra.mxu0 %v2562
        %2593 = vmatpush.msra.mxu0 %v2561
        %2594 = vmatpush.msra.mxu0 %v2560
        %2595 = vmatpush.msra.mxu0 %v2559
        %2596 = vmatpush.msra.mxu0 %v2558
        %2597 = vmatpush.msra.mxu0 %v2557
        %2598 = vmatpush.msra.mxu0 %v2556
        %2599 = vmatpush.msra.mxu0 %v2555
        %2600 = vmatpush.msra.mxu0 %v2554
        %2601 = vmatpush.msra.mxu0 %v2553
        %2602 = vmatpush.msra.mxu0 %v2552
        %2603 = vmatmul.f32.gmra.mxu0 %v2565
        %v2604 = vpop.f32.mrf.mxu0
        %v2605 = vadd.f32 %v2585, %v2604
        %2606 = vdwg.mxu0
        %v2607 = vadd.f32 %v2489, %v2605
        %v2608 = vld [vmem:[#allocation11] sm:$0xff]
        %v2609 = vld [vmem:[#allocation11 + $0x8] sm:$0xff]
        %vm2610 = vcmask 130048
        %v2612 = vsel %vm2610, %v2607, 0
        %2614 = vmatpush.msra.mxu0 0.0
        %2615 = vmatpush.msra.mxu0 0.0
        %2616 = vmatpush.msra.mxu0 0.0
        %2617 = vmatpush.msra.mxu0 0.0
        %2618 = vmatpush.msra.mxu0 0.0
        %2619 = vmatpush.msra.mxu0 0.0
        %2620 = vmatpush.msra.mxu0 0.0
        %2621 = vmatpush.msra.mxu0 0.0
        %2622 = vmatpush.msra.mxu0 0.0
        %2623 = vmatpush.msra.mxu0 0.0
        %2624 = vmatpush.msra.mxu0 0.0
        %2625 = vmatpush.msra.mxu0 0.0
        %2626 = vmatpush.msra.mxu0 0.0
        %2627 = vmatpush.msra.mxu0 0.0
        %2628 = vmatpush.msra.mxu0 %v2609
        %2629 = vmatpush.msra.mxu0 %v2608
        %2630 = vmatmul.f32.gmra.mxu0 %v2612
        %v2631 = vpop.f32.mrf.mxu0
        %v2632 = vadd.f32 0.0, %v2631
        %2633 = vdwg.mxu0
        %vm2634 = vcmask 253952
        %v2635 = vsel %vm2634, %v2632, -inf
        %2636 = vmax.xlane.f32.xlu0 %v2635
        %v2637 = vpop.xlane.xlu0 %2636
        %v2638 = vsub.f32 %v2632, %v2637
        %v2639 = vmul.f32 %v2638, 1.442695
        %v2640 = vpow.pop %v2639
        %v2641 = vsel %vm2634, %v2640, 0.0
        %2642 = vadd.xlane.f32.xlu0 %v2641
        %v2643 = vpop.xlane.xlu0 %2642
        %v2644 = vrcp.pop %v2643
        %v2645 = vmul.f32 %v2643, %v2644
        %v2646 = vsub.f32 1.0, %v2645
        %v2647 = vmul.f32 %v2644, %v2646
        %v2648 = vadd.f32 %v2644, %v2647
        %vm2649 = vweird.f32 %v2643
        %vm2650 = vweird.f32 %v2644
        %vm2651 = vmor %vm2649, %vm2650
        %v2652 = vsel %vm2651, %v2644, %v2648
        %v2653 = vand.u32 2147483647, %v2643
        %vm2654 = vcmp.eq.f32.partialorder %v2653, 8.507059e+37
        %v2655 = vand.u32 %v2643, 2147483648
        %v2656 = vor.u32 1.1754944e-38, %v2655
        %v2657 = vsel %vm2654, %v2656, %v2652
        %v2658 = vmul.f32 %v2640, %v2657
        %v2659 = vsub.f32 %v2658, 0.0025
        %v2660 = vmax.f32 %v2659, 0.0
        %v2661 = vmul.f32 %v2660, %v2658
        %v2662 = vand.u32 2147483647, %v2659
        %v2663 = vadd.f32 %v2662, 1e-12
        %v2664 = vrcp.pop %v2663
        %v2665 = vmul.f32 %v2663, %v2664
        %v2666 = vsub.f32 1.0, %v2665
        %v2667 = vmul.f32 %v2664, %v2666
        %v2668 = vadd.f32 %v2664, %v2667
        %vm2669 = vweird.f32 %v2663
        %vm2670 = vweird.f32 %v2664
        %vm2671 = vmor %vm2669, %vm2670
        %v2672 = vsel %vm2671, %v2664, %v2668
        %v2673 = vand.u32 2147483647, %v2663
        %vm2674 = vcmp.eq.f32.partialorder %v2673, 8.507059e+37
        %v2675 = vand.u32 %v2663, 2147483648
        %v2676 = vor.u32 1.1754944e-38, %v2675
        %v2677 = vsel %vm2674, %v2676, %v2672
        %v2678 = vmul.f32 %v2661, %v2677
        %v2679 = vsel %vm2634, %v2678, 0.0
        %2680 = vadd.xlane.f32.xlu0 %v2679
        %v2681 = vpop.xlane.xlu0 %2680
        %v2682 = vmax.f32 %v2681, 1e-12
        %v2683 = vrcp.pop %v2682
        %v2684 = vmul.f32 %v2682, %v2683
        %v2685 = vsub.f32 1.0, %v2684
        %v2686 = vmul.f32 %v2683, %v2685
        %v2687 = vadd.f32 %v2683, %v2686
        %vm2688 = vweird.f32 %v2682
        %vm2689 = vweird.f32 %v2683
        %vm2690 = vmor %vm2688, %vm2689
        %v2691 = vsel %vm2690, %v2683, %v2687
        %v2692 = vand.u32 2147483647, %v2682
        %vm2693 = vcmp.eq.f32.partialorder %v2692, 8.507059e+37
        %v2694 = vand.u32 %v2682, 2147483648
        %v2695 = vor.u32 1.1754944e-38, %v2694
        %v2696 = vsel %vm2693, %v2695, %v2691
        %v2697 = vmul.f32 %v2678, %v2696
        %v2698 = vld [vmem:[#allocation12] sm:$0xff]
        %v2699 = vld [vmem:[#allocation12 + $0x8] sm:$0xff]
        %v2700 = vld [vmem:[#allocation12 + $0x10] sm:$0xff]
        %v2701 = vld [vmem:[#allocation12 + $0x18] sm:$0xff]
        %v2702 = vld [vmem:[#allocation12 + $0x20] sm:$0xff]
        %v2703 = vld [vmem:[#allocation12 + $0x28] sm:$0xff]
        %v2704 = vld [vmem:[#allocation12 + $0x30] sm:$0xff]
        %v2705 = vld [vmem:[#allocation12 + $0x38] sm:$0xff]
        %v2706 = vld [vmem:[%s12] sm:$0x3]
        %v2708 = vperm.slane %v2706, 0
        %v2709 = vperm.slane %v2706, 1
        %vm2712 = vcmask 261120
        %v2714 = vsel %vm2712, %v2697, 0
        %2716 = vmatpush.msra.mxu0 0.0
        %2717 = vmatpush.msra.mxu0 0.0
        %2718 = vmatpush.msra.mxu0 0.0
        %2719 = vmatpush.msra.mxu0 0.0
        %2720 = vmatpush.msra.mxu0 0.0
        %2721 = vmatpush.msra.mxu0 0.0
        %2722 = vmatpush.msra.mxu0 0.0
        %2723 = vmatpush.msra.mxu0 0.0
        %2724 = vmatpush.msra.mxu0 0.0
        %2725 = vmatpush.msra.mxu0 0.0
        %2726 = vmatpush.msra.mxu0 0.0
        %2727 = vmatpush.msra.mxu0 0.0
        %2728 = vmatpush.msra.mxu0 %v2704
        %2729 = vmatpush.msra.mxu0 %v2702
        %2730 = vmatpush.msra.mxu0 %v2700
        %2731 = vmatpush.msra.mxu0 %v2698
        %2732 = vmatmul.f32.gmra.mxu0 %v2714
        %v2733 = vpop.f32.mrf.mxu0
        %v2734 = vadd.f32 %v2708, %v2733
        %2735 = vdwg.mxu0
        %2736 = vmatpush.msra.mxu0 0.0
        %2737 = vmatpush.msra.mxu0 0.0
        %2738 = vmatpush.msra.mxu0 0.0
        %2739 = vmatpush.msra.mxu0 0.0
        %2740 = vmatpush.msra.mxu0 0.0
        %2741 = vmatpush.msra.mxu0 0.0
        %2742 = vmatpush.msra.mxu0 0.0
        %2743 = vmatpush.msra.mxu0 0.0
        %2744 = vmatpush.msra.mxu0 0.0
        %2745 = vmatpush.msra.mxu0 0.0
        %2746 = vmatpush.msra.mxu0 0.0
        %2747 = vmatpush.msra.mxu0 0.0
        %2748 = vmatpush.msra.mxu0 %v2705
        %2749 = vmatpush.msra.mxu0 %v2703
        %2750 = vmatpush.msra.mxu0 %v2701
        %2751 = vmatpush.msra.mxu0 %v2699
        %2752 = vmatmul.f32.gmra.mxu0 %v2714
        %v2753 = vpop.f32.mrf.mxu0
        %v2754 = vadd.f32 %v2709, %v2753
        %2755 = vdwg.mxu0
        %v2756 = vmax.f32 %v2734, 0.0
        %v2757 = vmax.f32 %v2754, 0.0
        %v2758 = vld [vmem:[%s13] sm:$0x7f]
        %s2759 = scalar_lea.vmem [#allocation12], 64
        %v2760 = vld [vmem:[%s2759] sm:$0xff]
        %v2761 = vld [vmem:[%s2759 + $0x8] sm:$0xff]
        %v2762 = vld [vmem:[%s2759 + $0x10] sm:$0xff]
        %v2763 = vld [vmem:[%s2759 + $0x18] sm:$0xff]
        %v2764 = vld [vmem:[%s2759 + $0x20] sm:$0xff]
        %v2765 = vld [vmem:[%s2759 + $0x28] sm:$0xff]
        %v2766 = vld [vmem:[%s2759 + $0x30] sm:$0xff]
        %v2767 = vld [vmem:[%s2759 + $0x38] sm:$0xff]
        %s2768 = scalar_lea.vmem %s12, 2
        %v2769 = vld [vmem:[%s2768] sm:$0x3]
        %v2771 = vperm.slane %v2769, 0
        %v2772 = vperm.slane %v2769, 1
        %2775 = vmatpush.msra.mxu0 0.0
        %2776 = vmatpush.msra.mxu0 0.0
        %2777 = vmatpush.msra.mxu0 0.0
        %2778 = vmatpush.msra.mxu0 0.0
        %2779 = vmatpush.msra.mxu0 0.0
        %2780 = vmatpush.msra.mxu0 0.0
        %2781 = vmatpush.msra.mxu0 0.0
        %2782 = vmatpush.msra.mxu0 0.0
        %2783 = vmatpush.msra.mxu0 0.0
        %2784 = vmatpush.msra.mxu0 0.0
        %2785 = vmatpush.msra.mxu0 0.0
        %2786 = vmatpush.msra.mxu0 0.0
        %2787 = vmatpush.msra.mxu0 %v2766
        %2788 = vmatpush.msra.mxu0 %v2764
        %2789 = vmatpush.msra.mxu0 %v2762
        %2790 = vmatpush.msra.mxu0 %v2760
        %2791 = vmatmul.f32.gmra.mxu0 %v2714
        %v2792 = vpop.f32.mrf.mxu0
        %v2793 = vadd.f32 %v2771, %v2792
        %2794 = vdwg.mxu0
        %2795 = vmatpush.msra.mxu0 0.0
        %2796 = vmatpush.msra.mxu0 0.0
        %2797 = vmatpush.msra.mxu0 0.0
        %2798 = vmatpush.msra.mxu0 0.0
        %2799 = vmatpush.msra.mxu0 0.0
        %2800 = vmatpush.msra.mxu0 0.0
        %2801 = vmatpush.msra.mxu0 0.0
        %2802 = vmatpush.msra.mxu0 0.0
        %2803 = vmatpush.msra.mxu0 0.0
        %2804 = vmatpush.msra.mxu0 0.0
        %2805 = vmatpush.msra.mxu0 0.0
        %2806 = vmatpush.msra.mxu0 0.0
        %2807 = vmatpush.msra.mxu0 %v2767
        %2808 = vmatpush.msra.mxu0 %v2765
        %2809 = vmatpush.msra.mxu0 %v2763
        %2810 = vmatpush.msra.mxu0 %v2761
        %2811 = vmatmul.f32.gmra.mxu0 %v2714
        %v2812 = vpop.f32.mrf.mxu0
        %v2813 = vadd.f32 %v2772, %v2812
        %2814 = vdwg.mxu0
        %v2815 = vmax.f32 %v2793, 0.0
        %v2816 = vmax.f32 %v2813, 0.0
        %s2817 = scalar_lea.vmem %s13, 8
        %v2818 = vld [vmem:[%s2817] sm:$0x7f]
        %vm2819 = vcmask 7168
        %v2821 = vsel %vm2819, %v2818, 0
        %vm2823 = vcmask 1040384
        %v2825 = vsel %vm2823, %v2815, 0
        %v2828 = vsel %vm2823, %v2816, 0
        %2830 = vmatpush.msra.mxu0 0.0
        %2831 = vmatpush.msra.mxu0 0.0
        %2832 = vmatpush.msra.mxu0 0.0
        %2833 = vmatpush.msra.mxu0 0.0
        %2834 = vmatpush.msra.mxu0 0.0
        %2835 = vmatpush.msra.mxu0 0.0
        %2836 = vmatpush.msra.mxu0 0.0
        %2837 = vmatpush.msra.mxu0 0.0
        %2838 = vmatpush.msra.mxu0 0.0
        %2839 = vmatpush.msra.mxu0 0.0
        %2840 = vmatpush.msra.mxu0 0.0
        %2841 = vmatpush.msra.mxu0 0.0
        %2842 = vmatpush.msra.mxu0 0.0
        %2843 = vmatpush.msra.mxu0 0.0
        %2844 = vmatpush.msra.mxu0 0.0
        %2845 = vmatpush.msra.mxu0 %v2825
        %2846 = vmatmul.f32.gmra.mxu0 %v2821
        %v2847 = vpop.f32.mrf.mxu0
        %v2848 = vadd.f32 0.0, %v2847
        %2849 = vdwg.mxu0
        %2850 = vmatpush.msra.mxu0 0.0
        %2851 = vmatpush.msra.mxu0 0.0
        %2852 = vmatpush.msra.mxu0 0.0
        %2853 = vmatpush.msra.mxu0 0.0
        %2854 = vmatpush.msra.mxu0 0.0
        %2855 = vmatpush.msra.mxu0 0.0
        %2856 = vmatpush.msra.mxu0 0.0
        %2857 = vmatpush.msra.mxu0 0.0
        %2858 = vmatpush.msra.mxu0 0.0
        %2859 = vmatpush.msra.mxu0 0.0
        %2860 = vmatpush.msra.mxu0 0.0
        %2861 = vmatpush.msra.mxu0 0.0
        %2862 = vmatpush.msra.mxu0 0.0
        %2863 = vmatpush.msra.mxu0 0.0
        %2864 = vmatpush.msra.mxu0 0.0
        %2865 = vmatpush.msra.mxu0 %v2828
        %2866 = vmatmul.f32.gmra.mxu0 %v2821
        %v2867 = vpop.f32.mrf.mxu0
        %v2868 = vadd.f32 0.0, %v2867
        %2869 = vdwg.mxu0
        %v2871 = vsel %vm2819, %v2758, 0
        %v2874 = vsel %vm2823, %v2756, 0
        %v2877 = vsel %vm2823, %v2757, 0
        %2879 = vmatpush.msra.mxu0 0.0
        %2880 = vmatpush.msra.mxu0 0.0
        %2881 = vmatpush.msra.mxu0 0.0
        %2882 = vmatpush.msra.mxu0 0.0
        %2883 = vmatpush.msra.mxu0 0.0
        %2884 = vmatpush.msra.mxu0 0.0
        %2885 = vmatpush.msra.mxu0 0.0
        %2886 = vmatpush.msra.mxu0 0.0
        %2887 = vmatpush.msra.mxu0 0.0
        %2888 = vmatpush.msra.mxu0 0.0
        %2889 = vmatpush.msra.mxu0 0.0
        %2890 = vmatpush.msra.mxu0 0.0
        %2891 = vmatpush.msra.mxu0 0.0
        %2892 = vmatpush.msra.mxu0 0.0
        %2893 = vmatpush.msra.mxu0 0.0
        %2894 = vmatpush.msra.mxu0 %v2874
        %2895 = vmatmul.f32.gmra.mxu0 %v2871
        %v2896 = vpop.f32.mrf.mxu0
        %v2897 = vadd.f32 %v2848, %v2896
        %2898 = vdwg.mxu0
        %2899 = vmatpush.msra.mxu0 0.0
        %2900 = vmatpush.msra.mxu0 0.0
        %2901 = vmatpush.msra.mxu0 0.0
        %2902 = vmatpush.msra.mxu0 0.0
        %2903 = vmatpush.msra.mxu0 0.0
        %2904 = vmatpush.msra.mxu0 0.0
        %2905 = vmatpush.msra.mxu0 0.0
        %2906 = vmatpush.msra.mxu0 0.0
        %2907 = vmatpush.msra.mxu0 0.0
        %2908 = vmatpush.msra.mxu0 0.0
        %2909 = vmatpush.msra.mxu0 0.0
        %2910 = vmatpush.msra.mxu0 0.0
        %2911 = vmatpush.msra.mxu0 0.0
        %2912 = vmatpush.msra.mxu0 0.0
        %2913 = vmatpush.msra.mxu0 0.0
        %2914 = vmatpush.msra.mxu0 %v2877
        %2915 = vmatmul.f32.gmra.mxu0 %v2871
        %v2916 = vpop.f32.mrf.mxu0
        %v2917 = vadd.f32 %v2868, %v2916
        %2918 = vdwg.mxu0
        %s2919 = scalar_lea.vmem [#allocation12], 128
        %v2920 = vld [vmem:[%s2919] sm:$0xff]
        %v2921 = vld [vmem:[%s2919 + $0x8] sm:$0xff]
        %v2922 = vld [vmem:[%s2919 + $0x10] sm:$0xff]
        %v2923 = vld [vmem:[%s2919 + $0x18] sm:$0xff]
        %v2924 = vld [vmem:[%s2919 + $0x20] sm:$0xff]
        %v2925 = vld [vmem:[%s2919 + $0x28] sm:$0xff]
        %v2926 = vld [vmem:[%s2919 + $0x30] sm:$0xff]
        %v2927 = vld [vmem:[%s2919 + $0x38] sm:$0xff]
        %s2928 = scalar_lea.vmem %s12, 4
        %v2929 = vld [vmem:[%s2928] sm:$0x3]
        %v2931 = vperm.slane %v2929, 0
        %v2932 = vperm.slane %v2929, 1
        %2935 = vmatpush.msra.mxu0 0.0
        %2936 = vmatpush.msra.mxu0 0.0
        %2937 = vmatpush.msra.mxu0 0.0
        %2938 = vmatpush.msra.mxu0 0.0
        %2939 = vmatpush.msra.mxu0 0.0
        %2940 = vmatpush.msra.mxu0 0.0
        %2941 = vmatpush.msra.mxu0 0.0
        %2942 = vmatpush.msra.mxu0 0.0
        %2943 = vmatpush.msra.mxu0 0.0
        %2944 = vmatpush.msra.mxu0 0.0
        %2945 = vmatpush.msra.mxu0 0.0
        %2946 = vmatpush.msra.mxu0 0.0
        %2947 = vmatpush.msra.mxu0 %v2926
        %2948 = vmatpush.msra.mxu0 %v2924
        %2949 = vmatpush.msra.mxu0 %v2922
        %2950 = vmatpush.msra.mxu0 %v2920
        %2951 = vmatmul.f32.gmra.mxu0 %v2714
        %v2952 = vpop.f32.mrf.mxu0
        %v2953 = vadd.f32 %v2931, %v2952
        %2954 = vdwg.mxu0
        %2955 = vmatpush.msra.mxu0 0.0
        %2956 = vmatpush.msra.mxu0 0.0
        %2957 = vmatpush.msra.mxu0 0.0
        %2958 = vmatpush.msra.mxu0 0.0
        %2959 = vmatpush.msra.mxu0 0.0
        %2960 = vmatpush.msra.mxu0 0.0
        %2961 = vmatpush.msra.mxu0 0.0
        %2962 = vmatpush.msra.mxu0 0.0
        %2963 = vmatpush.msra.mxu0 0.0
        %2964 = vmatpush.msra.mxu0 0.0
        %2965 = vmatpush.msra.mxu0 0.0
        %2966 = vmatpush.msra.mxu0 0.0
        %2967 = vmatpush.msra.mxu0 %v2927
        %2968 = vmatpush.msra.mxu0 %v2925
        %2969 = vmatpush.msra.mxu0 %v2923
        %2970 = vmatpush.msra.mxu0 %v2921
        %2971 = vmatmul.f32.gmra.mxu0 %v2714
        %v2972 = vpop.f32.mrf.mxu0
        %v2973 = vadd.f32 %v2932, %v2972
        %2974 = vdwg.mxu0
        %v2975 = vmax.f32 %v2953, 0.0
        %v2976 = vmax.f32 %v2973, 0.0
        %s2977 = scalar_lea.vmem %s13, 16
        %v2978 = vld [vmem:[%s2977] sm:$0x7f]
        %v2980 = vsel %vm2819, %v2978, 0
        %v2983 = vsel %vm2823, %v2975, 0
        %v2986 = vsel %vm2823, %v2976, 0
        %2988 = vmatpush.msra.mxu0 0.0
        %2989 = vmatpush.msra.mxu0 0.0
        %2990 = vmatpush.msra.mxu0 0.0
        %2991 = vmatpush.msra.mxu0 0.0
        %2992 = vmatpush.msra.mxu0 0.0
        %2993 = vmatpush.msra.mxu0 0.0
        %2994 = vmatpush.msra.mxu0 0.0
        %2995 = vmatpush.msra.mxu0 0.0
        %2996 = vmatpush.msra.mxu0 0.0
        %2997 = vmatpush.msra.mxu0 0.0
        %2998 = vmatpush.msra.mxu0 0.0
        %2999 = vmatpush.msra.mxu0 0.0
        %3000 = vmatpush.msra.mxu0 0.0
        %3001 = vmatpush.msra.mxu0 0.0
        %3002 = vmatpush.msra.mxu0 0.0
        %3003 = vmatpush.msra.mxu0 %v2983
        %3004 = vmatmul.f32.gmra.mxu0 %v2980
        %v3005 = vpop.f32.mrf.mxu0
        %v3006 = vadd.f32 0.0, %v3005
        %3007 = vdwg.mxu0
        %3008 = vmatpush.msra.mxu0 0.0
        %3009 = vmatpush.msra.mxu0 0.0
        %3010 = vmatpush.msra.mxu0 0.0
        %3011 = vmatpush.msra.mxu0 0.0
        %3012 = vmatpush.msra.mxu0 0.0
        %3013 = vmatpush.msra.mxu0 0.0
        %3014 = vmatpush.msra.mxu0 0.0
        %3015 = vmatpush.msra.mxu0 0.0
        %3016 = vmatpush.msra.mxu0 0.0
        %3017 = vmatpush.msra.mxu0 0.0
        %3018 = vmatpush.msra.mxu0 0.0
        %3019 = vmatpush.msra.mxu0 0.0
        %3020 = vmatpush.msra.mxu0 0.0
        %3021 = vmatpush.msra.mxu0 0.0
        %3022 = vmatpush.msra.mxu0 0.0
        %3023 = vmatpush.msra.mxu0 %v2986
        %3024 = vmatmul.f32.gmra.mxu0 %v2980
        %v3025 = vpop.f32.mrf.mxu0
        %v3026 = vadd.f32 0.0, %v3025
        %3027 = vdwg.mxu0
        %v3028 = vadd.f32 %v2897, %v3006
        %v3029 = vadd.f32 %v2917, %v3026
        %s3030 = scalar_lea.vmem [#allocation12], 192
        %v3031 = vld [vmem:[%s3030] sm:$0xff]
        %v3032 = vld [vmem:[%s3030 + $0x8] sm:$0xff]
        %v3033 = vld [vmem:[%s3030 + $0x10] sm:$0xff]
        %v3034 = vld [vmem:[%s3030 + $0x18] sm:$0xff]
        %v3035 = vld [vmem:[%s3030 + $0x20] sm:$0xff]
        %v3036 = vld [vmem:[%s3030 + $0x28] sm:$0xff]
        %v3037 = vld [vmem:[%s3030 + $0x30] sm:$0xff]
        %v3038 = vld [vmem:[%s3030 + $0x38] sm:$0xff]
        %s3039 = scalar_lea.vmem %s12, 6
        %v3040 = vld [vmem:[%s3039] sm:$0x3]
        %v3042 = vperm.slane %v3040, 0
        %v3043 = vperm.slane %v3040, 1
        %3046 = vmatpush.msra.mxu0 0.0
        %3047 = vmatpush.msra.mxu0 0.0
        %3048 = vmatpush.msra.mxu0 0.0
        %3049 = vmatpush.msra.mxu0 0.0
        %3050 = vmatpush.msra.mxu0 0.0
        %3051 = vmatpush.msra.mxu0 0.0
        %3052 = vmatpush.msra.mxu0 0.0
        %3053 = vmatpush.msra.mxu0 0.0
        %3054 = vmatpush.msra.mxu0 0.0
        %3055 = vmatpush.msra.mxu0 0.0
        %3056 = vmatpush.msra.mxu0 0.0
        %3057 = vmatpush.msra.mxu0 0.0
        %3058 = vmatpush.msra.mxu0 %v3037
        %3059 = vmatpush.msra.mxu0 %v3035
        %3060 = vmatpush.msra.mxu0 %v3033
        %3061 = vmatpush.msra.mxu0 %v3031
        %3062 = vmatmul.f32.gmra.mxu0 %v2714
        %v3063 = vpop.f32.mrf.mxu0
        %v3064 = vadd.f32 %v3042, %v3063
        %3065 = vdwg.mxu0
        %3066 = vmatpush.msra.mxu0 0.0
        %3067 = vmatpush.msra.mxu0 0.0
        %3068 = vmatpush.msra.mxu0 0.0
        %3069 = vmatpush.msra.mxu0 0.0
        %3070 = vmatpush.msra.mxu0 0.0
        %3071 = vmatpush.msra.mxu0 0.0
        %3072 = vmatpush.msra.mxu0 0.0
        %3073 = vmatpush.msra.mxu0 0.0
        %3074 = vmatpush.msra.mxu0 0.0
        %3075 = vmatpush.msra.mxu0 0.0
        %3076 = vmatpush.msra.mxu0 0.0
        %3077 = vmatpush.msra.mxu0 0.0
        %3078 = vmatpush.msra.mxu0 %v3038
        %3079 = vmatpush.msra.mxu0 %v3036
        %3080 = vmatpush.msra.mxu0 %v3034
        %3081 = vmatpush.msra.mxu0 %v3032
        %3082 = vmatmul.f32.gmra.mxu0 %v2714
        %v3083 = vpop.f32.mrf.mxu0
        %v3084 = vadd.f32 %v3043, %v3083
        %3085 = vdwg.mxu0
        %v3086 = vmax.f32 %v3064, 0.0
        %v3087 = vmax.f32 %v3084, 0.0
        %s3088 = scalar_lea.vmem %s13, 24
        %v3089 = vld [vmem:[%s3088] sm:$0x7f]
        %v3091 = vsel %vm2819, %v3089, 0
        %v3094 = vsel %vm2823, %v3086, 0
        %v3097 = vsel %vm2823, %v3087, 0
        %3099 = vmatpush.msra.mxu0 0.0
        %3100 = vmatpush.msra.mxu0 0.0
        %3101 = vmatpush.msra.mxu0 0.0
        %3102 = vmatpush.msra.mxu0 0.0
        %3103 = vmatpush.msra.mxu0 0.0
        %3104 = vmatpush.msra.mxu0 0.0
        %3105 = vmatpush.msra.mxu0 0.0
        %3106 = vmatpush.msra.mxu0 0.0
        %3107 = vmatpush.msra.mxu0 0.0
        %3108 = vmatpush.msra.mxu0 0.0
        %3109 = vmatpush.msra.mxu0 0.0
        %3110 = vmatpush.msra.mxu0 0.0
        %3111 = vmatpush.msra.mxu0 0.0
        %3112 = vmatpush.msra.mxu0 0.0
        %3113 = vmatpush.msra.mxu0 0.0
        %3114 = vmatpush.msra.mxu0 %v3094
        %3115 = vmatmul.f32.gmra.mxu0 %v3091
        %v3116 = vpop.f32.mrf.mxu0
        %v3117 = vadd.f32 0.0, %v3116
        %3118 = vdwg.mxu0
        %3119 = vmatpush.msra.mxu0 0.0
        %3120 = vmatpush.msra.mxu0 0.0
        %3121 = vmatpush.msra.mxu0 0.0
        %3122 = vmatpush.msra.mxu0 0.0
        %3123 = vmatpush.msra.mxu0 0.0
        %3124 = vmatpush.msra.mxu0 0.0
        %3125 = vmatpush.msra.mxu0 0.0
        %3126 = vmatpush.msra.mxu0 0.0
        %3127 = vmatpush.msra.mxu0 0.0
        %3128 = vmatpush.msra.mxu0 0.0
        %3129 = vmatpush.msra.mxu0 0.0
        %3130 = vmatpush.msra.mxu0 0.0
        %3131 = vmatpush.msra.mxu0 0.0
        %3132 = vmatpush.msra.mxu0 0.0
        %3133 = vmatpush.msra.mxu0 0.0
        %3134 = vmatpush.msra.mxu0 %v3097
        %3135 = vmatmul.f32.gmra.mxu0 %v3091
        %v3136 = vpop.f32.mrf.mxu0
        %v3137 = vadd.f32 0.0, %v3136
        %3138 = vdwg.mxu0
        %v3139 = vadd.f32 %v3028, %v3117
        %v3140 = vadd.f32 %v3029, %v3137
        %s3141 = scalar_lea.vmem [#allocation12], 256
        %v3142 = vld [vmem:[%s3141] sm:$0xff]
        %v3143 = vld [vmem:[%s3141 + $0x8] sm:$0xff]
        %v3144 = vld [vmem:[%s3141 + $0x10] sm:$0xff]
        %v3145 = vld [vmem:[%s3141 + $0x18] sm:$0xff]
        %v3146 = vld [vmem:[%s3141 + $0x20] sm:$0xff]
        %v3147 = vld [vmem:[%s3141 + $0x28] sm:$0xff]
        %v3148 = vld [vmem:[%s3141 + $0x30] sm:$0xff]
        %v3149 = vld [vmem:[%s3141 + $0x38] sm:$0xff]
        %s3150 = scalar_lea.vmem %s12, 8
        %v3151 = vld [vmem:[%s3150] sm:$0x3]
        %v3153 = vperm.slane %v3151, 0
        %v3154 = vperm.slane %v3151, 1
        %3157 = vmatpush.msra.mxu0 0.0
        %3158 = vmatpush.msra.mxu0 0.0
        %3159 = vmatpush.msra.mxu0 0.0
        %3160 = vmatpush.msra.mxu0 0.0
        %3161 = vmatpush.msra.mxu0 0.0
        %3162 = vmatpush.msra.mxu0 0.0
        %3163 = vmatpush.msra.mxu0 0.0
        %3164 = vmatpush.msra.mxu0 0.0
        %3165 = vmatpush.msra.mxu0 0.0
        %3166 = vmatpush.msra.mxu0 0.0
        %3167 = vmatpush.msra.mxu0 0.0
        %3168 = vmatpush.msra.mxu0 0.0
        %3169 = vmatpush.msra.mxu0 %v3148
        %3170 = vmatpush.msra.mxu0 %v3146
        %3171 = vmatpush.msra.mxu0 %v3144
        %3172 = vmatpush.msra.mxu0 %v3142
        %3173 = vmatmul.f32.gmra.mxu0 %v2714
        %v3174 = vpop.f32.mrf.mxu0
        %v3175 = vadd.f32 %v3153, %v3174
        %3176 = vdwg.mxu0
        %3177 = vmatpush.msra.mxu0 0.0
        %3178 = vmatpush.msra.mxu0 0.0
        %3179 = vmatpush.msra.mxu0 0.0
        %3180 = vmatpush.msra.mxu0 0.0
        %3181 = vmatpush.msra.mxu0 0.0
        %3182 = vmatpush.msra.mxu0 0.0
        %3183 = vmatpush.msra.mxu0 0.0
        %3184 = vmatpush.msra.mxu0 0.0
        %3185 = vmatpush.msra.mxu0 0.0
        %3186 = vmatpush.msra.mxu0 0.0
        %3187 = vmatpush.msra.mxu0 0.0
        %3188 = vmatpush.msra.mxu0 0.0
        %3189 = vmatpush.msra.mxu0 %v3149
        %3190 = vmatpush.msra.mxu0 %v3147
        %3191 = vmatpush.msra.mxu0 %v3145
        %3192 = vmatpush.msra.mxu0 %v3143
        %3193 = vmatmul.f32.gmra.mxu0 %v2714
        %v3194 = vpop.f32.mrf.mxu0
        %v3195 = vadd.f32 %v3154, %v3194
        %3196 = vdwg.mxu0
        %v3197 = vmax.f32 %v3175, 0.0
        %v3198 = vmax.f32 %v3195, 0.0
        %s3199 = scalar_lea.vmem %s13, 32
        %v3200 = vld [vmem:[%s3199] sm:$0x7f]
        %v3202 = vsel %vm2819, %v3200, 0
        %v3205 = vsel %vm2823, %v3197, 0
        %v3208 = vsel %vm2823, %v3198, 0
        %3210 = vmatpush.msra.mxu0 0.0
        %3211 = vmatpush.msra.mxu0 0.0
        %3212 = vmatpush.msra.mxu0 0.0
        %3213 = vmatpush.msra.mxu0 0.0
        %3214 = vmatpush.msra.mxu0 0.0
        %3215 = vmatpush.msra.mxu0 0.0
        %3216 = vmatpush.msra.mxu0 0.0
        %3217 = vmatpush.msra.mxu0 0.0
        %3218 = vmatpush.msra.mxu0 0.0
        %3219 = vmatpush.msra.mxu0 0.0
        %3220 = vmatpush.msra.mxu0 0.0
        %3221 = vmatpush.msra.mxu0 0.0
        %3222 = vmatpush.msra.mxu0 0.0
        %3223 = vmatpush.msra.mxu0 0.0
        %3224 = vmatpush.msra.mxu0 0.0
        %3225 = vmatpush.msra.mxu0 %v3205
        %3226 = vmatmul.f32.gmra.mxu0 %v3202
        %v3227 = vpop.f32.mrf.mxu0
        %v3228 = vadd.f32 0.0, %v3227
        %3229 = vdwg.mxu0
        %3230 = vmatpush.msra.mxu0 0.0
        %3231 = vmatpush.msra.mxu0 0.0
        %3232 = vmatpush.msra.mxu0 0.0
        %3233 = vmatpush.msra.mxu0 0.0
        %3234 = vmatpush.msra.mxu0 0.0
        %3235 = vmatpush.msra.mxu0 0.0
        %3236 = vmatpush.msra.mxu0 0.0
        %3237 = vmatpush.msra.mxu0 0.0
        %3238 = vmatpush.msra.mxu0 0.0
        %3239 = vmatpush.msra.mxu0 0.0
        %3240 = vmatpush.msra.mxu0 0.0
        %3241 = vmatpush.msra.mxu0 0.0
        %3242 = vmatpush.msra.mxu0 0.0
        %3243 = vmatpush.msra.mxu0 0.0
        %3244 = vmatpush.msra.mxu0 0.0
        %3245 = vmatpush.msra.mxu0 %v3208
        %3246 = vmatmul.f32.gmra.mxu0 %v3202
        %v3247 = vpop.f32.mrf.mxu0
        %v3248 = vadd.f32 0.0, %v3247
        %3249 = vdwg.mxu0
        %v3250 = vadd.f32 %v3139, %v3228
        %v3251 = vadd.f32 %v3140, %v3248
        %s3252 = scalar_lea.vmem [#allocation12], 320
        %v3253 = vld [vmem:[%s3252] sm:$0xff]
        %v3254 = vld [vmem:[%s3252 + $0x8] sm:$0xff]
        %v3255 = vld [vmem:[%s3252 + $0x10] sm:$0xff]
        %v3256 = vld [vmem:[%s3252 + $0x18] sm:$0xff]
        %v3257 = vld [vmem:[%s3252 + $0x20] sm:$0xff]
        %v3258 = vld [vmem:[%s3252 + $0x28] sm:$0xff]
        %v3259 = vld [vmem:[%s3252 + $0x30] sm:$0xff]
        %v3260 = vld [vmem:[%s3252 + $0x38] sm:$0xff]
        %s3261 = scalar_lea.vmem %s12, 10
        %v3262 = vld [vmem:[%s3261] sm:$0x3]
        %v3264 = vperm.slane %v3262, 0
        %v3265 = vperm.slane %v3262, 1
        %3268 = vmatpush.msra.mxu0 0.0
        %3269 = vmatpush.msra.mxu0 0.0
        %3270 = vmatpush.msra.mxu0 0.0
        %3271 = vmatpush.msra.mxu0 0.0
        %3272 = vmatpush.msra.mxu0 0.0
        %3273 = vmatpush.msra.mxu0 0.0
        %3274 = vmatpush.msra.mxu0 0.0
        %3275 = vmatpush.msra.mxu0 0.0
        %3276 = vmatpush.msra.mxu0 0.0
        %3277 = vmatpush.msra.mxu0 0.0
        %3278 = vmatpush.msra.mxu0 0.0
        %3279 = vmatpush.msra.mxu0 0.0
        %3280 = vmatpush.msra.mxu0 %v3259
        %3281 = vmatpush.msra.mxu0 %v3257
        %3282 = vmatpush.msra.mxu0 %v3255
        %3283 = vmatpush.msra.mxu0 %v3253
        %3284 = vmatmul.f32.gmra.mxu0 %v2714
        %v3285 = vpop.f32.mrf.mxu0
        %v3286 = vadd.f32 %v3264, %v3285
        %3287 = vdwg.mxu0
        %3288 = vmatpush.msra.mxu0 0.0
        %3289 = vmatpush.msra.mxu0 0.0
        %3290 = vmatpush.msra.mxu0 0.0
        %3291 = vmatpush.msra.mxu0 0.0
        %3292 = vmatpush.msra.mxu0 0.0
        %3293 = vmatpush.msra.mxu0 0.0
        %3294 = vmatpush.msra.mxu0 0.0
        %3295 = vmatpush.msra.mxu0 0.0
        %3296 = vmatpush.msra.mxu0 0.0
        %3297 = vmatpush.msra.mxu0 0.0
        %3298 = vmatpush.msra.mxu0 0.0
        %3299 = vmatpush.msra.mxu0 0.0
        %3300 = vmatpush.msra.mxu0 %v3260
        %3301 = vmatpush.msra.mxu0 %v3258
        %3302 = vmatpush.msra.mxu0 %v3256
        %3303 = vmatpush.msra.mxu0 %v3254
        %3304 = vmatmul.f32.gmra.mxu0 %v2714
        %v3305 = vpop.f32.mrf.mxu0
        %v3306 = vadd.f32 %v3265, %v3305
        %3307 = vdwg.mxu0
        %v3308 = vmax.f32 %v3286, 0.0
        %v3309 = vmax.f32 %v3306, 0.0
        %s3310 = scalar_lea.vmem %s13, 40
        %v3311 = vld [vmem:[%s3310] sm:$0x7f]
        %v3313 = vsel %vm2819, %v3311, 0
        %v3316 = vsel %vm2823, %v3308, 0
        %v3319 = vsel %vm2823, %v3309, 0
        %3321 = vmatpush.msra.mxu0 0.0
        %3322 = vmatpush.msra.mxu0 0.0
        %3323 = vmatpush.msra.mxu0 0.0
        %3324 = vmatpush.msra.mxu0 0.0
        %3325 = vmatpush.msra.mxu0 0.0
        %3326 = vmatpush.msra.mxu0 0.0
        %3327 = vmatpush.msra.mxu0 0.0
        %3328 = vmatpush.msra.mxu0 0.0
        %3329 = vmatpush.msra.mxu0 0.0
        %3330 = vmatpush.msra.mxu0 0.0
        %3331 = vmatpush.msra.mxu0 0.0
        %3332 = vmatpush.msra.mxu0 0.0
        %3333 = vmatpush.msra.mxu0 0.0
        %3334 = vmatpush.msra.mxu0 0.0
        %3335 = vmatpush.msra.mxu0 0.0
        %3336 = vmatpush.msra.mxu0 %v3316
        %3337 = vmatmul.f32.gmra.mxu0 %v3313
        %v3338 = vpop.f32.mrf.mxu0
        %v3339 = vadd.f32 0.0, %v3338
        %3340 = vdwg.mxu0
        %3341 = vmatpush.msra.mxu0 0.0
        %3342 = vmatpush.msra.mxu0 0.0
        %3343 = vmatpush.msra.mxu0 0.0
        %3344 = vmatpush.msra.mxu0 0.0
        %3345 = vmatpush.msra.mxu0 0.0
        %3346 = vmatpush.msra.mxu0 0.0
        %3347 = vmatpush.msra.mxu0 0.0
        %3348 = vmatpush.msra.mxu0 0.0
        %3349 = vmatpush.msra.mxu0 0.0
        %3350 = vmatpush.msra.mxu0 0.0
        %3351 = vmatpush.msra.mxu0 0.0
        %3352 = vmatpush.msra.mxu0 0.0
        %3353 = vmatpush.msra.mxu0 0.0
        %3354 = vmatpush.msra.mxu0 0.0
        %3355 = vmatpush.msra.mxu0 0.0
        %3356 = vmatpush.msra.mxu0 %v3319
        %3357 = vmatmul.f32.gmra.mxu0 %v3313
        %v3358 = vpop.f32.mrf.mxu0
        %v3359 = vadd.f32 0.0, %v3358
        %3360 = vdwg.mxu0
        %v3361 = vadd.f32 %v3250, %v3339
        %v3362 = vadd.f32 %v3251, %v3359
        %s3363 = scalar_lea.vmem [#allocation12], 384
        %v3364 = vld [vmem:[%s3363] sm:$0xff]
        %v3365 = vld [vmem:[%s3363 + $0x8] sm:$0xff]
        %v3366 = vld [vmem:[%s3363 + $0x10] sm:$0xff]
        %v3367 = vld [vmem:[%s3363 + $0x18] sm:$0xff]
        %v3368 = vld [vmem:[%s3363 + $0x20] sm:$0xff]
        %v3369 = vld [vmem:[%s3363 + $0x28] sm:$0xff]
        %v3370 = vld [vmem:[%s3363 + $0x30] sm:$0xff]
        %v3371 = vld [vmem:[%s3363 + $0x38] sm:$0xff]
        %s3372 = scalar_lea.vmem %s12, 12
        %v3373 = vld [vmem:[%s3372] sm:$0x3]
        %v3375 = vperm.slane %v3373, 0
        %v3376 = vperm.slane %v3373, 1
        %3379 = vmatpush.msra.mxu0 0.0
        %3380 = vmatpush.msra.mxu0 0.0
        %3381 = vmatpush.msra.mxu0 0.0
        %3382 = vmatpush.msra.mxu0 0.0
        %3383 = vmatpush.msra.mxu0 0.0
        %3384 = vmatpush.msra.mxu0 0.0
        %3385 = vmatpush.msra.mxu0 0.0
        %3386 = vmatpush.msra.mxu0 0.0
        %3387 = vmatpush.msra.mxu0 0.0
        %3388 = vmatpush.msra.mxu0 0.0
        %3389 = vmatpush.msra.mxu0 0.0
        %3390 = vmatpush.msra.mxu0 0.0
        %3391 = vmatpush.msra.mxu0 %v3370
        %3392 = vmatpush.msra.mxu0 %v3368
        %3393 = vmatpush.msra.mxu0 %v3366
        %3394 = vmatpush.msra.mxu0 %v3364
        %3395 = vmatmul.f32.gmra.mxu0 %v2714
        %v3396 = vpop.f32.mrf.mxu0
        %v3397 = vadd.f32 %v3375, %v3396
        %3398 = vdwg.mxu0
        %3399 = vmatpush.msra.mxu0 0.0
        %3400 = vmatpush.msra.mxu0 0.0
        %3401 = vmatpush.msra.mxu0 0.0
        %3402 = vmatpush.msra.mxu0 0.0
        %3403 = vmatpush.msra.mxu0 0.0
        %3404 = vmatpush.msra.mxu0 0.0
        %3405 = vmatpush.msra.mxu0 0.0
        %3406 = vmatpush.msra.mxu0 0.0
        %3407 = vmatpush.msra.mxu0 0.0
        %3408 = vmatpush.msra.mxu0 0.0
        %3409 = vmatpush.msra.mxu0 0.0
        %3410 = vmatpush.msra.mxu0 0.0
        %3411 = vmatpush.msra.mxu0 %v3371
        %3412 = vmatpush.msra.mxu0 %v3369
        %3413 = vmatpush.msra.mxu0 %v3367
        %3414 = vmatpush.msra.mxu0 %v3365
        %3415 = vmatmul.f32.gmra.mxu0 %v2714
        %v3416 = vpop.f32.mrf.mxu0
        %v3417 = vadd.f32 %v3376, %v3416
        %3418 = vdwg.mxu0
        %v3419 = vmax.f32 %v3397, 0.0
        %v3420 = vmax.f32 %v3417, 0.0
        %s3421 = scalar_lea.vmem %s13, 48
        %v3422 = vld [vmem:[%s3421] sm:$0x7f]
        %v3424 = vsel %vm2819, %v3422, 0
        %v3427 = vsel %vm2823, %v3419, 0
        %v3430 = vsel %vm2823, %v3420, 0
        %3432 = vmatpush.msra.mxu0 0.0
        %3433 = vmatpush.msra.mxu0 0.0
        %3434 = vmatpush.msra.mxu0 0.0
        %3435 = vmatpush.msra.mxu0 0.0
        %3436 = vmatpush.msra.mxu0 0.0
        %3437 = vmatpush.msra.mxu0 0.0
        %3438 = vmatpush.msra.mxu0 0.0
        %3439 = vmatpush.msra.mxu0 0.0
        %3440 = vmatpush.msra.mxu0 0.0
        %3441 = vmatpush.msra.mxu0 0.0
        %3442 = vmatpush.msra.mxu0 0.0
        %3443 = vmatpush.msra.mxu0 0.0
        %3444 = vmatpush.msra.mxu0 0.0
        %3445 = vmatpush.msra.mxu0 0.0
        %3446 = vmatpush.msra.mxu0 0.0
        %3447 = vmatpush.msra.mxu0 %v3427
        %3448 = vmatmul.f32.gmra.mxu0 %v3424
        %v3449 = vpop.f32.mrf.mxu0
        %v3450 = vadd.f32 0.0, %v3449
        %3451 = vdwg.mxu0
        %3452 = vmatpush.msra.mxu0 0.0
        %3453 = vmatpush.msra.mxu0 0.0
        %3454 = vmatpush.msra.mxu0 0.0
        %3455 = vmatpush.msra.mxu0 0.0
        %3456 = vmatpush.msra.mxu0 0.0
        %3457 = vmatpush.msra.mxu0 0.0
        %3458 = vmatpush.msra.mxu0 0.0
        %3459 = vmatpush.msra.mxu0 0.0
        %3460 = vmatpush.msra.mxu0 0.0
        %3461 = vmatpush.msra.mxu0 0.0
        %3462 = vmatpush.msra.mxu0 0.0
        %3463 = vmatpush.msra.mxu0 0.0
        %3464 = vmatpush.msra.mxu0 0.0
        %3465 = vmatpush.msra.mxu0 0.0
        %3466 = vmatpush.msra.mxu0 0.0
        %3467 = vmatpush.msra.mxu0 %v3430
        %3468 = vmatmul.f32.gmra.mxu0 %v3424
        %v3469 = vpop.f32.mrf.mxu0
        %v3470 = vadd.f32 0.0, %v3469
        %3471 = vdwg.mxu0
        %v3472 = vadd.f32 %v3361, %v3450
        %v3473 = vadd.f32 %v3362, %v3470
        %v3474 = vld [vmem:[#allocation14] sm:$0xff]
        %v3475 = vld [vmem:[#allocation14 + $0x8] sm:$0x3f]
        %v3477 = vsel %vm1777, %v3474, 0
        %v3480 = vsel %vm1777, %v3475, 0
        %v3483 = vsel %vm1781, %v3472, 0
        %v3486 = vsel %vm1781, %v3473, 0
        %3488 = vmatpush.msra.mxu0 0.0
        %3489 = vmatpush.msra.mxu0 0.0
        %3490 = vmatpush.msra.mxu0 0.0
        %3491 = vmatpush.msra.mxu0 0.0
        %3492 = vmatpush.msra.mxu0 0.0
        %3493 = vmatpush.msra.mxu0 0.0
        %3494 = vmatpush.msra.mxu0 0.0
        %3495 = vmatpush.msra.mxu0 0.0
        %3496 = vmatpush.msra.mxu0 0.0
        %3497 = vmatpush.msra.mxu0 0.0
        %3498 = vmatpush.msra.mxu0 0.0
        %3499 = vmatpush.msra.mxu0 0.0
        %3500 = vmatpush.msra.mxu0 0.0
        %3501 = vmatpush.msra.mxu0 0.0
        %3502 = vmatpush.msra.mxu0 0.0
        %3503 = vmatpush.msra.mxu0 %v3483
        %3504 = vmatmul.f32.gmra.mxu0 %v3477
        %v3505 = vpop.f32.mrf.mxu0
        %v3506 = vadd.f32 0.0, %v3505
        %3507 = vmatmul.f32.gmra.mxu0 %v3480
        %v3508 = vpop.f32.mrf.mxu0
        %v3509 = vadd.f32 0.0, %v3508
        %3510 = vdwg.mxu0
        %3511 = vmatpush.msra.mxu0 0.0
        %3512 = vmatpush.msra.mxu0 0.0
        %3513 = vmatpush.msra.mxu0 0.0
        %3514 = vmatpush.msra.mxu0 0.0
        %3515 = vmatpush.msra.mxu0 0.0
        %3516 = vmatpush.msra.mxu0 0.0
        %3517 = vmatpush.msra.mxu0 0.0
        %3518 = vmatpush.msra.mxu0 0.0
        %3519 = vmatpush.msra.mxu0 0.0
        %3520 = vmatpush.msra.mxu0 0.0
        %3521 = vmatpush.msra.mxu0 0.0
        %3522 = vmatpush.msra.mxu0 0.0
        %3523 = vmatpush.msra.mxu0 0.0
        %3524 = vmatpush.msra.mxu0 0.0
        %3525 = vmatpush.msra.mxu0 0.0
        %3526 = vmatpush.msra.mxu0 %v3486
        %3527 = vmatmul.f32.gmra.mxu0 %v3477
        %v3528 = vpop.f32.mrf.mxu0
        %v3529 = vadd.f32 0.0, %v3528
        %3530 = vmatmul.f32.gmra.mxu0 %v3480
        %v3531 = vpop.f32.mrf.mxu0
        %v3532 = vadd.f32 0.0, %v3531
        %3533 = vdwg.mxu0
        %v3534 = vld [vmem:[#allocation15] sm:$0xff]
        %v3535 = vld [vmem:[#allocation15 + $0x8] sm:$0xff]
        %v3536 = vld [vmem:[#allocation15 + $0x10] sm:$0xff]
        %v3537 = vld [vmem:[#allocation15 + $0x18] sm:$0xff]
        %v3538 = vld [vmem:[#allocation15 + $0x20] sm:$0xff]
        %v3539 = vld [vmem:[#allocation15 + $0x28] sm:$0xff]
        %v3540 = vld [vmem:[#allocation15 + $0x30] sm:$0xff]
        %v3541 = vld [vmem:[#allocation15 + $0x38] sm:$0xff]
        %v3542 = vld [vmem:[#allocation15 + $0x40] sm:$0xff]
        %v3543 = vld [vmem:[#allocation15 + $0x48] sm:$0xff]
        %v3544 = vld [vmem:[#allocation15 + $0x50] sm:$0xff]
        %v3545 = vld [vmem:[#allocation15 + $0x58] sm:$0xff]
        %v3546 = vld [vmem:[#allocation15 + $0x60] sm:$0xff]
        %v3547 = vld [vmem:[#allocation15 + $0x68] sm:$0xff]
        %v3548 = vld [vmem:[#allocation15 + $0x70] sm:$0xff]
        %v3549 = vld [vmem:[#allocation15 + $0x78] sm:$0xff]
        %v3550 = vld [vmem:[#allocation15 + $0x80] sm:$0xff]
        %v3551 = vld [vmem:[#allocation15 + $0x88] sm:$0xff]
        %v3552 = vld [vmem:[#allocation15 + $0x90] sm:$0xff]
        %v3553 = vld [vmem:[#allocation15 + $0x98] sm:$0xff]
        %v3554 = vld [vmem:[#allocation15 + $0xa0] sm:$0xff]
        %v3555 = vld [vmem:[#allocation15 + $0xa8] sm:$0xff]
        %v3556 = vld [vmem:[#allocation15 + $0xb0] sm:$0xff]
        %v3557 = vld [vmem:[#allocation15 + $0xb8] sm:$0xff]
        %v3558 = vld [vmem:[#allocation15 + $0xc0] sm:$0xff]
        %v3559 = vld [vmem:[#allocation15 + $0xc8] sm:$0xff]
        %v3560 = vld [vmem:[#allocation15 + $0xd0] sm:$0xff]
        %v3561 = vld [vmem:[#allocation15 + $0xd8] sm:$0xff]
        %v3562 = vld [vmem:[#allocation15 + $0xe0] sm:$0xff]
        %v3563 = vld [vmem:[#allocation15 + $0xe8] sm:$0xff]
        %v3564 = vld [vmem:[#allocation15 + $0xf0] sm:$0xff]
        %v3565 = vld [vmem:[#allocation15 + $0xf8] sm:$0xff]
        %v3566 = vld [vmem:[#allocation15 + $0x100] sm:$0xff]
        %v3567 = vld [vmem:[#allocation15 + $0x108] sm:$0xff]
        %v3568 = vld [vmem:[#allocation15 + $0x110] sm:$0xff]
        %v3569 = vld [vmem:[#allocation15 + $0x118] sm:$0xff]
        %v3570 = vld [vmem:[#allocation15 + $0x120] sm:$0xff]
        %v3571 = vld [vmem:[#allocation15 + $0x128] sm:$0xff]
        %v3572 = vld [vmem:[#allocation15 + $0x130] sm:$0xff]
        %v3573 = vld [vmem:[#allocation15 + $0x138] sm:$0xff]
        %v3574 = vld [vmem:[#allocation15 + $0x140] sm:$0xff]
        %v3575 = vld [vmem:[#allocation15 + $0x148] sm:$0xff]
        %v3576 = vld [vmem:[#allocation15 + $0x150] sm:$0xff]
        %v3577 = vld [vmem:[#allocation15 + $0x158] sm:$0xff]
        %v3578 = vld [vmem:[#allocation15 + $0x160] sm:$0xff]
        %v3579 = vld [vmem:[#allocation15 + $0x168] sm:$0xff]
        %v3580 = vld [vmem:[#allocation15 + $0x170] sm:$0xff]
        %v3581 = vld [vmem:[#allocation15 + $0x178] sm:$0xff]
        %v3582 = vld [vmem:[#allocation15 + $0x180] sm:$0xff]
        %v3583 = vld [vmem:[#allocation15 + $0x188] sm:$0xff]
        %v3584 = vld [vmem:[#allocation15 + $0x190] sm:$0xff]
        %v3585 = vld [vmem:[#allocation15 + $0x198] sm:$0xff]
        %v3586 = vld [vmem:[#allocation15 + $0x1a0] sm:$0xff]
        %v3587 = vld [vmem:[#allocation15 + $0x1a8] sm:$0xff]
        %v3588 = vld [vmem:[#allocation15 + $0x1b0] sm:$0xff]
        %v3589 = vld [vmem:[#allocation15 + $0x1b8] sm:$0xff]
        %s3590 = scalar_lea.vmem [#allocation14], 16
        %v3591 = vld [vmem:[%s3590] sm:$0xff]
        %v3592 = vld [vmem:[%s3590 + $0x8] sm:$0x3f]
        %v3594 = vsel %vm1777, %v3591, 0
        %v3597 = vsel %vm1777, %v3592, 0
        %3599 = vmatpush.msra.mxu0 0.0
        %3600 = vmatpush.msra.mxu0 0.0
        %3601 = vmatpush.msra.mxu0 0.0
        %3602 = vmatpush.msra.mxu0 0.0
        %3603 = vmatpush.msra.mxu0 0.0
        %3604 = vmatpush.msra.mxu0 0.0
        %3605 = vmatpush.msra.mxu0 0.0
        %3606 = vmatpush.msra.mxu0 0.0
        %3607 = vmatpush.msra.mxu0 0.0
        %3608 = vmatpush.msra.mxu0 0.0
        %3609 = vmatpush.msra.mxu0 0.0
        %3610 = vmatpush.msra.mxu0 0.0
        %3611 = vmatpush.msra.mxu0 0.0
        %3612 = vmatpush.msra.mxu0 0.0
        %3613 = vmatpush.msra.mxu0 0.0
        %3614 = vmatpush.msra.mxu0 %v3483
        %3615 = vmatmul.f32.gmra.mxu0 %v3594
        %v3616 = vpop.f32.mrf.mxu0
        %v3617 = vadd.f32 0.0, %v3616
        %3618 = vmatmul.f32.gmra.mxu0 %v3597
        %v3619 = vpop.f32.mrf.mxu0
        %v3620 = vadd.f32 0.0, %v3619
        %3621 = vdwg.mxu0
        %3622 = vmatpush.msra.mxu0 0.0
        %3623 = vmatpush.msra.mxu0 0.0
        %3624 = vmatpush.msra.mxu0 0.0
        %3625 = vmatpush.msra.mxu0 0.0
        %3626 = vmatpush.msra.mxu0 0.0
        %3627 = vmatpush.msra.mxu0 0.0
        %3628 = vmatpush.msra.mxu0 0.0
        %3629 = vmatpush.msra.mxu0 0.0
        %3630 = vmatpush.msra.mxu0 0.0
        %3631 = vmatpush.msra.mxu0 0.0
        %3632 = vmatpush.msra.mxu0 0.0
        %3633 = vmatpush.msra.mxu0 0.0
        %3634 = vmatpush.msra.mxu0 0.0
        %3635 = vmatpush.msra.mxu0 0.0
        %3636 = vmatpush.msra.mxu0 0.0
        %3637 = vmatpush.msra.mxu0 %v3486
        %3638 = vmatmul.f32.gmra.mxu0 %v3594
        %v3639 = vpop.f32.mrf.mxu0
        %v3640 = vadd.f32 0.0, %v3639
        %3641 = vmatmul.f32.gmra.mxu0 %v3597
        %v3642 = vpop.f32.mrf.mxu0
        %v3643 = vadd.f32 0.0, %v3642
        %3644 = vdwg.mxu0
        %s3645 = scalar_lea.vmem [#allocation15], 448
        %v3646 = vld [vmem:[%s3645] sm:$0xff]
        %v3647 = vld [vmem:[%s3645 + $0x8] sm:$0xff]
        %v3648 = vld [vmem:[%s3645 + $0x10] sm:$0xff]
        %v3649 = vld [vmem:[%s3645 + $0x18] sm:$0xff]
        %v3650 = vld [vmem:[%s3645 + $0x20] sm:$0xff]
        %v3651 = vld [vmem:[%s3645 + $0x28] sm:$0xff]
        %v3652 = vld [vmem:[%s3645 + $0x30] sm:$0xff]
        %v3653 = vld [vmem:[%s3645 + $0x38] sm:$0xff]
        %v3654 = vld [vmem:[%s3645 + $0x40] sm:$0xff]
        %v3655 = vld [vmem:[%s3645 + $0x48] sm:$0xff]
        %v3656 = vld [vmem:[%s3645 + $0x50] sm:$0xff]
        %v3657 = vld [vmem:[%s3645 + $0x58] sm:$0xff]
        %v3658 = vld [vmem:[%s3645 + $0x60] sm:$0xff]
        %v3659 = vld [vmem:[%s3645 + $0x68] sm:$0xff]
        %v3660 = vld [vmem:[%s3645 + $0x70] sm:$0xff]
        %v3661 = vld [vmem:[%s3645 + $0x78] sm:$0xff]
        %v3662 = vld [vmem:[%s3645 + $0x80] sm:$0xff]
        %v3663 = vld [vmem:[%s3645 + $0x88] sm:$0xff]
        %v3664 = vld [vmem:[%s3645 + $0x90] sm:$0xff]
        %v3665 = vld [vmem:[%s3645 + $0x98] sm:$0xff]
        %v3666 = vld [vmem:[%s3645 + $0xa0] sm:$0xff]
        %v3667 = vld [vmem:[%s3645 + $0xa8] sm:$0xff]
        %v3668 = vld [vmem:[%s3645 + $0xb0] sm:$0xff]
        %v3669 = vld [vmem:[%s3645 + $0xb8] sm:$0xff]
        %v3670 = vld [vmem:[%s3645 + $0xc0] sm:$0xff]
        %v3671 = vld [vmem:[%s3645 + $0xc8] sm:$0xff]
        %v3672 = vld [vmem:[%s3645 + $0xd0] sm:$0xff]
        %v3673 = vld [vmem:[%s3645 + $0xd8] sm:$0xff]
        %v3674 = vld [vmem:[%s3645 + $0xe0] sm:$0xff]
        %v3675 = vld [vmem:[%s3645 + $0xe8] sm:$0xff]
        %v3676 = vld [vmem:[%s3645 + $0xf0] sm:$0xff]
        %v3677 = vld [vmem:[%s3645 + $0xf8] sm:$0xff]
        %v3678 = vld [vmem:[%s3645 + $0x100] sm:$0xff]
        %v3679 = vld [vmem:[%s3645 + $0x108] sm:$0xff]
        %v3680 = vld [vmem:[%s3645 + $0x110] sm:$0xff]
        %v3681 = vld [vmem:[%s3645 + $0x118] sm:$0xff]
        %v3682 = vld [vmem:[%s3645 + $0x120] sm:$0xff]
        %v3683 = vld [vmem:[%s3645 + $0x128] sm:$0xff]
        %v3684 = vld [vmem:[%s3645 + $0x130] sm:$0xff]
        %v3685 = vld [vmem:[%s3645 + $0x138] sm:$0xff]
        %v3686 = vld [vmem:[%s3645 + $0x140] sm:$0xff]
        %v3687 = vld [vmem:[%s3645 + $0x148] sm:$0xff]
        %v3688 = vld [vmem:[%s3645 + $0x150] sm:$0xff]
        %v3689 = vld [vmem:[%s3645 + $0x158] sm:$0xff]
        %v3690 = vld [vmem:[%s3645 + $0x160] sm:$0xff]
        %v3691 = vld [vmem:[%s3645 + $0x168] sm:$0xff]
        %v3692 = vld [vmem:[%s3645 + $0x170] sm:$0xff]
        %v3693 = vld [vmem:[%s3645 + $0x178] sm:$0xff]
        %v3694 = vld [vmem:[%s3645 + $0x180] sm:$0xff]
        %v3695 = vld [vmem:[%s3645 + $0x188] sm:$0xff]
        %v3696 = vld [vmem:[%s3645 + $0x190] sm:$0xff]
        %v3697 = vld [vmem:[%s3645 + $0x198] sm:$0xff]
        %v3698 = vld [vmem:[%s3645 + $0x1a0] sm:$0xff]
        %v3699 = vld [vmem:[%s3645 + $0x1a8] sm:$0xff]
        %v3700 = vld [vmem:[%s3645 + $0x1b0] sm:$0xff]
        %v3701 = vld [vmem:[%s3645 + $0x1b8] sm:$0xff]
        %v3703 = vsel %vm1410, %v3640, 0
        %v3706 = vsel %vm1410, %v3643, 0
        %3708 = vmatpush.msra.mxu0 %v3676
        %3709 = vmatpush.msra.mxu0 %v3674
        %3710 = vmatpush.msra.mxu0 %v3672
        %3711 = vmatpush.msra.mxu0 %v3670
        %3712 = vmatpush.msra.mxu0 %v3668
        %3713 = vmatpush.msra.mxu0 %v3666
        %3714 = vmatpush.msra.mxu0 %v3664
        %3715 = vmatpush.msra.mxu0 %v3662
        %3716 = vmatpush.msra.mxu0 %v3660
        %3717 = vmatpush.msra.mxu0 %v3658
        %3718 = vmatpush.msra.mxu0 %v3656
        %3719 = vmatpush.msra.mxu0 %v3654
        %3720 = vmatpush.msra.mxu0 %v3652
        %3721 = vmatpush.msra.mxu0 %v3650
        %3722 = vmatpush.msra.mxu0 %v3648
        %3723 = vmatpush.msra.mxu0 %v3646
        %3724 = vmatmul.f32.gmra.mxu0 %v3617
        %v3725 = vpop.f32.mrf.mxu0
        %v3726 = vadd.f32 0.0, %v3725
        %3727 = vmatmul.f32.gmra.mxu0 %v3620
        %v3728 = vpop.f32.mrf.mxu0
        %v3729 = vadd.f32 0.0, %v3728
        %3730 = vdwg.mxu0
        %3731 = vmatpush.msra.mxu0 0.0
        %3732 = vmatpush.msra.mxu0 0.0
        %3733 = vmatpush.msra.mxu0 0.0
        %3734 = vmatpush.msra.mxu0 0.0
        %3735 = vmatpush.msra.mxu0 %v3700
        %3736 = vmatpush.msra.mxu0 %v3698
        %3737 = vmatpush.msra.mxu0 %v3696
        %3738 = vmatpush.msra.mxu0 %v3694
        %3739 = vmatpush.msra.mxu0 %v3692
        %3740 = vmatpush.msra.mxu0 %v3690
        %3741 = vmatpush.msra.mxu0 %v3688
        %3742 = vmatpush.msra.mxu0 %v3686
        %3743 = vmatpush.msra.mxu0 %v3684
        %3744 = vmatpush.msra.mxu0 %v3682
        %3745 = vmatpush.msra.mxu0 %v3680
        %3746 = vmatpush.msra.mxu0 %v3678
        %3747 = vmatmul.f32.gmra.mxu0 %v3703
        %v3748 = vpop.f32.mrf.mxu0
        %v3749 = vadd.f32 %v3726, %v3748
        %3750 = vmatmul.f32.gmra.mxu0 %v3706
        %v3751 = vpop.f32.mrf.mxu0
        %v3752 = vadd.f32 %v3729, %v3751
        %3753 = vdwg.mxu0
        %3754 = vmatpush.msra.mxu0 %v3677
        %3755 = vmatpush.msra.mxu0 %v3675
        %3756 = vmatpush.msra.mxu0 %v3673
        %3757 = vmatpush.msra.mxu0 %v3671
        %3758 = vmatpush.msra.mxu0 %v3669
        %3759 = vmatpush.msra.mxu0 %v3667
        %3760 = vmatpush.msra.mxu0 %v3665
        %3761 = vmatpush.msra.mxu0 %v3663
        %3762 = vmatpush.msra.mxu0 %v3661
        %3763 = vmatpush.msra.mxu0 %v3659
        %3764 = vmatpush.msra.mxu0 %v3657
        %3765 = vmatpush.msra.mxu0 %v3655
        %3766 = vmatpush.msra.mxu0 %v3653
        %3767 = vmatpush.msra.mxu0 %v3651
        %3768 = vmatpush.msra.mxu0 %v3649
        %3769 = vmatpush.msra.mxu0 %v3647
        %3770 = vmatmul.f32.gmra.mxu0 %v3617
        %v3771 = vpop.f32.mrf.mxu0
        %v3772 = vadd.f32 0.0, %v3771
        %3773 = vmatmul.f32.gmra.mxu0 %v3620
        %v3774 = vpop.f32.mrf.mxu0
        %v3775 = vadd.f32 0.0, %v3774
        %3776 = vdwg.mxu0
        %3777 = vmatpush.msra.mxu0 0.0
        %3778 = vmatpush.msra.mxu0 0.0
        %3779 = vmatpush.msra.mxu0 0.0
        %3780 = vmatpush.msra.mxu0 0.0
        %3781 = vmatpush.msra.mxu0 %v3701
        %3782 = vmatpush.msra.mxu0 %v3699
        %3783 = vmatpush.msra.mxu0 %v3697
        %3784 = vmatpush.msra.mxu0 %v3695
        %3785 = vmatpush.msra.mxu0 %v3693
        %3786 = vmatpush.msra.mxu0 %v3691
        %3787 = vmatpush.msra.mxu0 %v3689
        %3788 = vmatpush.msra.mxu0 %v3687
        %3789 = vmatpush.msra.mxu0 %v3685
        %3790 = vmatpush.msra.mxu0 %v3683
        %3791 = vmatpush.msra.mxu0 %v3681
        %3792 = vmatpush.msra.mxu0 %v3679
        %3793 = vmatmul.f32.gmra.mxu0 %v3703
        %v3794 = vpop.f32.mrf.mxu0
        %v3795 = vadd.f32 %v3772, %v3794
        %3796 = vmatmul.f32.gmra.mxu0 %v3706
        %v3797 = vpop.f32.mrf.mxu0
        %v3798 = vadd.f32 %v3775, %v3797
        %3799 = vdwg.mxu0
        %v3801 = vsel %vm1410, %v3529, 0
        %v3804 = vsel %vm1410, %v3532, 0
        %3806 = vmatpush.msra.mxu0 %v3564
        %3807 = vmatpush.msra.mxu0 %v3562
        %3808 = vmatpush.msra.mxu0 %v3560
        %3809 = vmatpush.msra.mxu0 %v3558
        %3810 = vmatpush.msra.mxu0 %v3556
        %3811 = vmatpush.msra.mxu0 %v3554
        %3812 = vmatpush.msra.mxu0 %v3552
        %3813 = vmatpush.msra.mxu0 %v3550
        %3814 = vmatpush.msra.mxu0 %v3548
        %3815 = vmatpush.msra.mxu0 %v3546
        %3816 = vmatpush.msra.mxu0 %v3544
        %3817 = vmatpush.msra.mxu0 %v3542
        %3818 = vmatpush.msra.mxu0 %v3540
        %3819 = vmatpush.msra.mxu0 %v3538
        %3820 = vmatpush.msra.mxu0 %v3536
        %3821 = vmatpush.msra.mxu0 %v3534
        %3822 = vmatmul.f32.gmra.mxu0 %v3506
        %v3823 = vpop.f32.mrf.mxu0
        %v3824 = vadd.f32 %v3749, %v3823
        %3825 = vmatmul.f32.gmra.mxu0 %v3509
        %v3826 = vpop.f32.mrf.mxu0
        %v3827 = vadd.f32 %v3752, %v3826
        %3828 = vdwg.mxu0
        %3829 = vmatpush.msra.mxu0 0.0
        %3830 = vmatpush.msra.mxu0 0.0
        %3831 = vmatpush.msra.mxu0 0.0
        %3832 = vmatpush.msra.mxu0 0.0
        %3833 = vmatpush.msra.mxu0 %v3588
        %3834 = vmatpush.msra.mxu0 %v3586
        %3835 = vmatpush.msra.mxu0 %v3584
        %3836 = vmatpush.msra.mxu0 %v3582
        %3837 = vmatpush.msra.mxu0 %v3580
        %3838 = vmatpush.msra.mxu0 %v3578
        %3839 = vmatpush.msra.mxu0 %v3576
        %3840 = vmatpush.msra.mxu0 %v3574
        %3841 = vmatpush.msra.mxu0 %v3572
        %3842 = vmatpush.msra.mxu0 %v3570
        %3843 = vmatpush.msra.mxu0 %v3568
        %3844 = vmatpush.msra.mxu0 %v3566
        %3845 = vmatmul.f32.gmra.mxu0 %v3801
        %v3846 = vpop.f32.mrf.mxu0
        %v3847 = vadd.f32 %v3824, %v3846
        %3848 = vmatmul.f32.gmra.mxu0 %v3804
        %v3849 = vpop.f32.mrf.mxu0
        %v3850 = vadd.f32 %v3827, %v3849
        %3851 = vdwg.mxu0
        %3852 = vmatpush.msra.mxu0 %v3565
        %3853 = vmatpush.msra.mxu0 %v3563
        %3854 = vmatpush.msra.mxu0 %v3561
        %3855 = vmatpush.msra.mxu0 %v3559
        %3856 = vmatpush.msra.mxu0 %v3557
        %3857 = vmatpush.msra.mxu0 %v3555
        %3858 = vmatpush.msra.mxu0 %v3553
        %3859 = vmatpush.msra.mxu0 %v3551
        %3860 = vmatpush.msra.mxu0 %v3549
        %3861 = vmatpush.msra.mxu0 %v3547
        %3862 = vmatpush.msra.mxu0 %v3545
        %3863 = vmatpush.msra.mxu0 %v3543
        %3864 = vmatpush.msra.mxu0 %v3541
        %3865 = vmatpush.msra.mxu0 %v3539
        %3866 = vmatpush.msra.mxu0 %v3537
        %3867 = vmatpush.msra.mxu0 %v3535
        %3868 = vmatmul.f32.gmra.mxu0 %v3506
        %v3869 = vpop.f32.mrf.mxu0
        %v3870 = vadd.f32 %v3795, %v3869
        %3871 = vmatmul.f32.gmra.mxu0 %v3509
        %v3872 = vpop.f32.mrf.mxu0
        %v3873 = vadd.f32 %v3798, %v3872
        %3874 = vdwg.mxu0
        %3875 = vmatpush.msra.mxu0 0.0
        %3876 = vmatpush.msra.mxu0 0.0
        %3877 = vmatpush.msra.mxu0 0.0
        %3878 = vmatpush.msra.mxu0 0.0
        %3879 = vmatpush.msra.mxu0 %v3589
        %3880 = vmatpush.msra.mxu0 %v3587
        %3881 = vmatpush.msra.mxu0 %v3585
        %3882 = vmatpush.msra.mxu0 %v3583
        %3883 = vmatpush.msra.mxu0 %v3581
        %3884 = vmatpush.msra.mxu0 %v3579
        %3885 = vmatpush.msra.mxu0 %v3577
        %3886 = vmatpush.msra.mxu0 %v3575
        %3887 = vmatpush.msra.mxu0 %v3573
        %3888 = vmatpush.msra.mxu0 %v3571
        %3889 = vmatpush.msra.mxu0 %v3569
        %3890 = vmatpush.msra.mxu0 %v3567
        %3891 = vmatmul.f32.gmra.mxu0 %v3801
        %v3892 = vpop.f32.mrf.mxu0
        %v3893 = vadd.f32 %v3870, %v3892
        %3894 = vmatmul.f32.gmra.mxu0 %v3804
        %v3895 = vpop.f32.mrf.mxu0
        %v3896 = vadd.f32 %v3873, %v3895
        %3897 = vdwg.mxu0
        %s3898 = scalar_lea.vmem [#allocation14], 32
        %v3899 = vld [vmem:[%s3898] sm:$0xff]
        %v3900 = vld [vmem:[%s3898 + $0x8] sm:$0x3f]
        %v3902 = vsel %vm1777, %v3899, 0
        %v3905 = vsel %vm1777, %v3900, 0
        %3907 = vmatpush.msra.mxu0 0.0
        %3908 = vmatpush.msra.mxu0 0.0
        %3909 = vmatpush.msra.mxu0 0.0
        %3910 = vmatpush.msra.mxu0 0.0
        %3911 = vmatpush.msra.mxu0 0.0
        %3912 = vmatpush.msra.mxu0 0.0
        %3913 = vmatpush.msra.mxu0 0.0
        %3914 = vmatpush.msra.mxu0 0.0
        %3915 = vmatpush.msra.mxu0 0.0
        %3916 = vmatpush.msra.mxu0 0.0
        %3917 = vmatpush.msra.mxu0 0.0
        %3918 = vmatpush.msra.mxu0 0.0
        %3919 = vmatpush.msra.mxu0 0.0
        %3920 = vmatpush.msra.mxu0 0.0
        %3921 = vmatpush.msra.mxu0 0.0
        %3922 = vmatpush.msra.mxu0 %v3483
        %3923 = vmatmul.f32.gmra.mxu0 %v3902
        %v3924 = vpop.f32.mrf.mxu0
        %v3925 = vadd.f32 0.0, %v3924
        %3926 = vmatmul.f32.gmra.mxu0 %v3905
        %v3927 = vpop.f32.mrf.mxu0
        %v3928 = vadd.f32 0.0, %v3927
        %3929 = vdwg.mxu0
        %3930 = vmatpush.msra.mxu0 0.0
        %3931 = vmatpush.msra.mxu0 0.0
        %3932 = vmatpush.msra.mxu0 0.0
        %3933 = vmatpush.msra.mxu0 0.0
        %3934 = vmatpush.msra.mxu0 0.0
        %3935 = vmatpush.msra.mxu0 0.0
        %3936 = vmatpush.msra.mxu0 0.0
        %3937 = vmatpush.msra.mxu0 0.0
        %3938 = vmatpush.msra.mxu0 0.0
        %3939 = vmatpush.msra.mxu0 0.0
        %3940 = vmatpush.msra.mxu0 0.0
        %3941 = vmatpush.msra.mxu0 0.0
        %3942 = vmatpush.msra.mxu0 0.0
        %3943 = vmatpush.msra.mxu0 0.0
        %3944 = vmatpush.msra.mxu0 0.0
        %3945 = vmatpush.msra.mxu0 %v3486
        %3946 = vmatmul.f32.gmra.mxu0 %v3902
        %v3947 = vpop.f32.mrf.mxu0
        %v3948 = vadd.f32 0.0, %v3947
        %3949 = vmatmul.f32.gmra.mxu0 %v3905
        %v3950 = vpop.f32.mrf.mxu0
        %v3951 = vadd.f32 0.0, %v3950
        %3952 = vdwg.mxu0
        %s3953 = scalar_lea.vmem [#allocation15], 896
        %v3954 = vld [vmem:[%s3953] sm:$0xff]
        %v3955 = vld [vmem:[%s3953 + $0x8] sm:$0xff]
        %v3956 = vld [vmem:[%s3953 + $0x10] sm:$0xff]
        %v3957 = vld [vmem:[%s3953 + $0x18] sm:$0xff]
        %v3958 = vld [vmem:[%s3953 + $0x20] sm:$0xff]
        %v3959 = vld [vmem:[%s3953 + $0x28] sm:$0xff]
        %v3960 = vld [vmem:[%s3953 + $0x30] sm:$0xff]
        %v3961 = vld [vmem:[%s3953 + $0x38] sm:$0xff]
        %v3962 = vld [vmem:[%s3953 + $0x40] sm:$0xff]
        %v3963 = vld [vmem:[%s3953 + $0x48] sm:$0xff]
        %v3964 = vld [vmem:[%s3953 + $0x50] sm:$0xff]
        %v3965 = vld [vmem:[%s3953 + $0x58] sm:$0xff]
        %v3966 = vld [vmem:[%s3953 + $0x60] sm:$0xff]
        %v3967 = vld [vmem:[%s3953 + $0x68] sm:$0xff]
        %v3968 = vld [vmem:[%s3953 + $0x70] sm:$0xff]
        %v3969 = vld [vmem:[%s3953 + $0x78] sm:$0xff]
        %v3970 = vld [vmem:[%s3953 + $0x80] sm:$0xff]
        %v3971 = vld [vmem:[%s3953 + $0x88] sm:$0xff]
        %v3972 = vld [vmem:[%s3953 + $0x90] sm:$0xff]
        %v3973 = vld [vmem:[%s3953 + $0x98] sm:$0xff]
        %v3974 = vld [vmem:[%s3953 + $0xa0] sm:$0xff]
        %v3975 = vld [vmem:[%s3953 + $0xa8] sm:$0xff]
        %v3976 = vld [vmem:[%s3953 + $0xb0] sm:$0xff]
        %v3977 = vld [vmem:[%s3953 + $0xb8] sm:$0xff]
        %v3978 = vld [vmem:[%s3953 + $0xc0] sm:$0xff]
        %v3979 = vld [vmem:[%s3953 + $0xc8] sm:$0xff]
        %v3980 = vld [vmem:[%s3953 + $0xd0] sm:$0xff]
        %v3981 = vld [vmem:[%s3953 + $0xd8] sm:$0xff]
        %v3982 = vld [vmem:[%s3953 + $0xe0] sm:$0xff]
        %v3983 = vld [vmem:[%s3953 + $0xe8] sm:$0xff]
        %v3984 = vld [vmem:[%s3953 + $0xf0] sm:$0xff]
        %v3985 = vld [vmem:[%s3953 + $0xf8] sm:$0xff]
        %v3986 = vld [vmem:[%s3953 + $0x100] sm:$0xff]
        %v3987 = vld [vmem:[%s3953 + $0x108] sm:$0xff]
        %v3988 = vld [vmem:[%s3953 + $0x110] sm:$0xff]
        %v3989 = vld [vmem:[%s3953 + $0x118] sm:$0xff]
        %v3990 = vld [vmem:[%s3953 + $0x120] sm:$0xff]
        %v3991 = vld [vmem:[%s3953 + $0x128] sm:$0xff]
        %v3992 = vld [vmem:[%s3953 + $0x130] sm:$0xff]
        %v3993 = vld [vmem:[%s3953 + $0x138] sm:$0xff]
        %v3994 = vld [vmem:[%s3953 + $0x140] sm:$0xff]
        %v3995 = vld [vmem:[%s3953 + $0x148] sm:$0xff]
        %v3996 = vld [vmem:[%s3953 + $0x150] sm:$0xff]
        %v3997 = vld [vmem:[%s3953 + $0x158] sm:$0xff]
        %v3998 = vld [vmem:[%s3953 + $0x160] sm:$0xff]
        %v3999 = vld [vmem:[%s3953 + $0x168] sm:$0xff]
        %v4000 = vld [vmem:[%s3953 + $0x170] sm:$0xff]
        %v4001 = vld [vmem:[%s3953 + $0x178] sm:$0xff]
        %v4002 = vld [vmem:[%s3953 + $0x180] sm:$0xff]
        %v4003 = vld [vmem:[%s3953 + $0x188] sm:$0xff]
        %v4004 = vld [vmem:[%s3953 + $0x190] sm:$0xff]
        %v4005 = vld [vmem:[%s3953 + $0x198] sm:$0xff]
        %v4006 = vld [vmem:[%s3953 + $0x1a0] sm:$0xff]
        %v4007 = vld [vmem:[%s3953 + $0x1a8] sm:$0xff]
        %v4008 = vld [vmem:[%s3953 + $0x1b0] sm:$0xff]
        %v4009 = vld [vmem:[%s3953 + $0x1b8] sm:$0xff]
        %v4011 = vsel %vm1410, %v3948, 0
        %v4014 = vsel %vm1410, %v3951, 0
        %4016 = vmatpush.msra.mxu0 %v3984
        %4017 = vmatpush.msra.mxu0 %v3982
        %4018 = vmatpush.msra.mxu0 %v3980
        %4019 = vmatpush.msra.mxu0 %v3978
        %4020 = vmatpush.msra.mxu0 %v3976
        %4021 = vmatpush.msra.mxu0 %v3974
        %4022 = vmatpush.msra.mxu0 %v3972
        %4023 = vmatpush.msra.mxu0 %v3970
        %4024 = vmatpush.msra.mxu0 %v3968
        %4025 = vmatpush.msra.mxu0 %v3966
        %4026 = vmatpush.msra.mxu0 %v3964
        %4027 = vmatpush.msra.mxu0 %v3962
        %4028 = vmatpush.msra.mxu0 %v3960
        %4029 = vmatpush.msra.mxu0 %v3958
        %4030 = vmatpush.msra.mxu0 %v3956
        %4031 = vmatpush.msra.mxu0 %v3954
        %4032 = vmatmul.f32.gmra.mxu0 %v3925
        %v4033 = vpop.f32.mrf.mxu0
        %v4034 = vadd.f32 0.0, %v4033
        %4035 = vmatmul.f32.gmra.mxu0 %v3928
        %v4036 = vpop.f32.mrf.mxu0
        %v4037 = vadd.f32 0.0, %v4036
        %4038 = vdwg.mxu0
        %4039 = vmatpush.msra.mxu0 0.0
        %4040 = vmatpush.msra.mxu0 0.0
        %4041 = vmatpush.msra.mxu0 0.0
        %4042 = vmatpush.msra.mxu0 0.0
        %4043 = vmatpush.msra.mxu0 %v4008
        %4044 = vmatpush.msra.mxu0 %v4006
        %4045 = vmatpush.msra.mxu0 %v4004
        %4046 = vmatpush.msra.mxu0 %v4002
        %4047 = vmatpush.msra.mxu0 %v4000
        %4048 = vmatpush.msra.mxu0 %v3998
        %4049 = vmatpush.msra.mxu0 %v3996
        %4050 = vmatpush.msra.mxu0 %v3994
        %4051 = vmatpush.msra.mxu0 %v3992
        %4052 = vmatpush.msra.mxu0 %v3990
        %4053 = vmatpush.msra.mxu0 %v3988
        %4054 = vmatpush.msra.mxu0 %v3986
        %4055 = vmatmul.f32.gmra.mxu0 %v4011
        %v4056 = vpop.f32.mrf.mxu0
        %v4057 = vadd.f32 %v4034, %v4056
        %4058 = vmatmul.f32.gmra.mxu0 %v4014
        %v4059 = vpop.f32.mrf.mxu0
        %v4060 = vadd.f32 %v4037, %v4059
        %4061 = vdwg.mxu0
        %4062 = vmatpush.msra.mxu0 %v3985
        %4063 = vmatpush.msra.mxu0 %v3983
        %4064 = vmatpush.msra.mxu0 %v3981
        %4065 = vmatpush.msra.mxu0 %v3979
        %4066 = vmatpush.msra.mxu0 %v3977
        %4067 = vmatpush.msra.mxu0 %v3975
        %4068 = vmatpush.msra.mxu0 %v3973
        %4069 = vmatpush.msra.mxu0 %v3971
        %4070 = vmatpush.msra.mxu0 %v3969
        %4071 = vmatpush.msra.mxu0 %v3967
        %4072 = vmatpush.msra.mxu0 %v3965
        %4073 = vmatpush.msra.mxu0 %v3963
        %4074 = vmatpush.msra.mxu0 %v3961
        %4075 = vmatpush.msra.mxu0 %v3959
        %4076 = vmatpush.msra.mxu0 %v3957
        %4077 = vmatpush.msra.mxu0 %v3955
        %4078 = vmatmul.f32.gmra.mxu0 %v3925
        %v4079 = vpop.f32.mrf.mxu0
        %v4080 = vadd.f32 0.0, %v4079
        %4081 = vmatmul.f32.gmra.mxu0 %v3928
        %v4082 = vpop.f32.mrf.mxu0
        %v4083 = vadd.f32 0.0, %v4082
        %4084 = vdwg.mxu0
        %4085 = vmatpush.msra.mxu0 0.0
        %4086 = vmatpush.msra.mxu0 0.0
        %4087 = vmatpush.msra.mxu0 0.0
        %4088 = vmatpush.msra.mxu0 0.0
        %4089 = vmatpush.msra.mxu0 %v4009
        %4090 = vmatpush.msra.mxu0 %v4007
        %4091 = vmatpush.msra.mxu0 %v4005
        %4092 = vmatpush.msra.mxu0 %v4003
        %4093 = vmatpush.msra.mxu0 %v4001
        %4094 = vmatpush.msra.mxu0 %v3999
        %4095 = vmatpush.msra.mxu0 %v3997
        %4096 = vmatpush.msra.mxu0 %v3995
        %4097 = vmatpush.msra.mxu0 %v3993
        %4098 = vmatpush.msra.mxu0 %v3991
        %4099 = vmatpush.msra.mxu0 %v3989
        %4100 = vmatpush.msra.mxu0 %v3987
        %4101 = vmatmul.f32.gmra.mxu0 %v4011
        %v4102 = vpop.f32.mrf.mxu0
        %v4103 = vadd.f32 %v4080, %v4102
        %4104 = vmatmul.f32.gmra.mxu0 %v4014
        %v4105 = vpop.f32.mrf.mxu0
        %v4106 = vadd.f32 %v4083, %v4105
        %4107 = vdwg.mxu0
        %v4108 = vadd.f32 %v3847, %v4057
        %v4109 = vadd.f32 %v3893, %v4103
        %v4110 = vadd.f32 %v3850, %v4060
        %v4111 = vadd.f32 %v3896, %v4106
        %v4112 = vld [vmem:[%s16] sm:$0x3]
        %v4114 = vperm.slane %v4112, 0
        %v4115 = vperm.slane %v4112, 1
        %v4118 = vadd.f32 %v4108, %v4114
        %v4119 = vadd.f32 %v4109, %v4115
        %v4120 = vadd.f32 %v4110, %v4114
        %v4121 = vadd.f32 %v4111, %v4115
        %v4122 = vmax.f32 %v4118, 0.0
        %v4123 = vmax.f32 %v4119, 0.0
        %v4124 = vmax.f32 %v4120, 0.0
        %v4125 = vmax.f32 %v4121, 0.0
        %v4126 = vld [vmem:[#allocation17] sm:$0xff]
        %v4127 = vld [vmem:[#allocation17 + $0x8] sm:$0xff]
        %v4128 = vld [vmem:[#allocation17 + $0x10] sm:$0xff]
        %v4129 = vld [vmem:[#allocation17 + $0x18] sm:$0xf]
        %v4131 = vsel %vm1201, %v4126, 0
        %v4134 = vsel %vm1201, %v4127, 0
        %v4137 = vsel %vm1201, %v4128, 0
        %v4140 = vsel %vm1201, %v4129, 0
        %v4143 = vsel %vm1205, %v4124, 0
        %v4146 = vsel %vm1205, %v4125, 0
        %4148 = vmatpush.msra.mxu0 0.0
        %4149 = vmatpush.msra.mxu0 0.0
        %4150 = vmatpush.msra.mxu0 0.0
        %4151 = vmatpush.msra.mxu0 0.0
        %4152 = vmatpush.msra.mxu0 0.0
        %4153 = vmatpush.msra.mxu0 0.0
        %4154 = vmatpush.msra.mxu0 0.0
        %4155 = vmatpush.msra.mxu0 0.0
        %4156 = vmatpush.msra.mxu0 0.0
        %4157 = vmatpush.msra.mxu0 0.0
        %4158 = vmatpush.msra.mxu0 0.0
        %4159 = vmatpush.msra.mxu0 0.0
        %4160 = vmatpush.msra.mxu0 0.0
        %4161 = vmatpush.msra.mxu0 0.0
        %4162 = vmatpush.msra.mxu0 %v4143
        %4163 = vmatpush.msra.mxu0 %v4122
        %4164 = vmatmul.f32.gmra.mxu0 %v4131
        %v4165 = vpop.f32.mrf.mxu0
        %v4166 = vadd.f32 0.0, %v4165
        %4167 = vmatmul.f32.gmra.mxu0 %v4134
        %v4168 = vpop.f32.mrf.mxu0
        %v4169 = vadd.f32 0.0, %v4168
        %4170 = vmatmul.f32.gmra.mxu0 %v4137
        %v4171 = vpop.f32.mrf.mxu0
        %v4172 = vadd.f32 0.0, %v4171
        %4173 = vmatmul.f32.gmra.mxu0 %v4140
        %v4174 = vpop.f32.mrf.mxu0
        %v4175 = vadd.f32 0.0, %v4174
        %4176 = vdwg.mxu0
        %4177 = vmatpush.msra.mxu0 0.0
        %4178 = vmatpush.msra.mxu0 0.0
        %4179 = vmatpush.msra.mxu0 0.0
        %4180 = vmatpush.msra.mxu0 0.0
        %4181 = vmatpush.msra.mxu0 0.0
        %4182 = vmatpush.msra.mxu0 0.0
        %4183 = vmatpush.msra.mxu0 0.0
        %4184 = vmatpush.msra.mxu0 0.0
        %4185 = vmatpush.msra.mxu0 0.0
        %4186 = vmatpush.msra.mxu0 0.0
        %4187 = vmatpush.msra.mxu0 0.0
        %4188 = vmatpush.msra.mxu0 0.0
        %4189 = vmatpush.msra.mxu0 0.0
        %4190 = vmatpush.msra.mxu0 0.0
        %4191 = vmatpush.msra.mxu0 %v4146
        %4192 = vmatpush.msra.mxu0 %v4123
        %4193 = vmatmul.f32.gmra.mxu0 %v4131
        %v4194 = vpop.f32.mrf.mxu0
        %v4195 = vadd.f32 0.0, %v4194
        %4196 = vmatmul.f32.gmra.mxu0 %v4134
        %v4197 = vpop.f32.mrf.mxu0
        %v4198 = vadd.f32 0.0, %v4197
        %4199 = vmatmul.f32.gmra.mxu0 %v4137
        %v4200 = vpop.f32.mrf.mxu0
        %v4201 = vadd.f32 0.0, %v4200
        %4202 = vmatmul.f32.gmra.mxu0 %v4140
        %v4203 = vpop.f32.mrf.mxu0
        %v4204 = vadd.f32 0.0, %v4203
        %4205 = vdwg.mxu0
        %v4206 = vld [vmem:[#allocation18] sm:$0xff]
        %v4207 = vld [vmem:[#allocation18 + $0x8] sm:$0xff]
        %v4208 = vld [vmem:[#allocation18 + $0x10] sm:$0xff]
        %v4209 = vld [vmem:[#allocation18 + $0x18] sm:$0xff]
        %v4210 = vld [vmem:[#allocation18 + $0x20] sm:$0xff]
        %v4211 = vld [vmem:[#allocation18 + $0x28] sm:$0xff]
        %v4212 = vld [vmem:[#allocation18 + $0x30] sm:$0xff]
        %v4213 = vld [vmem:[#allocation18 + $0x38] sm:$0xff]
        %v4214 = vld [vmem:[#allocation18 + $0x40] sm:$0xff]
        %v4215 = vld [vmem:[#allocation18 + $0x48] sm:$0xff]
        %v4216 = vld [vmem:[#allocation18 + $0x50] sm:$0xff]
        %v4217 = vld [vmem:[#allocation18 + $0x58] sm:$0xff]
        %v4218 = vld [vmem:[#allocation18 + $0x60] sm:$0xff]
        %v4219 = vld [vmem:[#allocation18 + $0x68] sm:$0xff]
        %v4220 = vld [vmem:[#allocation18 + $0x70] sm:$0xff]
        %v4221 = vld [vmem:[#allocation18 + $0x78] sm:$0xff]
        %v4222 = vld [vmem:[#allocation18 + $0x80] sm:$0xff]
        %v4223 = vld [vmem:[#allocation18 + $0x88] sm:$0xff]
        %v4224 = vld [vmem:[#allocation18 + $0x90] sm:$0xff]
        %v4225 = vld [vmem:[#allocation18 + $0x98] sm:$0xff]
        %v4226 = vld [vmem:[#allocation18 + $0xa0] sm:$0xff]
        %v4227 = vld [vmem:[#allocation18 + $0xa8] sm:$0xff]
        %v4228 = vld [vmem:[#allocation18 + $0xb0] sm:$0xff]
        %v4229 = vld [vmem:[#allocation18 + $0xb8] sm:$0xff]
        %v4230 = vld [vmem:[#allocation18 + $0xc0] sm:$0xff]
        %v4231 = vld [vmem:[#allocation18 + $0xc8] sm:$0xff]
        %v4232 = vld [vmem:[#allocation18 + $0xd0] sm:$0xff]
        %v4233 = vld [vmem:[#allocation18 + $0xd8] sm:$0xff]
        %s4234 = scalar_lea.vmem [#allocation17], 32
        %v4235 = vld [vmem:[%s4234] sm:$0xff]
        %v4236 = vld [vmem:[%s4234 + $0x8] sm:$0xff]
        %v4237 = vld [vmem:[%s4234 + $0x10] sm:$0xff]
        %v4238 = vld [vmem:[%s4234 + $0x18] sm:$0xf]
        %v4240 = vsel %vm1201, %v4235, 0
        %v4243 = vsel %vm1201, %v4236, 0
        %v4246 = vsel %vm1201, %v4237, 0
        %v4249 = vsel %vm1201, %v4238, 0
        %4251 = vmatpush.msra.mxu0 0.0
        %4252 = vmatpush.msra.mxu0 0.0
        %4253 = vmatpush.msra.mxu0 0.0
        %4254 = vmatpush.msra.mxu0 0.0
        %4255 = vmatpush.msra.mxu0 0.0
        %4256 = vmatpush.msra.mxu0 0.0
        %4257 = vmatpush.msra.mxu0 0.0
        %4258 = vmatpush.msra.mxu0 0.0
        %4259 = vmatpush.msra.mxu0 0.0
        %4260 = vmatpush.msra.mxu0 0.0
        %4261 = vmatpush.msra.mxu0 0.0
        %4262 = vmatpush.msra.mxu0 0.0
        %4263 = vmatpush.msra.mxu0 0.0
        %4264 = vmatpush.msra.mxu0 0.0
        %4265 = vmatpush.msra.mxu0 %v4143
        %4266 = vmatpush.msra.mxu0 %v4122
        %4267 = vmatmul.f32.gmra.mxu0 %v4240
        %v4268 = vpop.f32.mrf.mxu0
        %v4269 = vadd.f32 0.0, %v4268
        %4270 = vmatmul.f32.gmra.mxu0 %v4243
        %v4271 = vpop.f32.mrf.mxu0
        %v4272 = vadd.f32 0.0, %v4271
        %4273 = vmatmul.f32.gmra.mxu0 %v4246
        %v4274 = vpop.f32.mrf.mxu0
        %v4275 = vadd.f32 0.0, %v4274
        %4276 = vmatmul.f32.gmra.mxu0 %v4249
        %v4277 = vpop.f32.mrf.mxu0
        %v4278 = vadd.f32 0.0, %v4277
        %4279 = vdwg.mxu0
        %4280 = vmatpush.msra.mxu0 0.0
        %4281 = vmatpush.msra.mxu0 0.0
        %4282 = vmatpush.msra.mxu0 0.0
        %4283 = vmatpush.msra.mxu0 0.0
        %4284 = vmatpush.msra.mxu0 0.0
        %4285 = vmatpush.msra.mxu0 0.0
        %4286 = vmatpush.msra.mxu0 0.0
        %4287 = vmatpush.msra.mxu0 0.0
        %4288 = vmatpush.msra.mxu0 0.0
        %4289 = vmatpush.msra.mxu0 0.0
        %4290 = vmatpush.msra.mxu0 0.0
        %4291 = vmatpush.msra.mxu0 0.0
        %4292 = vmatpush.msra.mxu0 0.0
        %4293 = vmatpush.msra.mxu0 0.0
        %4294 = vmatpush.msra.mxu0 %v4146
        %4295 = vmatpush.msra.mxu0 %v4123
        %4296 = vmatmul.f32.gmra.mxu0 %v4240
        %v4297 = vpop.f32.mrf.mxu0
        %v4298 = vadd.f32 0.0, %v4297
        %4299 = vmatmul.f32.gmra.mxu0 %v4243
        %v4300 = vpop.f32.mrf.mxu0
        %v4301 = vadd.f32 0.0, %v4300
        %4302 = vmatmul.f32.gmra.mxu0 %v4246
        %v4303 = vpop.f32.mrf.mxu0
        %v4304 = vadd.f32 0.0, %v4303
        %4305 = vmatmul.f32.gmra.mxu0 %v4249
        %v4306 = vpop.f32.mrf.mxu0
        %v4307 = vadd.f32 0.0, %v4306
        %4308 = vdwg.mxu0
        %s4309 = scalar_lea.vmem [#allocation18], 224
        %v4310 = vld [vmem:[%s4309] sm:$0xff]
        %v4311 = vld [vmem:[%s4309 + $0x8] sm:$0xff]
        %v4312 = vld [vmem:[%s4309 + $0x10] sm:$0xff]
        %v4313 = vld [vmem:[%s4309 + $0x18] sm:$0xff]
        %v4314 = vld [vmem:[%s4309 + $0x20] sm:$0xff]
        %v4315 = vld [vmem:[%s4309 + $0x28] sm:$0xff]
        %v4316 = vld [vmem:[%s4309 + $0x30] sm:$0xff]
        %v4317 = vld [vmem:[%s4309 + $0x38] sm:$0xff]
        %v4318 = vld [vmem:[%s4309 + $0x40] sm:$0xff]
        %v4319 = vld [vmem:[%s4309 + $0x48] sm:$0xff]
        %v4320 = vld [vmem:[%s4309 + $0x50] sm:$0xff]
        %v4321 = vld [vmem:[%s4309 + $0x58] sm:$0xff]
        %v4322 = vld [vmem:[%s4309 + $0x60] sm:$0xff]
        %v4323 = vld [vmem:[%s4309 + $0x68] sm:$0xff]
        %v4324 = vld [vmem:[%s4309 + $0x70] sm:$0xff]
        %v4325 = vld [vmem:[%s4309 + $0x78] sm:$0xff]
        %v4326 = vld [vmem:[%s4309 + $0x80] sm:$0xff]
        %v4327 = vld [vmem:[%s4309 + $0x88] sm:$0xff]
        %v4328 = vld [vmem:[%s4309 + $0x90] sm:$0xff]
        %v4329 = vld [vmem:[%s4309 + $0x98] sm:$0xff]
        %v4330 = vld [vmem:[%s4309 + $0xa0] sm:$0xff]
        %v4331 = vld [vmem:[%s4309 + $0xa8] sm:$0xff]
        %v4332 = vld [vmem:[%s4309 + $0xb0] sm:$0xff]
        %v4333 = vld [vmem:[%s4309 + $0xb8] sm:$0xff]
        %v4334 = vld [vmem:[%s4309 + $0xc0] sm:$0xff]
        %v4335 = vld [vmem:[%s4309 + $0xc8] sm:$0xff]
        %v4336 = vld [vmem:[%s4309 + $0xd0] sm:$0xff]
        %v4337 = vld [vmem:[%s4309 + $0xd8] sm:$0xff]
        %v4339 = vsel %vm1410, %v4298, 0
        %v4342 = vsel %vm1410, %v4301, 0
        %v4345 = vsel %vm1410, %v4304, 0
        %v4348 = vsel %vm1410, %v4307, 0
        %4350 = vmatpush.msra.mxu0 %v4325
        %4351 = vmatpush.msra.mxu0 %v4324
        %4352 = vmatpush.msra.mxu0 %v4323
        %4353 = vmatpush.msra.mxu0 %v4322
        %4354 = vmatpush.msra.mxu0 %v4321
        %4355 = vmatpush.msra.mxu0 %v4320
        %4356 = vmatpush.msra.mxu0 %v4319
        %4357 = vmatpush.msra.mxu0 %v4318
        %4358 = vmatpush.msra.mxu0 %v4317
        %4359 = vmatpush.msra.mxu0 %v4316
        %4360 = vmatpush.msra.mxu0 %v4315
        %4361 = vmatpush.msra.mxu0 %v4314
        %4362 = vmatpush.msra.mxu0 %v4313
        %4363 = vmatpush.msra.mxu0 %v4312
        %4364 = vmatpush.msra.mxu0 %v4311
        %4365 = vmatpush.msra.mxu0 %v4310
        %4366 = vmatmul.f32.gmra.mxu0 %v4269
        %v4367 = vpop.f32.mrf.mxu0
        %v4368 = vadd.f32 0.0, %v4367
        %4369 = vmatmul.f32.gmra.mxu0 %v4272
        %v4370 = vpop.f32.mrf.mxu0
        %v4371 = vadd.f32 0.0, %v4370
        %4372 = vmatmul.f32.gmra.mxu0 %v4275
        %v4373 = vpop.f32.mrf.mxu0
        %v4374 = vadd.f32 0.0, %v4373
        %4375 = vmatmul.f32.gmra.mxu0 %v4278
        %v4376 = vpop.f32.mrf.mxu0
        %v4377 = vadd.f32 0.0, %v4376
        %4378 = vdwg.mxu0
        %4379 = vmatpush.msra.mxu0 0.0
        %4380 = vmatpush.msra.mxu0 0.0
        %4381 = vmatpush.msra.mxu0 0.0
        %4382 = vmatpush.msra.mxu0 0.0
        %4383 = vmatpush.msra.mxu0 %v4337
        %4384 = vmatpush.msra.mxu0 %v4336
        %4385 = vmatpush.msra.mxu0 %v4335
        %4386 = vmatpush.msra.mxu0 %v4334
        %4387 = vmatpush.msra.mxu0 %v4333
        %4388 = vmatpush.msra.mxu0 %v4332
        %4389 = vmatpush.msra.mxu0 %v4331
        %4390 = vmatpush.msra.mxu0 %v4330
        %4391 = vmatpush.msra.mxu0 %v4329
        %4392 = vmatpush.msra.mxu0 %v4328
        %4393 = vmatpush.msra.mxu0 %v4327
        %4394 = vmatpush.msra.mxu0 %v4326
        %4395 = vmatmul.f32.gmra.mxu0 %v4339
        %v4396 = vpop.f32.mrf.mxu0
        %v4397 = vadd.f32 %v4368, %v4396
        %4398 = vmatmul.f32.gmra.mxu0 %v4342
        %v4399 = vpop.f32.mrf.mxu0
        %v4400 = vadd.f32 %v4371, %v4399
        %4401 = vmatmul.f32.gmra.mxu0 %v4345
        %v4402 = vpop.f32.mrf.mxu0
        %v4403 = vadd.f32 %v4374, %v4402
        %4404 = vmatmul.f32.gmra.mxu0 %v4348
        %v4405 = vpop.f32.mrf.mxu0
        %v4406 = vadd.f32 %v4377, %v4405
        %4407 = vdwg.mxu0
        %v4409 = vsel %vm1410, %v4195, 0
        %v4412 = vsel %vm1410, %v4198, 0
        %v4415 = vsel %vm1410, %v4201, 0
        %v4418 = vsel %vm1410, %v4204, 0
        %4420 = vmatpush.msra.mxu0 %v4221
        %4421 = vmatpush.msra.mxu0 %v4220
        %4422 = vmatpush.msra.mxu0 %v4219
        %4423 = vmatpush.msra.mxu0 %v4218
        %4424 = vmatpush.msra.mxu0 %v4217
        %4425 = vmatpush.msra.mxu0 %v4216
        %4426 = vmatpush.msra.mxu0 %v4215
        %4427 = vmatpush.msra.mxu0 %v4214
        %4428 = vmatpush.msra.mxu0 %v4213
        %4429 = vmatpush.msra.mxu0 %v4212
        %4430 = vmatpush.msra.mxu0 %v4211
        %4431 = vmatpush.msra.mxu0 %v4210
        %4432 = vmatpush.msra.mxu0 %v4209
        %4433 = vmatpush.msra.mxu0 %v4208
        %4434 = vmatpush.msra.mxu0 %v4207
        %4435 = vmatpush.msra.mxu0 %v4206
        %4436 = vmatmul.f32.gmra.mxu0 %v4166
        %v4437 = vpop.f32.mrf.mxu0
        %v4438 = vadd.f32 %v4397, %v4437
        %4439 = vmatmul.f32.gmra.mxu0 %v4169
        %v4440 = vpop.f32.mrf.mxu0
        %v4441 = vadd.f32 %v4400, %v4440
        %4442 = vmatmul.f32.gmra.mxu0 %v4172
        %v4443 = vpop.f32.mrf.mxu0
        %v4444 = vadd.f32 %v4403, %v4443
        %4445 = vmatmul.f32.gmra.mxu0 %v4175
        %v4446 = vpop.f32.mrf.mxu0
        %v4447 = vadd.f32 %v4406, %v4446
        %4448 = vdwg.mxu0
        %4449 = vmatpush.msra.mxu0 0.0
        %4450 = vmatpush.msra.mxu0 0.0
        %4451 = vmatpush.msra.mxu0 0.0
        %4452 = vmatpush.msra.mxu0 0.0
        %4453 = vmatpush.msra.mxu0 %v4233
        %4454 = vmatpush.msra.mxu0 %v4232
        %4455 = vmatpush.msra.mxu0 %v4231
        %4456 = vmatpush.msra.mxu0 %v4230
        %4457 = vmatpush.msra.mxu0 %v4229
        %4458 = vmatpush.msra.mxu0 %v4228
        %4459 = vmatpush.msra.mxu0 %v4227
        %4460 = vmatpush.msra.mxu0 %v4226
        %4461 = vmatpush.msra.mxu0 %v4225
        %4462 = vmatpush.msra.mxu0 %v4224
        %4463 = vmatpush.msra.mxu0 %v4223
        %4464 = vmatpush.msra.mxu0 %v4222
        %4465 = vmatmul.f32.gmra.mxu0 %v4409
        %v4466 = vpop.f32.mrf.mxu0
        %v4467 = vadd.f32 %v4438, %v4466
        %4468 = vmatmul.f32.gmra.mxu0 %v4412
        %v4469 = vpop.f32.mrf.mxu0
        %v4470 = vadd.f32 %v4441, %v4469
        %4471 = vmatmul.f32.gmra.mxu0 %v4415
        %v4472 = vpop.f32.mrf.mxu0
        %v4473 = vadd.f32 %v4444, %v4472
        %4474 = vmatmul.f32.gmra.mxu0 %v4418
        %v4475 = vpop.f32.mrf.mxu0
        %v4476 = vadd.f32 %v4447, %v4475
        %4477 = vdwg.mxu0
        %s4478 = scalar_lea.vmem [#allocation17], 64
        %v4479 = vld [vmem:[%s4478] sm:$0xff]
        %v4480 = vld [vmem:[%s4478 + $0x8] sm:$0xff]
        %v4481 = vld [vmem:[%s4478 + $0x10] sm:$0xff]
        %v4482 = vld [vmem:[%s4478 + $0x18] sm:$0xf]
        %v4484 = vsel %vm1201, %v4479, 0
        %v4487 = vsel %vm1201, %v4480, 0
        %v4490 = vsel %vm1201, %v4481, 0
        %v4493 = vsel %vm1201, %v4482, 0
        %4495 = vmatpush.msra.mxu0 0.0
        %4496 = vmatpush.msra.mxu0 0.0
        %4497 = vmatpush.msra.mxu0 0.0
        %4498 = vmatpush.msra.mxu0 0.0
        %4499 = vmatpush.msra.mxu0 0.0
        %4500 = vmatpush.msra.mxu0 0.0
        %4501 = vmatpush.msra.mxu0 0.0
        %4502 = vmatpush.msra.mxu0 0.0
        %4503 = vmatpush.msra.mxu0 0.0
        %4504 = vmatpush.msra.mxu0 0.0
        %4505 = vmatpush.msra.mxu0 0.0
        %4506 = vmatpush.msra.mxu0 0.0
        %4507 = vmatpush.msra.mxu0 0.0
        %4508 = vmatpush.msra.mxu0 0.0
        %4509 = vmatpush.msra.mxu0 %v4143
        %4510 = vmatpush.msra.mxu0 %v4122
        %4511 = vmatmul.f32.gmra.mxu0 %v4484
        %v4512 = vpop.f32.mrf.mxu0
        %v4513 = vadd.f32 0.0, %v4512
        %4514 = vmatmul.f32.gmra.mxu0 %v4487
        %v4515 = vpop.f32.mrf.mxu0
        %v4516 = vadd.f32 0.0, %v4515
        %4517 = vmatmul.f32.gmra.mxu0 %v4490
        %v4518 = vpop.f32.mrf.mxu0
        %v4519 = vadd.f32 0.0, %v4518
        %4520 = vmatmul.f32.gmra.mxu0 %v4493
        %v4521 = vpop.f32.mrf.mxu0
        %v4522 = vadd.f32 0.0, %v4521
        %4523 = vdwg.mxu0
        %4524 = vmatpush.msra.mxu0 0.0
        %4525 = vmatpush.msra.mxu0 0.0
        %4526 = vmatpush.msra.mxu0 0.0
        %4527 = vmatpush.msra.mxu0 0.0
        %4528 = vmatpush.msra.mxu0 0.0
        %4529 = vmatpush.msra.mxu0 0.0
        %4530 = vmatpush.msra.mxu0 0.0
        %4531 = vmatpush.msra.mxu0 0.0
        %4532 = vmatpush.msra.mxu0 0.0
        %4533 = vmatpush.msra.mxu0 0.0
        %4534 = vmatpush.msra.mxu0 0.0
        %4535 = vmatpush.msra.mxu0 0.0
        %4536 = vmatpush.msra.mxu0 0.0
        %4537 = vmatpush.msra.mxu0 0.0
        %4538 = vmatpush.msra.mxu0 %v4146
        %4539 = vmatpush.msra.mxu0 %v4123
        %4540 = vmatmul.f32.gmra.mxu0 %v4484
        %v4541 = vpop.f32.mrf.mxu0
        %v4542 = vadd.f32 0.0, %v4541
        %4543 = vmatmul.f32.gmra.mxu0 %v4487
        %v4544 = vpop.f32.mrf.mxu0
        %v4545 = vadd.f32 0.0, %v4544
        %4546 = vmatmul.f32.gmra.mxu0 %v4490
        %v4547 = vpop.f32.mrf.mxu0
        %v4548 = vadd.f32 0.0, %v4547
        %4549 = vmatmul.f32.gmra.mxu0 %v4493
        %v4550 = vpop.f32.mrf.mxu0
        %v4551 = vadd.f32 0.0, %v4550
        %4552 = vdwg.mxu0
        %s4553 = scalar_lea.vmem [#allocation18], 448
        %v4554 = vld [vmem:[%s4553] sm:$0xff]
        %v4555 = vld [vmem:[%s4553 + $0x8] sm:$0xff]
        %v4556 = vld [vmem:[%s4553 + $0x10] sm:$0xff]
        %v4557 = vld [vmem:[%s4553 + $0x18] sm:$0xff]
        %v4558 = vld [vmem:[%s4553 + $0x20] sm:$0xff]
        %v4559 = vld [vmem:[%s4553 + $0x28] sm:$0xff]
        %v4560 = vld [vmem:[%s4553 + $0x30] sm:$0xff]
        %v4561 = vld [vmem:[%s4553 + $0x38] sm:$0xff]
        %v4562 = vld [vmem:[%s4553 + $0x40] sm:$0xff]
        %v4563 = vld [vmem:[%s4553 + $0x48] sm:$0xff]
        %v4564 = vld [vmem:[%s4553 + $0x50] sm:$0xff]
        %v4565 = vld [vmem:[%s4553 + $0x58] sm:$0xff]
        %v4566 = vld [vmem:[%s4553 + $0x60] sm:$0xff]
        %v4567 = vld [vmem:[%s4553 + $0x68] sm:$0xff]
        %v4568 = vld [vmem:[%s4553 + $0x70] sm:$0xff]
        %v4569 = vld [vmem:[%s4553 + $0x78] sm:$0xff]
        %v4570 = vld [vmem:[%s4553 + $0x80] sm:$0xff]
        %v4571 = vld [vmem:[%s4553 + $0x88] sm:$0xff]
        %v4572 = vld [vmem:[%s4553 + $0x90] sm:$0xff]
        %v4573 = vld [vmem:[%s4553 + $0x98] sm:$0xff]
        %v4574 = vld [vmem:[%s4553 + $0xa0] sm:$0xff]
        %v4575 = vld [vmem:[%s4553 + $0xa8] sm:$0xff]
        %v4576 = vld [vmem:[%s4553 + $0xb0] sm:$0xff]
        %v4577 = vld [vmem:[%s4553 + $0xb8] sm:$0xff]
        %v4578 = vld [vmem:[%s4553 + $0xc0] sm:$0xff]
        %v4579 = vld [vmem:[%s4553 + $0xc8] sm:$0xff]
        %v4580 = vld [vmem:[%s4553 + $0xd0] sm:$0xff]
        %v4581 = vld [vmem:[%s4553 + $0xd8] sm:$0xff]
        %v4583 = vsel %vm1410, %v4542, 0
        %v4586 = vsel %vm1410, %v4545, 0
        %v4589 = vsel %vm1410, %v4548, 0
        %v4592 = vsel %vm1410, %v4551, 0
        %4594 = vmatpush.msra.mxu0 %v4569
        %4595 = vmatpush.msra.mxu0 %v4568
        %4596 = vmatpush.msra.mxu0 %v4567
        %4597 = vmatpush.msra.mxu0 %v4566
        %4598 = vmatpush.msra.mxu0 %v4565
        %4599 = vmatpush.msra.mxu0 %v4564
        %4600 = vmatpush.msra.mxu0 %v4563
        %4601 = vmatpush.msra.mxu0 %v4562
        %4602 = vmatpush.msra.mxu0 %v4561
        %4603 = vmatpush.msra.mxu0 %v4560
        %4604 = vmatpush.msra.mxu0 %v4559
        %4605 = vmatpush.msra.mxu0 %v4558
        %4606 = vmatpush.msra.mxu0 %v4557
        %4607 = vmatpush.msra.mxu0 %v4556
        %4608 = vmatpush.msra.mxu0 %v4555
        %4609 = vmatpush.msra.mxu0 %v4554
        %4610 = vmatmul.f32.gmra.mxu0 %v4513
        %v4611 = vpop.f32.mrf.mxu0
        %v4612 = vadd.f32 0.0, %v4611
        %4613 = vmatmul.f32.gmra.mxu0 %v4516
        %v4614 = vpop.f32.mrf.mxu0
        %v4615 = vadd.f32 0.0, %v4614
        %4616 = vmatmul.f32.gmra.mxu0 %v4519
        %v4617 = vpop.f32.mrf.mxu0
        %v4618 = vadd.f32 0.0, %v4617
        %4619 = vmatmul.f32.gmra.mxu0 %v4522
        %v4620 = vpop.f32.mrf.mxu0
        %v4621 = vadd.f32 0.0, %v4620
        %4622 = vdwg.mxu0
        %4623 = vmatpush.msra.mxu0 0.0
        %4624 = vmatpush.msra.mxu0 0.0
        %4625 = vmatpush.msra.mxu0 0.0
        %4626 = vmatpush.msra.mxu0 0.0
        %4627 = vmatpush.msra.mxu0 %v4581
        %4628 = vmatpush.msra.mxu0 %v4580
        %4629 = vmatpush.msra.mxu0 %v4579
        %4630 = vmatpush.msra.mxu0 %v4578
        %4631 = vmatpush.msra.mxu0 %v4577
        %4632 = vmatpush.msra.mxu0 %v4576
        %4633 = vmatpush.msra.mxu0 %v4575
        %4634 = vmatpush.msra.mxu0 %v4574
        %4635 = vmatpush.msra.mxu0 %v4573
        %4636 = vmatpush.msra.mxu0 %v4572
        %4637 = vmatpush.msra.mxu0 %v4571
        %4638 = vmatpush.msra.mxu0 %v4570
        %4639 = vmatmul.f32.gmra.mxu0 %v4583
        %v4640 = vpop.f32.mrf.mxu0
        %v4641 = vadd.f32 %v4612, %v4640
        %4642 = vmatmul.f32.gmra.mxu0 %v4586
        %v4643 = vpop.f32.mrf.mxu0
        %v4644 = vadd.f32 %v4615, %v4643
        %4645 = vmatmul.f32.gmra.mxu0 %v4589
        %v4646 = vpop.f32.mrf.mxu0
        %v4647 = vadd.f32 %v4618, %v4646
        %4648 = vmatmul.f32.gmra.mxu0 %v4592
        %v4649 = vpop.f32.mrf.mxu0
        %v4650 = vadd.f32 %v4621, %v4649
        %4651 = vdwg.mxu0
        %v4652 = vadd.f32 %v4467, %v4641
        %v4653 = vadd.f32 %v4470, %v4644
        %v4654 = vadd.f32 %v4473, %v4647
        %v4655 = vadd.f32 %v4476, %v4650
        %v4656 = vld [vmem:[%s19] sm:$0x1]
        %v4658 = vperm.slane %v4656, 0
        %v4660 = vadd.f32 %v4652, %v4658
        %v4661 = vadd.f32 %v4653, %v4658
        %v4662 = vadd.f32 %v4654, %v4658
        %v4663 = vadd.f32 %v4655, %v4658
        %v4664 = vxor.u32 %v4660, 2147483648
        %v4665 = vxor.u32 %v4661, 2147483648
        %v4666 = vxor.u32 %v4662, 2147483648
        %v4667 = vxor.u32 %v4663, 2147483648
        %v4668 = vmul.f32 %v4664, 1.442695
        %v4669 = vpow.pop %v4668
        %v4670 = vmul.f32 %v4665, 1.442695
        %v4671 = vpow.pop %v4670
        %v4672 = vmul.f32 %v4666, 1.442695
        %v4673 = vpow.pop %v4672
        %v4674 = vmul.f32 %v4667, 1.442695
        %v4675 = vpow.pop %v4674
        %v4676 = vadd.f32 %v4669, 1.0
        %v4677 = vadd.f32 %v4671, 1.0
        %v4678 = vadd.f32 %v4673, 1.0
        %v4679 = vadd.f32 %v4675, 1.0
        %v4680 = vrcp.pop %v4676
        %v4681 = vmul.f32 %v4676, %v4680
        %v4682 = vsub.f32 1.0, %v4681
        %v4683 = vmul.f32 %v4680, %v4682
        %v4684 = vadd.f32 %v4680, %v4683
        %vm4685 = vweird.f32 %v4676
        %vm4686 = vweird.f32 %v4680
        %vm4687 = vmor %vm4685, %vm4686
        %v4688 = vsel %vm4687, %v4680, %v4684
        %v4689 = vand.u32 2147483647, %v4676
        %vm4690 = vcmp.eq.f32.partialorder %v4689, 8.507059e+37
        %v4691 = vand.u32 %v4676, 2147483648
        %v4692 = vor.u32 1.1754944e-38, %v4691
        %v4693 = vsel %vm4690, %v4692, %v4688
        %v4694 = vmul.f32 1.0, %v4693
        %v4695 = vrcp.pop %v4677
        %v4696 = vmul.f32 %v4677, %v4695
        %v4697 = vsub.f32 1.0, %v4696
        %v4698 = vmul.f32 %v4695, %v4697
        %v4699 = vadd.f32 %v4695, %v4698
        %vm4700 = vweird.f32 %v4677
        %vm4701 = vweird.f32 %v4695
        %vm4702 = vmor %vm4700, %vm4701
        %v4703 = vsel %vm4702, %v4695, %v4699
        %v4704 = vand.u32 2147483647, %v4677
        %vm4705 = vcmp.eq.f32.partialorder %v4704, 8.507059e+37
        %v4706 = vand.u32 %v4677, 2147483648
        %v4707 = vor.u32 1.1754944e-38, %v4706
        %v4708 = vsel %vm4705, %v4707, %v4703
        %v4709 = vmul.f32 1.0, %v4708
        %v4710 = vrcp.pop %v4678
        %v4711 = vmul.f32 %v4678, %v4710
        %v4712 = vsub.f32 1.0, %v4711
        %v4713 = vmul.f32 %v4710, %v4712
        %v4714 = vadd.f32 %v4710, %v4713
        %vm4715 = vweird.f32 %v4678
        %vm4716 = vweird.f32 %v4710
        %vm4717 = vmor %vm4715, %vm4716
        %v4718 = vsel %vm4717, %v4710, %v4714
        %v4719 = vand.u32 2147483647, %v4678
        %vm4720 = vcmp.eq.f32.partialorder %v4719, 8.507059e+37
        %v4721 = vand.u32 %v4678, 2147483648
        %v4722 = vor.u32 1.1754944e-38, %v4721
        %v4723 = vsel %vm4720, %v4722, %v4718
        %v4724 = vmul.f32 1.0, %v4723
        %v4725 = vrcp.pop %v4679
        %v4726 = vmul.f32 %v4679, %v4725
        %v4727 = vsub.f32 1.0, %v4726
        %v4728 = vmul.f32 %v4725, %v4727
        %v4729 = vadd.f32 %v4725, %v4728
        %vm4730 = vweird.f32 %v4679
        %vm4731 = vweird.f32 %v4725
        %vm4732 = vmor %vm4730, %vm4731
        %v4733 = vsel %vm4732, %v4725, %v4729
        %v4734 = vand.u32 2147483647, %v4679
        %vm4735 = vcmp.eq.f32.partialorder %v4734, 8.507059e+37
        %v4736 = vand.u32 %v4679, 2147483648
        %v4737 = vor.u32 1.1754944e-38, %v4736
        %v4738 = vsel %vm4735, %v4737, %v4733
        %v4739 = vmul.f32 1.0, %v4738
        %4740 = vst.msk [vmem:[%s868] sm:$0xff] %vm873, %v4694
        %4741 = vst.msk [vmem:[%s868 + $0x8] sm:$0xff] %vm873, %v4709
        %4742 = vst.msk [vmem:[%s868 + $0x10] sm:$0xff] %vm873, %v4724
        %4743 = vst.msk [vmem:[%s868 + $0x18] sm:$0xf] %vm877, %v4739
        %4744 = vst.msk [vmem:[%s852] sm:$0x1] %vm2634, %v2697
        %4745 = vst.msk [vmem:[%s858] sm:$0x1] %vm2634, %v2632
        %p4746 = scmp.lt.s32.totalorder %s46, 1
        %s4747 = scalar_select %p4746, %s46, 1
        %s4748 = smul.addr %s4747, 4
        %s4749 = smul.addr %s4748, 8
        %s4750 = scalar_lea.vmem %s20, %s4749
        %s4751 = sand.u32 %s505, 1
        %s4752 = scalar_lea.sflag [#allocation5], %s4751
        %s4753 = sand.u32 %s505, 1
        %s4754 = scalar_lea.vmem [#allocation20], %s4753
        %s4755 = sand.u32 %s531, 1
        %s4756 = scalar_lea.sflag [#allocation22], %s4755
        %s4757 = sand.u32 %s531, 1
        %s4758 = scalar_lea.vmem [#allocation21], %s4757
        // Predicated region
        $region141: #{latent_space_memae_forward.1} parent=99 // pred_check
          %p4759 = pneg %p489
        $region142: #{latent_space_memae_forward.1} parent=99 // pred_check_branch
          %4761 = sbr.rel (%p4759) target = $region144
        $region143: #{latent_space_memae_forward.1} parent=99 // pred_region
          _
        $region144: #{latent_space_memae_forward.1} parent=99 // pred_fallthru
          _
        // Predicated region
        $region145: #{latent_space_memae_forward.1} parent=99 // pred_check
          %p4762 = pneg %p515
        $region146: #{latent_space_memae_forward.1} parent=99 // pred_check_branch
          %4764 = sbr.rel (%p4762) target = $region148
        $region147: #{latent_space_memae_forward.1} parent=99 // pred_region
          %4766 = vsyncadd %s4752, 0
          %s4767 = scalar_lea.hbm %s21, %s46
          %s4769 = sshll.u32 %s4754, 4
          %s4770 = int_to_ptr.vmem [resolvable:$true] %s4769
          %s4771 = sshll.u32 %s4767, 4
          %s4772 = int_to_ptr.hbm [resolvable:$true] %s4771
          %4774 = dma.vmem_to_hbm [thread:$0]  %s4770, 16, %s4772, %s4752
        $region148: #{latent_space_memae_forward.1} parent=99 // pred_fallthru
          _
        // Predicated region
        $region149: #{latent_space_memae_forward.1} parent=99 // pred_check
          %p4775 = pneg %p541
        $region150: #{latent_space_memae_forward.1} parent=99 // pred_check_branch
          %4777 = sbr.rel (%p4775) target = $region152
        $region151: #{latent_space_memae_forward.1} parent=99 // pred_region
          %4779 = vsyncadd %s4756, 0
          %s4780 = scalar_lea.hbm %s22, %s46
          %s4782 = sshll.u32 %s4758, 4
          %s4783 = int_to_ptr.vmem [resolvable:$true] %s4782
          %s4784 = sshll.u32 %s4780, 4
          %s4785 = int_to_ptr.hbm [resolvable:$true] %s4784
          %4787 = dma.vmem_to_hbm [thread:$0]  %s4783, 16, %s4785, %s4756
        $region152: #{latent_space_memae_forward.1} parent=99 // pred_fallthru
          _
      $region100: #{latent_space_memae_forward.1} parent=5 // pred_fallthru
        _
      %p4788 = scmp.le.s32.totalorder 2, %s41
      // Predicated region
      $region153: #{latent_space_memae_forward.1} parent=5 // pred_check
        %p4789 = pneg %p4788
      $region154: #{latent_space_memae_forward.1} parent=5 // pred_check_branch
        %4791 = sbr.rel (%p4789) target = $region156
      $region155: #{latent_space_memae_forward.1} parent=5 // pred_region
        %s4792 = ssub.s32 %s41, 2
        // Predicated region
        $region157: #{latent_space_memae_forward.1} parent=155 // pred_check
          %p4793 = pneg %p495
        $region158: #{latent_space_memae_forward.1} parent=155 // pred_check_branch
          %4795 = sbr.rel (%p4793) target = $region160
        $region159: #{latent_space_memae_forward.1} parent=155 // pred_region
          %p4796 = scmp.lt.s32.totalorder %s47, 1
          %s4797 = scalar_select %p4796, %s47, 1
          %s4798 = smul.addr %s4797, 4
          %s4799 = smul.addr %s4798, 8
          %s4800 = scalar_lea.vmem %s20, %s4799
        $region160: #{latent_space_memae_forward.1} parent=155 // pred_fallthru
          _
        // Predicated region
        $region161: #{latent_space_memae_forward.1} parent=155 // pred_check
          %p4801 = pneg %p521
        $region162: #{latent_space_memae_forward.1} parent=155 // pred_check_branch
          %4803 = sbr.rel (%p4801) target = $region164
        $region163: #{latent_space_memae_forward.1} parent=155 // pred_region
          %s4804 = sand.u32 %s506, 1
          %s4805 = scalar_lea.sflag [#allocation5], %s4804
          %s4806 = sand.u32 %s506, 1
          %s4807 = scalar_lea.vmem [#allocation20], %s4806
          %4809 = dma.done %s4805, 16
        $region164: #{latent_space_memae_forward.1} parent=155 // pred_fallthru
          _
        // Predicated region
        $region165: #{latent_space_memae_forward.1} parent=155 // pred_check
          %p4810 = pneg %p547
        $region166: #{latent_space_memae_forward.1} parent=155 // pred_check_branch
          %4812 = sbr.rel (%p4810) target = $region168
        $region167: #{latent_space_memae_forward.1} parent=155 // pred_region
          %s4813 = sand.u32 %s532, 1
          %s4814 = scalar_lea.sflag [#allocation22], %s4813
          %s4815 = sand.u32 %s532, 1
          %s4816 = scalar_lea.vmem [#allocation21], %s4815
          %4818 = dma.done %s4814, 16
        $region168: #{latent_space_memae_forward.1} parent=155 // pred_fallthru
          _
      $region156: #{latent_space_memae_forward.1} parent=5 // pred_fallthru
        _
    $region6: #{latent_space_memae_forward.1} parent=1 // loop_footer
      %s45 = sadd.s32 1, %s41
    $region7: #{latent_space_memae_forward.1} parent=1 // loop_footer_branch
      %40 = sbr.rel target = $region3
    $region8: #{latent_space_memae_forward.1} parent=1 // loop_exit
      _
    %4819 = vsyncpa [#allocation4], 1
    %s4820 = scalar_lea.sflag [#allocation4], 1
    %4821 = vsyncpa %s4820, 1
    %4822 = vsyncpa [#allocation7], 1
    %4823 = vsyncpa [#allocation10], 1
    %4824 = vsyncpa [#allocation13], 1
    %4825 = vsyncpa [#allocation16], 1
    %4826 = vsyncpa [#allocation19], 1
    %4827 = vsyncpa [#allocation5], 1
    %s4828 = scalar_lea.sflag [#allocation5], 1
    %4829 = vsyncpa %s4828, 1
    %4830 = vsyncpa [#allocation22], 1
    %s4831 = scalar_lea.sflag [#allocation22], 1
    %4832 = vsyncpa %s4831, 1

</llo_original>
